<compile_context>
chip_gen: v7x
topology: tpu7x:2x2x1
jax: 0.10.0
libtpu: 0.0.40
codegen_flags: <defaults>
</compile_context>

<pallas_src>
import functools

import jax
import jax.numpy as jnp
from jax.experimental import pallas as pl
from jax.experimental.pallas import tpu as pltpu


def _channel_attention_kernel(x_ref, w1_ref, w2_ref, o_ref, s_ref, m_ref,
                              *, hw, hw_blk, need_mask, use_mxu):
    # x_ref : VMEM [Bt, C, hw_blk]   one spatial block of a batch tile
    # w1_ref: VMEM [hidden, C]       first 1x1 conv weight  (C -> hidden)
    # w2_ref: VMEM [C, hidden]       second 1x1 conv weight (hidden -> C)
    # o_ref : VMEM [Bt, 1, C]        sigmoid channel-attention weights
    # s_ref : VMEM [Bt, C] f32       running spatial sum   (scratch)
    # m_ref : VMEM [Bt, C] f32       running spatial max   (scratch)
    j = pl.program_id(1)                        # spatial (reduction) axis, last
    last = pl.num_programs(1) - 1

    @pl.when(j == 0)
    def _init():
        s_ref[...] = jnp.zeros(s_ref.shape, s_ref.dtype)
        m_ref[...] = jnp.full(m_ref.shape, -jnp.inf, m_ref.dtype)

    v = x_ref[...].astype(jnp.float32)          # (Bt, C, hw_blk), lane-dense

    def _plain_update():
        s_ref[...] = s_ref[...] + jnp.sum(v, axis=-1)
        m_ref[...] = jnp.maximum(m_ref[...], jnp.max(v, axis=-1))

    if need_mask:
        # Only the ragged final block pays for the mask.  Its out-of-bounds tail
        # is unspecified data, so both the sum and the max must exclude it.
        def _masked_update():
            col = jax.lax.broadcasted_iota(jnp.int32, v.shape, 2) + j * hw_blk
            valid = col < hw
            s_ref[...] = s_ref[...] + jnp.sum(jnp.where(valid, v, 0.0), axis=-1)
            m_ref[...] = jnp.maximum(
                m_ref[...], jnp.max(jnp.where(valid, v, -jnp.inf), axis=-1))

        pl.when(j != last)(_plain_update)
        pl.when(j == last)(_masked_update)
    else:
        _plain_update()

    # Epilogue: shared MLP (C -> hidden -> C) + sigmoid on the pooled vectors,
    # executed exactly once per batch tile (last spatial block).
    @pl.when(j == last)
    def _epilogue():
        avg = s_ref[...] * (1.0 / hw)           # (Bt, C) mean over real pixels
        mx = m_ref[...]                         # (Bt, C)
        w1 = w1_ref[...]                        # (hidden, C)
        w2 = w2_ref[...]                        # (C, hidden)

        def fc(p):                              # p: (Bt, C) -> (Bt, C)
            if use_mxu:
                # Large C / hidden: keep it on the MXU, f32 accumulate, no
                # explicit transposes (contract on the shared C / hidden dims).
                h = jax.lax.dot_general(p, w1, (((1,), (1,)), ((), ())),
                                        preferred_element_type=jnp.float32)
                h = jnp.maximum(h, 0.0)
                return jax.lax.dot_general(h, w2, (((1,), (1,)), ((), ())),
                                           preferred_element_type=jnp.float32)
            # Tiny hidden = C/r: broadcast-multiply + lane reductions on VPU/XLU
            # (MXU would be <=1/32 utilized), exact f32.
            h = jnp.sum(p[:, None, :] * w1[None, :, :], axis=-1)   # (Bt, hidden)
            h = jnp.maximum(h, 0.0)                                 # ReLU
            return jnp.sum(h[:, None, :] * w2[None, :, :], axis=-1)  # (Bt, C)

        logits = fc(avg) + fc(mx)
        sig = 1.0 / (1.0 + jnp.exp(-logits))    # f32: saturates cleanly to 0/1
        o_ref[...] = sig[:, None, :].astype(o_ref.dtype)


def _round_up(v, m):
    return (v + m - 1) // m * m


def _cores_per_chip():
    """Best-effort TensorCore count per chip (v7x has 2, v5e/v6e have 1)."""
    try:
        kind = (getattr(jax.devices()[0], "device_kind", "") or "").lower()
        if "v7" in kind:
            return 2
    except Exception:
        pass
    return 1


def _choose_tiles(B, C, hw, cores):
    """Pick (bt, hw_blk): ~2 MiB input blocks (x2 for double buffering) so the
    ~0.35us/step overhead is amortized, and cap bt at B//cores only on
    multi-TensorCore chips so both cores get batch work."""
    target = 2 * 1024 * 1024                       # per-block byte budget
    hw128 = _round_up(hw, 128)

    # batch tile
    bt_cap = max(1, target // (C * min(hw128, 4096) * 4))
    if cores > 1 and B >= cores:
        bt_cap = min(bt_cap, B // cores)
    bt = max(1, min(B, bt_cap))
    while B % bt:
        bt -= 1

    # spatial (lane) block: multiple of 128, sized to the remaining budget
    max_lanes = max(128, (target // (bt * C * 4)) // 128 * 128)
    hw_blk = min(hw128, max_lanes)
    return bt, hw_blk


def channel_attention(x, w1, w2):
    """ChannelAttention forward.

    x : [B, C, H, W]
    w1: [C//r, C, 1, 1]  weight of Conv2d(C, C//r, 1, bias=False)
    w2: [C, C//r, 1, 1]  weight of Conv2d(C//r, C, 1, bias=False)
    returns: [B, C, 1, 1] channel attention weights (same dtype as x)
    """
    B, C, H, W = x.shape
    hidden = w1.shape[0]
    hw = H * W

    cores = _cores_per_chip()
    bt, hw_blk = _choose_tiles(B, C, hw, cores)

    # Lane-dense layout: flatten spatial dims onto the lane axis.  No jnp.pad
    # copy -- the ragged final spatial block is masked inside the kernel.
    xr = x.reshape(B, C, hw)
    w1m = w1.reshape(hidden, C).astype(jnp.float32)   # (hidden, C)
    w2m = w2.reshape(C, hidden).astype(jnp.float32)   # (C, hidden)

    n_spatial = pl.cdiv(hw, hw_blk)
    need_mask = (hw % hw_blk) != 0
    use_mxu = (C >= 256) and (hidden >= 16)

    grid = (B // bt, n_spatial)                       # reduction axis last
    kernel = functools.partial(_channel_attention_kernel, hw=hw, hw_blk=hw_blk,
                               need_mask=need_mask, use_mxu=use_mxu)

    out = pl.pallas_call(
        kernel,
        out_shape=jax.ShapeDtypeStruct((B, 1, C), x.dtype),
        grid=grid,
        in_specs=[
            pl.BlockSpec((bt, C, hw_blk), lambda b, j: (b, 0, j)),   # x blocks
            pl.BlockSpec((hidden, C), lambda b, j: (0, 0)),          # w1 resident
            pl.BlockSpec((C, hidden), lambda b, j: (0, 0)),          # w2 resident
        ],
        out_specs=pl.BlockSpec((bt, 1, C), lambda b, j: (b, 0, 0)),
        scratch_shapes=[
            pltpu.VMEM((bt, C), jnp.float32),    # running sum
            pltpu.VMEM((bt, C), jnp.float32),    # running max
        ],
        compiler_params=pltpu.CompilerParams(
            dimension_semantics=("parallel", "arbitrary"),
            vmem_limit_bytes=32 * 1024 * 1024,
        ),
    )(xr, w1m, w2m)

    return out.reshape(B, C, 1, 1)


def _reference(x, w1, w2):
    B, C, _, _ = x.shape
    hidden = w1.shape[0]
    xf = x.astype(jnp.float32)
    avg = jnp.mean(xf, axis=(2, 3))                  # (B, C)
    mx = jnp.max(xf, axis=(2, 3))                    # (B, C)
    w1m = w1.reshape(hidden, C).astype(jnp.float32)
    w2m = w2.reshape(C, hidden).astype(jnp.float32)

    def fc(v):
        h = jnp.maximum(jnp.einsum("bc,hc->bh", v, w1m, precision="highest"), 0.0)
        return jnp.einsum("bh,ch->bc", h, w2m, precision="highest")

    out = jax.nn.sigmoid(fc(avg) + fc(mx))
    return out[:, :, None, None].astype(x.dtype)


if __name__ == "__main__":
    key = jax.random.PRNGKey(0)
    kx, k1, k2 = jax.random.split(key, 3)

    B, C, H, W = 2, 64, 16, 16
    REDUCTION = 16
    hidden = C // REDUCTION                              # 4

    x = jax.random.normal(kx, (B, C, H, W), dtype=jnp.float32)

    # PyTorch Conv2d default init: U(-1/sqrt(fan_in), 1/sqrt(fan_in)), 1x1 kernels.
    b1 = (1.0 / C) ** 0.5
    w1 = jax.random.uniform(k1, (hidden, C, 1, 1), minval=-b1, maxval=b1,
                            dtype=jnp.float32)
    b2 = (1.0 / hidden) ** 0.5
    w2 = jax.random.uniform(k2, (C, hidden, 1, 1), minval=-b2, maxval=b2,
                            dtype=jnp.float32)

    out = channel_attention(x, w1, w2)
    out = jax.block_until_ready(out)

    ref = _reference(x, w1, w2)
    assert out.shape == (B, C, 1, 1), out.shape
    assert jnp.allclose(out, ref, atol=1e-5, rtol=1e-5), (
        "mismatch vs reference: max abs err = "
        f"{jnp.max(jnp.abs(out - ref))}")

    print("KERNEL_OK")
</pallas_src>

<mosaic_0001>
module attributes {stable_mosaic.version = 11 : i64} {
  func.func @_channel_attention_kernel(%arg0: i32, %arg1: i32, %arg2: memref<2x64x256xf32, #tpu.memory_space<vmem>>, %arg3: memref<4x64xf32, #tpu.memory_space<vmem>>, %arg4: memref<64x4xf32, #tpu.memory_space<vmem>>, %arg5: memref<2x1x64xf32, #tpu.memory_space<vmem>>, %arg6: memref<2x64xf32, #tpu.memory_space<vmem>>, %arg7: memref<2x64xf32, #tpu.memory_space<vmem>>) attributes {dimension_semantics = [#tpu.dimension_semantics<parallel>, #tpu.dimension_semantics<arbitrary>], iteration_bounds = array<i64: 1, 1>, scalar_prefetch = 0 : i64, scratch_operands = 2 : i64, tpu.core_type = #tpu.core_type<tc>, window_params = [{transform_indices = @transform_0, window_bounds = array<i64: 2, 64, 256>}, {pipeline_mode = #tpu.pipeline_mode<synchronous>, transform_indices = @transform_1, window_bounds = array<i64: 4, 64>}, {pipeline_mode = #tpu.pipeline_mode<synchronous>, transform_indices = @transform_2, window_bounds = array<i64: 64, 4>}, {transform_indices = @transform_3, window_bounds = array<i64: 2, 1, 64>}]} {
    %c0_i32 = arith.constant 0 : i32
    %0 = arith.cmpi eq, %arg1, %c0_i32 : i32
    %1 = arith.extui %0 : i1 to i32
    %c0_i32_0 = arith.constant 0 : i32
    %2 = arith.cmpi ne, %1, %c0_i32_0 : i32
    scf.if %2 {
      %cst_14 = arith.constant 0.000000e+00 : f32
      %15 = vector.broadcast %cst_14 : f32 to vector<2x64xf32>
      %c0_15 = arith.constant 0 : index
      %c0_16 = arith.constant 0 : index
      %16 = vector.load %arg6[%c0_15, %c0_16] : memref<2x64xf32, #tpu.memory_space<vmem>>, vector<2x64xf32>
      tpu.vector_store %arg6[%c0_15, %c0_16], %15 {strides = array<i32>} : memref<2x64xf32, #tpu.memory_space<vmem>>, vector<2x64xf32>,
      %cst_17 = arith.constant 0xFF800000 : f32
      %17 = vector.broadcast %cst_17 : f32 to vector<2x64xf32>
      %c0_18 = arith.constant 0 : index
      %c0_19 = arith.constant 0 : index
      %18 = vector.load %arg7[%c0_18, %c0_19] : memref<2x64xf32, #tpu.memory_space<vmem>>, vector<2x64xf32>
      tpu.vector_store %arg7[%c0_18, %c0_19], %17 {strides = array<i32>} : memref<2x64xf32, #tpu.memory_space<vmem>>, vector<2x64xf32>,
    } else {
    }
    %c0 = arith.constant 0 : index
    %c0_1 = arith.constant 0 : index
    %c0_2 = arith.constant 0 : index
    %3 = vector.load %arg2[%c0, %c0_1, %c0_2] : memref<2x64x256xf32, #tpu.memory_space<vmem>>, vector<2x64x256xf32>
    %c0_3 = arith.constant 0 : index
    %c0_4 = arith.constant 0 : index
    %4 = vector.load %arg6[%c0_3, %c0_4] : memref<2x64xf32, #tpu.memory_space<vmem>>, vector<2x64xf32>
    %cst = arith.constant dense<0.000000e+00> : vector<2x64xf32>
    %5 = vector.multi_reduction <add>, %3, %cst [2] : vector<2x64x256xf32> to vector<2x64xf32>
    %6 = arith.addf %4, %5 : vector<2x64xf32>
    %c0_5 = arith.constant 0 : index
    %c0_6 = arith.constant 0 : index
    %7 = vector.load %arg6[%c0_5, %c0_6] : memref<2x64xf32, #tpu.memory_space<vmem>>, vector<2x64xf32>
    tpu.vector_store %arg6[%c0_5, %c0_6], %6 {strides = array<i32>} : memref<2x64xf32, #tpu.memory_space<vmem>>, vector<2x64xf32>,
    %c0_7 = arith.constant 0 : index
    %c0_8 = arith.constant 0 : index
    %8 = vector.load %arg7[%c0_7, %c0_8] : memref<2x64xf32, #tpu.memory_space<vmem>>, vector<2x64xf32>
    %cst_9 = arith.constant dense<0xFF800000> : vector<2x64xf32>
    %9 = vector.multi_reduction <maximumf>, %3, %cst_9 [2] : vector<2x64x256xf32> to vector<2x64xf32>
    %10 = arith.maximumf %8, %9 : vector<2x64xf32>
    %c0_10 = arith.constant 0 : index
    %c0_11 = arith.constant 0 : index
    %11 = vector.load %arg7[%c0_10, %c0_11] : memref<2x64xf32, #tpu.memory_space<vmem>>, vector<2x64xf32>
    tpu.vector_store %arg7[%c0_10, %c0_11], %10 {strides = array<i32>} : memref<2x64xf32, #tpu.memory_space<vmem>>, vector<2x64xf32>,
    %c0_i32_12 = arith.constant 0 : i32
    %12 = arith.cmpi eq, %arg1, %c0_i32_12 : i32
    %13 = arith.extui %12 : i1 to i32
    %c0_i32_13 = arith.constant 0 : i32
    %14 = arith.cmpi ne, %13, %c0_i32_13 : i32
    scf.if %14 {
      %c0_14 = arith.constant 0 : index
      %c0_15 = arith.constant 0 : index
      %15 = vector.load %arg6[%c0_14, %c0_15] : memref<2x64xf32, #tpu.memory_space<vmem>>, vector<2x64xf32>
      %cst_16 = arith.constant 3.906250e-03 : f32
      %16 = vector.broadcast %cst_16 : f32 to vector<2x64xf32>
      %17 = arith.mulf %15, %16 : vector<2x64xf32>
      %c0_17 = arith.constant 0 : index
      %c0_18 = arith.constant 0 : index
      %18 = vector.load %arg7[%c0_17, %c0_18] : memref<2x64xf32, #tpu.memory_space<vmem>>, vector<2x64xf32>
      %c0_19 = arith.constant 0 : index
      %c0_20 = arith.constant 0 : index
      %19 = vector.load %arg3[%c0_19, %c0_20] : memref<4x64xf32, #tpu.memory_space<vmem>>, vector<4x64xf32>
      %c0_21 = arith.constant 0 : index
      %c0_22 = arith.constant 0 : index
      %20 = vector.load %arg4[%c0_21, %c0_22] : memref<64x4xf32, #tpu.memory_space<vmem>>, vector<64x4xf32>
      %21 = vector.shape_cast %17 : vector<2x64xf32> to vector<2x1x64xf32>
      %22 = vector.shape_cast %19 : vector<4x64xf32> to vector<1x4x64xf32>
      %23 = vector.broadcast %21 : vector<2x1x64xf32> to vector<2x4x64xf32>
      %24 = vector.broadcast %22 : vector<1x4x64xf32> to vector<2x4x64xf32>
      %25 = arith.mulf %23, %24 : vector<2x4x64xf32>
      %cst_23 = arith.constant dense<0.000000e+00> : vector<2x4xf32>
      %26 = vector.multi_reduction <add>, %25, %cst_23 [2] : vector<2x4x64xf32> to vector<2x4xf32>
      %cst_24 = arith.constant 0.000000e+00 : f32
      %27 = vector.broadcast %cst_24 : f32 to vector<2x4xf32>
      %28 = arith.maximumf %26, %27 : vector<2x4xf32>
      %29 = vector.shape_cast %28 : vector<2x4xf32> to vector<2x1x4xf32>
      %30 = vector.shape_cast %20 : vector<64x4xf32> to vector<1x64x4xf32>
      %31 = vector.broadcast %29 : vector<2x1x4xf32> to vector<2x64x4xf32>
      %32 = vector.broadcast %30 : vector<1x64x4xf32> to vector<2x64x4xf32>
      %33 = arith.mulf %31, %32 : vector<2x64x4xf32>
      %cst_25 = arith.constant dense<0.000000e+00> : vector<2x64xf32>
      %34 = vector.multi_reduction <add>, %33, %cst_25 [2] : vector<2x64x4xf32> to vector<2x64xf32>
      %35 = vector.shape_cast %18 : vector<2x64xf32> to vector<2x1x64xf32>
      %36 = vector.shape_cast %19 : vector<4x64xf32> to vector<1x4x64xf32>
      %37 = vector.broadcast %35 : vector<2x1x64xf32> to vector<2x4x64xf32>
      %38 = vector.broadcast %36 : vector<1x4x64xf32> to vector<2x4x64xf32>
      %39 = arith.mulf %37, %38 : vector<2x4x64xf32>
      %cst_26 = arith.constant dense<0.000000e+00> : vector<2x4xf32>
      %40 = vector.multi_reduction <add>, %39, %cst_26 [2] : vector<2x4x64xf32> to vector<2x4xf32>
      %cst_27 = arith.constant 0.000000e+00 : f32
      %41 = vector.broadcast %cst_27 : f32 to vector<2x4xf32>
      %42 = arith.maximumf %40, %41 : vector<2x4xf32>
      %43 = vector.shape_cast %42 : vector<2x4xf32> to vector<2x1x4xf32>
      %44 = vector.shape_cast %20 : vector<64x4xf32> to vector<1x64x4xf32>
      %45 = vector.broadcast %43 : vector<2x1x4xf32> to vector<2x64x4xf32>
      %46 = vector.broadcast %44 : vector<1x64x4xf32> to vector<2x64x4xf32>
      %47 = arith.mulf %45, %46 : vector<2x64x4xf32>
      %cst_28 = arith.constant dense<0.000000e+00> : vector<2x64xf32>
      %48 = vector.multi_reduction <add>, %47, %cst_28 [2] : vector<2x64x4xf32> to vector<2x64xf32>
      %49 = arith.addf %34, %48 : vector<2x64xf32>
      %cst_29 = arith.constant 0.000000e+00 : f32
      %50 = vector.broadcast %cst_29 : f32 to vector<2x64xf32>
      %51 = arith.subf %50, %49 : vector<2x64xf32>
      %52 = math.exp %51 : vector<2x64xf32>
      %cst_30 = arith.constant 1.000000e+00 : f32
      %53 = vector.broadcast %cst_30 : f32 to vector<2x64xf32>
      %54 = arith.addf %53, %52 : vector<2x64xf32>
      %cst_31 = arith.constant 1.000000e+00 : f32
      %55 = vector.broadcast %cst_31 : f32 to vector<2x64xf32>
      %56 = arith.divf %55, %54 : vector<2x64xf32>
      %57 = vector.shape_cast %56 : vector<2x64xf32> to vector<2x1x64xf32>
      %c0_32 = arith.constant 0 : index
      %c0_33 = arith.constant 0 : index
      %c0_34 = arith.constant 0 : index
      %58 = vector.load %arg5[%c0_32, %c0_33, %c0_34] : memref<2x1x64xf32, #tpu.memory_space<vmem>>, vector<2x1x64xf32>
      tpu.vector_store %arg5[%c0_32, %c0_33, %c0_34], %57 {strides = array<i32>} : memref<2x1x64xf32, #tpu.memory_space<vmem>>, vector<2x1x64xf32>,
    } else {
    }
    return
  }
  func.func @transform_0(%arg0: i32, %arg1: i32) -> (i32, i32, i32) {
    %c0_i32 = arith.constant 0 : i32
    %c0_i32_0 = arith.constant 0 : i32
    return %arg0, %c0_i32, %arg1 : i32, i32, i32
  }
  func.func @transform_1(%arg0: i32, %arg1: i32) -> (i32, i32) {
    %c0_i32 = arith.constant 0 : i32
    %c0_i32_0 = arith.constant 0 : i32
    %c0_i32_1 = arith.constant 0 : i32
    return %c0_i32, %c0_i32_0 : i32, i32
  }
  func.func @transform_2(%arg0: i32, %arg1: i32) -> (i32, i32) {
    %c0_i32 = arith.constant 0 : i32
    %c0_i32_0 = arith.constant 0 : i32
    %c0_i32_1 = arith.constant 0 : i32
    return %c0_i32, %c0_i32_0 : i32, i32
  }
  func.func @transform_3(%arg0: i32, %arg1: i32) -> (i32, i32, i32) {
    %c0_i32 = arith.constant 0 : i32
    %c0_i32_0 = arith.constant 0 : i32
    %c0_i32_1 = arith.constant 0 : i32
    return %arg0, %c0_i32, %c0_i32_0 : i32, i32, i32
  }
}

</mosaic_0001>

<llo_original>
// kernel: tpu_custom_call.1
$region0: #{tpu_custom_call.1}
  #allocation0 [shape = 'u32[]', space=smem, size = 0x4, offset = 0x4, fixed_abs, tag = 'smem constant byte address 0x4 - core index']
  #allocation1 [shape = 'u32[144,128]{1,0:T(1,128)}', space=vmem, size = 0x12000, scoped, tag = 'internal scratch']
  #allocation2 [shape = 'f32[2,64]{1,0:T(2,128)}', space=vmem, size = 0x400, scoped, tag = 'scratch operand']
  #allocation3 [shape = 'f32[2,64]{1,0:T(2,128)}', space=vmem, size = 0x400, scoped, tag = 'scratch operand']
  %s0 = inlined_call_operand.hbm [shape: f32[2,64,256], index: 0, kind: input, shape index: {}]
  %s1 = inlined_call_operand.vmem [shape: f32[4,64], index: 1, kind: input, shape index: {}]
  %s2 = inlined_call_operand.vmem [shape: f32[64,4], index: 2, kind: input, shape index: {}]
  %s3 = inlined_call_operand.hbm [shape: f32[2,1,64], index: 3, kind: output, shape index: {}]
  %s4 = sld [smem:[#allocation0]]
  $region34: #{tpu_custom_call.1} parent=0
    _
  %s6 = ssub.s32 1, %s4
  %s7 = scalar_select 0, %s6, %s4
  $region1: #{tpu_custom_call.1} parent=0
    #allocation4 [shape = 'u8[131072]{0}', space=vmem, size = 0x20000, scoped, tag = 'input window, operand 0, single buffered']
    #allocation5 [shape = 's32[1]{0}', space=sflag, size = 0x4, scoped, tag = 'scoped memory for tpu_custom_call.1']
    #allocation6 [shape = 's32[1]{0}', space=sflag, size = 0x4, scoped, tag = 'scoped memory for tpu_custom_call.1']
    #allocation7 [shape = 'u8[1024]{0}', space=vmem, size = 0x400, scoped, tag = 'output window, operand 0, single buffered']
    %8 = vsyncpa [#allocation5], 0
    %9 = vsyncpa [#allocation6], 0
    // Predicated region
    $region2: #{tpu_custom_call.1} parent=1 // pred_check
      _
    $region3: #{tpu_custom_call.1} parent=1 // pred_check_branch
      %11 = sbr.rel (0) target = $region5
    $region4: #{tpu_custom_call.1} parent=1 // pred_region
      %s13 = ssub.s32 4096, 4096
      %14 = vsyncadd [#allocation5], %s13
      %s15 = sshll.u32 [#allocation4], 4
      %s16 = int_to_ptr.vmem [resolvable:$true] %s15
      %21 = dma.hbm_to_vmem [thread:$0]  %s0, 4096, %s16, [#allocation5], 256, 256, 16
    $region5: #{tpu_custom_call.1} parent=1 // pred_fallthru
      _
    // Predicated region
    $region6: #{tpu_custom_call.1} parent=1 // pred_check
      _
    $region7: #{tpu_custom_call.1} parent=1 // pred_check_branch
      %23 = sbr.rel (0) target = $region9
    $region8: #{tpu_custom_call.1} parent=1 // pred_region
      _
    $region9: #{tpu_custom_call.1} parent=1 // pred_fallthru
      _
    // Predicated region
    $region10: #{tpu_custom_call.1} parent=1 // pred_check
      _
    $region11: #{tpu_custom_call.1} parent=1 // pred_check_branch
      %25 = sbr.rel (0) target = $region13
    $region12: #{tpu_custom_call.1} parent=1 // pred_region
      _
    $region13: #{tpu_custom_call.1} parent=1 // pred_fallthru
      _
    // Predicated region
    $region14: #{tpu_custom_call.1} parent=1 // pred_check
      _
    $region15: #{tpu_custom_call.1} parent=1 // pred_check_branch
      %27 = sbr.rel (0) target = $region17
    $region16: #{tpu_custom_call.1} parent=1 // pred_region
      %28 = dma.done [#allocation5], 4096
    $region17: #{tpu_custom_call.1} parent=1 // pred_fallthru
      _
    %p29 = scmp.eq.s32.totalorder 0, 0
    // Predicated region
    $region18: #{tpu_custom_call.1} parent=1 // pred_check
      %p30 = pneg %p29
    $region19: #{tpu_custom_call.1} parent=1 // pred_check_branch
      %32 = sbr.rel (%p30) target = $region21
    $region20: #{tpu_custom_call.1} parent=1 // pred_region
      %vm33 = vcmask 517120
      %34 = vst.msk [vmem:[#allocation2] sm:$0x3] %vm33, 0.0
      %35 = vst.msk [vmem:[#allocation3] sm:$0x3] %vm33, -inf
    $region21: #{tpu_custom_call.1} parent=1 // pred_fallthru
      _
    %v36 = vld [vmem:[#allocation4] sm:$0xff]
    %v37 = vld [vmem:[#allocation4 + $0x8] sm:$0xff]
    %v38 = vld [vmem:[#allocation4 + $0x10] sm:$0xff]
    %v39 = vld [vmem:[#allocation4 + $0x18] sm:$0xff]
    %v40 = vld [vmem:[#allocation4 + $0x20] sm:$0xff]
    %v41 = vld [vmem:[#allocation4 + $0x28] sm:$0xff]
    %v42 = vld [vmem:[#allocation4 + $0x30] sm:$0xff]
    %v43 = vld [vmem:[#allocation4 + $0x38] sm:$0xff]
    %v44 = vld [vmem:[#allocation4 + $0x40] sm:$0xff]
    %v45 = vld [vmem:[#allocation4 + $0x48] sm:$0xff]
    %v46 = vld [vmem:[#allocation4 + $0x50] sm:$0xff]
    %v47 = vld [vmem:[#allocation4 + $0x58] sm:$0xff]
    %v48 = vld [vmem:[#allocation4 + $0x60] sm:$0xff]
    %v49 = vld [vmem:[#allocation4 + $0x68] sm:$0xff]
    %v50 = vld [vmem:[#allocation4 + $0x70] sm:$0xff]
    %v51 = vld [vmem:[#allocation4 + $0x78] sm:$0xff]
    %v52 = vld [vmem:[#allocation4 + $0x80] sm:$0xff]
    %v53 = vld [vmem:[#allocation4 + $0x88] sm:$0xff]
    %v54 = vld [vmem:[#allocation4 + $0x90] sm:$0xff]
    %v55 = vld [vmem:[#allocation4 + $0x98] sm:$0xff]
    %v56 = vld [vmem:[#allocation4 + $0xa0] sm:$0xff]
    %v57 = vld [vmem:[#allocation4 + $0xa8] sm:$0xff]
    %v58 = vld [vmem:[#allocation4 + $0xb0] sm:$0xff]
    %v59 = vld [vmem:[#allocation4 + $0xb8] sm:$0xff]
    %v60 = vld [vmem:[#allocation4 + $0xc0] sm:$0xff]
    %v61 = vld [vmem:[#allocation4 + $0xc8] sm:$0xff]
    %v62 = vld [vmem:[#allocation4 + $0xd0] sm:$0xff]
    %v63 = vld [vmem:[#allocation4 + $0xd8] sm:$0xff]
    %v64 = vld [vmem:[#allocation4 + $0xe0] sm:$0xff]
    %v65 = vld [vmem:[#allocation4 + $0xe8] sm:$0xff]
    %v66 = vld [vmem:[#allocation4 + $0xf0] sm:$0xff]
    %v67 = vld [vmem:[#allocation4 + $0xf8] sm:$0xff]
    %v68 = vld [vmem:[#allocation2] sm:$0x3]
    %v69 = vadd.f32 %v36, %v37
    %70 = vadd.xlane.f32.xlu0 %v69
    %v71 = vpop.xlane.xlu0 %70
    %v72 = vadd.f32 %v38, %v39
    %73 = vadd.xlane.f32.xlu0 %v72
    %v74 = vpop.xlane.xlu0 %73
    %v75 = vadd.f32 %v40, %v41
    %76 = vadd.xlane.f32.xlu0 %v75
    %v77 = vpop.xlane.xlu0 %76
    %v78 = vadd.f32 %v42, %v43
    %79 = vadd.xlane.f32.xlu0 %v78
    %v80 = vpop.xlane.xlu0 %79
    %v81 = vadd.f32 %v44, %v45
    %82 = vadd.xlane.f32.xlu0 %v81
    %v83 = vpop.xlane.xlu0 %82
    %v84 = vadd.f32 %v46, %v47
    %85 = vadd.xlane.f32.xlu0 %v84
    %v86 = vpop.xlane.xlu0 %85
    %v87 = vadd.f32 %v48, %v49
    %88 = vadd.xlane.f32.xlu0 %v87
    %v89 = vpop.xlane.xlu0 %88
    %v90 = vadd.f32 %v50, %v51
    %91 = vadd.xlane.f32.xlu0 %v90
    %v92 = vpop.xlane.xlu0 %91
    %v93 = vadd.f32 %v52, %v53
    %94 = vadd.xlane.f32.xlu0 %v93
    %v95 = vpop.xlane.xlu0 %94
    %v96 = vadd.f32 %v54, %v55
    %97 = vadd.xlane.f32.xlu0 %v96
    %v98 = vpop.xlane.xlu0 %97
    %v99 = vadd.f32 %v56, %v57
    %100 = vadd.xlane.f32.xlu0 %v99
    %v101 = vpop.xlane.xlu0 %100
    %v102 = vadd.f32 %v58, %v59
    %103 = vadd.xlane.f32.xlu0 %v102
    %v104 = vpop.xlane.xlu0 %103
    %v105 = vadd.f32 %v60, %v61
    %106 = vadd.xlane.f32.xlu0 %v105
    %v107 = vpop.xlane.xlu0 %106
    %v108 = vadd.f32 %v62, %v63
    %109 = vadd.xlane.f32.xlu0 %v108
    %v110 = vpop.xlane.xlu0 %109
    %v111 = vadd.f32 %v64, %v65
    %112 = vadd.xlane.f32.xlu0 %v111
    %v113 = vpop.xlane.xlu0 %112
    %v114 = vadd.f32 %v66, %v67
    %115 = vadd.xlane.f32.xlu0 %v114
    %v116 = vpop.xlane.xlu0 %115
    %v133 = vlaneseq
    %v134 = vand.u32 %v133, 127
    %v135 = vlaneseq
    %v136 = vshrl.u32 %v135, 7
    %v137 = vsub.s32 %v134, %v136
    %v138 = vrot.slane %v71, %v137
    %v139 = vadd.s32 %v134, 4294967288
    %v140 = vlaneseq
    %v141 = vshrl.u32 %v140, 7
    %v142 = vsub.s32 %v139, %v141
    %v143 = vrot.slane %v74, %v142
    %vm144 = vcmask 130112
    %v145 = vsel %vm144, %v143, %v138
    %v146 = vadd.s32 %v134, 4294967280
    %v147 = vlaneseq
    %v148 = vshrl.u32 %v147, 7
    %v149 = vsub.s32 %v146, %v148
    %v150 = vrot.slane %v77, %v149
    %vm151 = vcmask 195712
    %v152 = vsel %vm151, %v150, %v145
    %v153 = vadd.s32 %v134, 4294967272
    %v154 = vlaneseq
    %v155 = vshrl.u32 %v154, 7
    %v156 = vsub.s32 %v153, %v155
    %v157 = vrot.slane %v80, %v156
    %vm158 = vcmask 261312
    %v159 = vsel %vm158, %v157, %v152
    %v160 = vadd.s32 %v134, 4294967264
    %v161 = vlaneseq
    %v162 = vshrl.u32 %v161, 7
    %v163 = vsub.s32 %v160, %v162
    %v164 = vrot.slane %v83, %v163
    %vm165 = vcmask 326912
    %v166 = vsel %vm165, %v164, %v159
    %v167 = vadd.s32 %v134, 4294967256
    %v168 = vlaneseq
    %v169 = vshrl.u32 %v168, 7
    %v170 = vsub.s32 %v167, %v169
    %v171 = vrot.slane %v86, %v170
    %vm172 = vcmask 392512
    %v173 = vsel %vm172, %v171, %v166
    %v174 = vadd.s32 %v134, 4294967248
    %v175 = vlaneseq
    %v176 = vshrl.u32 %v175, 7
    %v177 = vsub.s32 %v174, %v176
    %v178 = vrot.slane %v89, %v177
    %vm179 = vcmask 458112
    %v180 = vsel %vm179, %v178, %v173
    %v181 = vadd.s32 %v134, 4294967240
    %v182 = vlaneseq
    %v183 = vshrl.u32 %v182, 7
    %v184 = vsub.s32 %v181, %v183
    %v185 = vrot.slane %v92, %v184
    %vm186 = vcmask 523712
    %v187 = vsel %vm186, %v185, %v180
    %v188 = vlaneseq
    %v189 = vshrl.u32 %v188, 7
    %v190 = vsub.s32 %v134, %v189
    %v191 = vrot.slane %v95, %v190
    %v192 = vlaneseq
    %v193 = vshrl.u32 %v192, 7
    %v194 = vsub.s32 %v139, %v193
    %v195 = vrot.slane %v98, %v194
    %v196 = vsel %vm144, %v195, %v191
    %v197 = vlaneseq
    %v198 = vshrl.u32 %v197, 7
    %v199 = vsub.s32 %v146, %v198
    %v200 = vrot.slane %v101, %v199
    %v201 = vsel %vm151, %v200, %v196
    %v202 = vlaneseq
    %v203 = vshrl.u32 %v202, 7
    %v204 = vsub.s32 %v153, %v203
    %v205 = vrot.slane %v104, %v204
    %v206 = vsel %vm158, %v205, %v201
    %v207 = vlaneseq
    %v208 = vshrl.u32 %v207, 7
    %v209 = vsub.s32 %v160, %v208
    %v210 = vrot.slane %v107, %v209
    %v211 = vsel %vm165, %v210, %v206
    %v212 = vlaneseq
    %v213 = vshrl.u32 %v212, 7
    %v214 = vsub.s32 %v167, %v213
    %v215 = vrot.slane %v110, %v214
    %v216 = vsel %vm172, %v215, %v211
    %v217 = vlaneseq
    %v218 = vshrl.u32 %v217, 7
    %v219 = vsub.s32 %v174, %v218
    %v220 = vrot.slane %v113, %v219
    %v221 = vsel %vm179, %v220, %v216
    %v222 = vlaneseq
    %v223 = vshrl.u32 %v222, 7
    %v224 = vsub.s32 %v181, %v223
    %v225 = vrot.slane %v116, %v224
    %v226 = vsel %vm186, %v225, %v221
    %vm227 = vcmask 1041409
    %v228 = vsel %vm227, %v226, %v187
    %v230 = vadd.f32 %v68, %v228
    %vm231 = vcmask 517120
    %232 = vst.msk [vmem:[#allocation2] sm:$0x3] %vm231, %v230
    %v233 = vld [vmem:[#allocation3] sm:$0x3]
    %v234 = vmax.f32 %v36, %v37
    %235 = vmax.xlane.f32.xlu0 %v234
    %v236 = vpop.xlane.xlu0 %235
    %v237 = vmax.f32 %v38, %v39
    %238 = vmax.xlane.f32.xlu0 %v237
    %v239 = vpop.xlane.xlu0 %238
    %v240 = vmax.f32 %v40, %v41
    %241 = vmax.xlane.f32.xlu0 %v240
    %v242 = vpop.xlane.xlu0 %241
    %v243 = vmax.f32 %v42, %v43
    %244 = vmax.xlane.f32.xlu0 %v243
    %v245 = vpop.xlane.xlu0 %244
    %v246 = vmax.f32 %v44, %v45
    %247 = vmax.xlane.f32.xlu0 %v246
    %v248 = vpop.xlane.xlu0 %247
    %v249 = vmax.f32 %v46, %v47
    %250 = vmax.xlane.f32.xlu0 %v249
    %v251 = vpop.xlane.xlu0 %250
    %v252 = vmax.f32 %v48, %v49
    %253 = vmax.xlane.f32.xlu0 %v252
    %v254 = vpop.xlane.xlu0 %253
    %v255 = vmax.f32 %v50, %v51
    %256 = vmax.xlane.f32.xlu0 %v255
    %v257 = vpop.xlane.xlu0 %256
    %v258 = vmax.f32 %v52, %v53
    %259 = vmax.xlane.f32.xlu0 %v258
    %v260 = vpop.xlane.xlu0 %259
    %v261 = vmax.f32 %v54, %v55
    %262 = vmax.xlane.f32.xlu0 %v261
    %v263 = vpop.xlane.xlu0 %262
    %v264 = vmax.f32 %v56, %v57
    %265 = vmax.xlane.f32.xlu0 %v264
    %v266 = vpop.xlane.xlu0 %265
    %v267 = vmax.f32 %v58, %v59
    %268 = vmax.xlane.f32.xlu0 %v267
    %v269 = vpop.xlane.xlu0 %268
    %v270 = vmax.f32 %v60, %v61
    %271 = vmax.xlane.f32.xlu0 %v270
    %v272 = vpop.xlane.xlu0 %271
    %v273 = vmax.f32 %v62, %v63
    %274 = vmax.xlane.f32.xlu0 %v273
    %v275 = vpop.xlane.xlu0 %274
    %v276 = vmax.f32 %v64, %v65
    %277 = vmax.xlane.f32.xlu0 %v276
    %v278 = vpop.xlane.xlu0 %277
    %v279 = vmax.f32 %v66, %v67
    %280 = vmax.xlane.f32.xlu0 %v279
    %v281 = vpop.xlane.xlu0 %280
    %v298 = vlaneseq
    %v299 = vshrl.u32 %v298, 7
    %v300 = vsub.s32 %v134, %v299
    %v301 = vrot.slane %v236, %v300
    %v302 = vlaneseq
    %v303 = vshrl.u32 %v302, 7
    %v304 = vsub.s32 %v139, %v303
    %v305 = vrot.slane %v239, %v304
    %v306 = vsel %vm144, %v305, %v301
    %v307 = vlaneseq
    %v308 = vshrl.u32 %v307, 7
    %v309 = vsub.s32 %v146, %v308
    %v310 = vrot.slane %v242, %v309
    %v311 = vsel %vm151, %v310, %v306
    %v312 = vlaneseq
    %v313 = vshrl.u32 %v312, 7
    %v314 = vsub.s32 %v153, %v313
    %v315 = vrot.slane %v245, %v314
    %v316 = vsel %vm158, %v315, %v311
    %v317 = vlaneseq
    %v318 = vshrl.u32 %v317, 7
    %v319 = vsub.s32 %v160, %v318
    %v320 = vrot.slane %v248, %v319
    %v321 = vsel %vm165, %v320, %v316
    %v322 = vlaneseq
    %v323 = vshrl.u32 %v322, 7
    %v324 = vsub.s32 %v167, %v323
    %v325 = vrot.slane %v251, %v324
    %v326 = vsel %vm172, %v325, %v321
    %v327 = vlaneseq
    %v328 = vshrl.u32 %v327, 7
    %v329 = vsub.s32 %v174, %v328
    %v330 = vrot.slane %v254, %v329
    %v331 = vsel %vm179, %v330, %v326
    %v332 = vlaneseq
    %v333 = vshrl.u32 %v332, 7
    %v334 = vsub.s32 %v181, %v333
    %v335 = vrot.slane %v257, %v334
    %v336 = vsel %vm186, %v335, %v331
    %v337 = vlaneseq
    %v338 = vshrl.u32 %v337, 7
    %v339 = vsub.s32 %v134, %v338
    %v340 = vrot.slane %v260, %v339
    %v341 = vlaneseq
    %v342 = vshrl.u32 %v341, 7
    %v343 = vsub.s32 %v139, %v342
    %v344 = vrot.slane %v263, %v343
    %v345 = vsel %vm144, %v344, %v340
    %v346 = vlaneseq
    %v347 = vshrl.u32 %v346, 7
    %v348 = vsub.s32 %v146, %v347
    %v349 = vrot.slane %v266, %v348
    %v350 = vsel %vm151, %v349, %v345
    %v351 = vlaneseq
    %v352 = vshrl.u32 %v351, 7
    %v353 = vsub.s32 %v153, %v352
    %v354 = vrot.slane %v269, %v353
    %v355 = vsel %vm158, %v354, %v350
    %v356 = vlaneseq
    %v357 = vshrl.u32 %v356, 7
    %v358 = vsub.s32 %v160, %v357
    %v359 = vrot.slane %v272, %v358
    %v360 = vsel %vm165, %v359, %v355
    %v361 = vlaneseq
    %v362 = vshrl.u32 %v361, 7
    %v363 = vsub.s32 %v167, %v362
    %v364 = vrot.slane %v275, %v363
    %v365 = vsel %vm172, %v364, %v360
    %v366 = vlaneseq
    %v367 = vshrl.u32 %v366, 7
    %v368 = vsub.s32 %v174, %v367
    %v369 = vrot.slane %v278, %v368
    %v370 = vsel %vm179, %v369, %v365
    %v371 = vlaneseq
    %v372 = vshrl.u32 %v371, 7
    %v373 = vsub.s32 %v181, %v372
    %v374 = vrot.slane %v281, %v373
    %v375 = vsel %vm186, %v374, %v370
    %v376 = vsel %vm227, %v375, %v336
    %v378 = vmax.f32 %v233, %v376
    %379 = vst.msk [vmem:[#allocation3] sm:$0x3] %vm231, %v378
    // Predicated region
    $region22: #{tpu_custom_call.1} parent=1 // pred_check
      %p380 = pneg %p29
    $region23: #{tpu_custom_call.1} parent=1 // pred_check_branch
      %382 = sbr.rel (%p380) target = $region25
    $region24: #{tpu_custom_call.1} parent=1 // pred_region
      %v383 = vld [vmem:[#allocation2] sm:$0x3]
      %v384 = vmul.f32 %v383, 0.00390625
      %v385 = vld [vmem:[#allocation3] sm:$0x3]
      %v386 = vld [vmem:[%s1] sm:$0xf]
      %v387 = vld [vmem:[%s2] sm:$0xff]
      %v388 = vld [vmem:[%s2 + $0x8] sm:$0xff]
      %v389 = vld [vmem:[%s2 + $0x10] sm:$0xff]
      %v390 = vld [vmem:[%s2 + $0x18] sm:$0xff]
      %v391 = vld [vmem:[%s2 + $0x20] sm:$0xff]
      %v392 = vld [vmem:[%s2 + $0x28] sm:$0xff]
      %v393 = vld [vmem:[%s2 + $0x30] sm:$0xff]
      %v394 = vld [vmem:[%s2 + $0x38] sm:$0xff]
      %v397 = vunpack.c.l.s4 1966171168
      %v398 = vunpack.c.0.s8 %v397
      %v399 = vlaneseq
      %v400 = vshrl.u32 %v399, 7
      %v401 = vsub.s32 %v398, %v400
      %v402 = vrot.slane %v384, %v401
      %v403 = vcombine.high %v402, %v402
      %v405 = vunpack.c.l.s4 1966171168
      %v406 = vunpack.c.0.s8 %v405
      %v407 = vlaneseq
      %v408 = vshrl.u32 %v407, 7
      %v409 = vsub.s32 %v406, %v408
      %v410 = vrot.slane %v402, %v409
      %v412 = vunpack.c.l.s4 1966171168
      %v413 = vunpack.c.0.s8 %v412
      %v414 = vlaneseq
      %v415 = vshrl.u32 %v414, 7
      %v416 = vsub.s32 %v413, %v415
      %v417 = vrot.slane %v403, %v416
      %v418 = vlaneseq
      %v419 = vshrl.u32 %v418, 7
      %v420 = vsub.s32 0, %v419
      %v421 = vrot.slane %v410, %v420
      %v422 = vlaneseq
      %v423 = vshrl.u32 %v422, 7
      %v424 = vsub.s32 0, %v423
      %v425 = vrot.slane %v417, %v424
      %v428 = vmul.f32 %v421, %v386
      %v429 = vmul.f32 %v425, %v386
      %vm430 = vcmask 519168
      %v431 = vsel %vm430, %v428, 0.0
      %432 = vadd.xlane.f32.xlu0 %v431
      %v433 = vpop.xlane.xlu0 %432
      %v434 = vsel %vm430, %v429, 0.0
      %435 = vadd.xlane.f32.xlu0 %v434
      %v436 = vpop.xlane.xlu0 %435
      %v437 = vmax.f32 %v433, 0.0
      %v438 = vmax.f32 %v436, 0.0
      %v447 = vlaneseq
      %v448 = vshrl.u32 %v447, 7
      %v449 = vsub.s32 0, %v448
      %v450 = vrot.slane %v387, %v449
      %452 = vbcast.lane.b32.xlu0 %v450, 256
      %v453 = vpop.permute.xlu0 %452
      %v454 = vlaneseq
      %v455 = vshrl.u32 %v454, 7
      %v456 = vsub.s32 1, %v455
      %v457 = vrot.slane %v387, %v456
      %459 = vbcast.lane.b32.xlu0 %v457, 256
      %v460 = vpop.permute.xlu0 %459
      %v461 = vlaneseq
      %v462 = vshrl.u32 %v461, 7
      %v463 = vsub.s32 2, %v462
      %v464 = vrot.slane %v387, %v463
      %466 = vbcast.lane.b32.xlu0 %v464, 256
      %v467 = vpop.permute.xlu0 %466
      %v468 = vlaneseq
      %v469 = vshrl.u32 %v468, 7
      %v470 = vsub.s32 3, %v469
      %v471 = vrot.slane %v387, %v470
      %473 = vbcast.lane.b32.xlu0 %v471, 256
      %v474 = vpop.permute.xlu0 %473
      %v475 = vlaneseq
      %v476 = vshrl.u32 %v475, 7
      %v477 = vsub.s32 4, %v476
      %v478 = vrot.slane %v387, %v477
      %480 = vbcast.lane.b32.xlu0 %v478, 256
      %v481 = vpop.permute.xlu0 %480
      %v482 = vlaneseq
      %v483 = vshrl.u32 %v482, 7
      %v484 = vsub.s32 5, %v483
      %v485 = vrot.slane %v387, %v484
      %487 = vbcast.lane.b32.xlu0 %v485, 256
      %v488 = vpop.permute.xlu0 %487
      %v489 = vlaneseq
      %v490 = vshrl.u32 %v489, 7
      %v491 = vsub.s32 6, %v490
      %v492 = vrot.slane %v387, %v491
      %494 = vbcast.lane.b32.xlu0 %v492, 256
      %v495 = vpop.permute.xlu0 %494
      %v496 = vlaneseq
      %v497 = vshrl.u32 %v496, 7
      %v498 = vsub.s32 7, %v497
      %v499 = vrot.slane %v387, %v498
      %501 = vbcast.lane.b32.xlu0 %v499, 256
      %v502 = vpop.permute.xlu0 %501
      %v503 = vlaneseq
      %v504 = vshrl.u32 %v503, 7
      %v505 = vsub.s32 0, %v504
      %v506 = vrot.slane %v388, %v505
      %508 = vbcast.lane.b32.xlu0 %v506, 256
      %v509 = vpop.permute.xlu0 %508
      %v510 = vlaneseq
      %v511 = vshrl.u32 %v510, 7
      %v512 = vsub.s32 1, %v511
      %v513 = vrot.slane %v388, %v512
      %515 = vbcast.lane.b32.xlu0 %v513, 256
      %v516 = vpop.permute.xlu0 %515
      %v517 = vlaneseq
      %v518 = vshrl.u32 %v517, 7
      %v519 = vsub.s32 2, %v518
      %v520 = vrot.slane %v388, %v519
      %522 = vbcast.lane.b32.xlu0 %v520, 256
      %v523 = vpop.permute.xlu0 %522
      %v524 = vlaneseq
      %v525 = vshrl.u32 %v524, 7
      %v526 = vsub.s32 3, %v525
      %v527 = vrot.slane %v388, %v526
      %529 = vbcast.lane.b32.xlu0 %v527, 256
      %v530 = vpop.permute.xlu0 %529
      %v531 = vlaneseq
      %v532 = vshrl.u32 %v531, 7
      %v533 = vsub.s32 4, %v532
      %v534 = vrot.slane %v388, %v533
      %536 = vbcast.lane.b32.xlu0 %v534, 256
      %v537 = vpop.permute.xlu0 %536
      %v538 = vlaneseq
      %v539 = vshrl.u32 %v538, 7
      %v540 = vsub.s32 5, %v539
      %v541 = vrot.slane %v388, %v540
      %543 = vbcast.lane.b32.xlu0 %v541, 256
      %v544 = vpop.permute.xlu0 %543
      %v545 = vlaneseq
      %v546 = vshrl.u32 %v545, 7
      %v547 = vsub.s32 6, %v546
      %v548 = vrot.slane %v388, %v547
      %550 = vbcast.lane.b32.xlu0 %v548, 256
      %v551 = vpop.permute.xlu0 %550
      %v552 = vlaneseq
      %v553 = vshrl.u32 %v552, 7
      %v554 = vsub.s32 7, %v553
      %v555 = vrot.slane %v388, %v554
      %557 = vbcast.lane.b32.xlu0 %v555, 256
      %v558 = vpop.permute.xlu0 %557
      %v559 = vlaneseq
      %v560 = vshrl.u32 %v559, 7
      %v561 = vsub.s32 0, %v560
      %v562 = vrot.slane %v389, %v561
      %564 = vbcast.lane.b32.xlu0 %v562, 256
      %v565 = vpop.permute.xlu0 %564
      %v566 = vlaneseq
      %v567 = vshrl.u32 %v566, 7
      %v568 = vsub.s32 1, %v567
      %v569 = vrot.slane %v389, %v568
      %571 = vbcast.lane.b32.xlu0 %v569, 256
      %v572 = vpop.permute.xlu0 %571
      %v573 = vlaneseq
      %v574 = vshrl.u32 %v573, 7
      %v575 = vsub.s32 2, %v574
      %v576 = vrot.slane %v389, %v575
      %578 = vbcast.lane.b32.xlu0 %v576, 256
      %v579 = vpop.permute.xlu0 %578
      %v580 = vlaneseq
      %v581 = vshrl.u32 %v580, 7
      %v582 = vsub.s32 3, %v581
      %v583 = vrot.slane %v389, %v582
      %585 = vbcast.lane.b32.xlu0 %v583, 256
      %v586 = vpop.permute.xlu0 %585
      %v587 = vlaneseq
      %v588 = vshrl.u32 %v587, 7
      %v589 = vsub.s32 4, %v588
      %v590 = vrot.slane %v389, %v589
      %592 = vbcast.lane.b32.xlu0 %v590, 256
      %v593 = vpop.permute.xlu0 %592
      %v594 = vlaneseq
      %v595 = vshrl.u32 %v594, 7
      %v596 = vsub.s32 5, %v595
      %v597 = vrot.slane %v389, %v596
      %599 = vbcast.lane.b32.xlu0 %v597, 256
      %v600 = vpop.permute.xlu0 %599
      %v601 = vlaneseq
      %v602 = vshrl.u32 %v601, 7
      %v603 = vsub.s32 6, %v602
      %v604 = vrot.slane %v389, %v603
      %606 = vbcast.lane.b32.xlu0 %v604, 256
      %v607 = vpop.permute.xlu0 %606
      %v608 = vlaneseq
      %v609 = vshrl.u32 %v608, 7
      %v610 = vsub.s32 7, %v609
      %v611 = vrot.slane %v389, %v610
      %613 = vbcast.lane.b32.xlu0 %v611, 256
      %v614 = vpop.permute.xlu0 %613
      %v615 = vlaneseq
      %v616 = vshrl.u32 %v615, 7
      %v617 = vsub.s32 0, %v616
      %v618 = vrot.slane %v390, %v617
      %620 = vbcast.lane.b32.xlu0 %v618, 256
      %v621 = vpop.permute.xlu0 %620
      %v622 = vlaneseq
      %v623 = vshrl.u32 %v622, 7
      %v624 = vsub.s32 1, %v623
      %v625 = vrot.slane %v390, %v624
      %627 = vbcast.lane.b32.xlu0 %v625, 256
      %v628 = vpop.permute.xlu0 %627
      %v629 = vlaneseq
      %v630 = vshrl.u32 %v629, 7
      %v631 = vsub.s32 2, %v630
      %v632 = vrot.slane %v390, %v631
      %634 = vbcast.lane.b32.xlu0 %v632, 256
      %v635 = vpop.permute.xlu0 %634
      %v636 = vlaneseq
      %v637 = vshrl.u32 %v636, 7
      %v638 = vsub.s32 3, %v637
      %v639 = vrot.slane %v390, %v638
      %641 = vbcast.lane.b32.xlu0 %v639, 256
      %v642 = vpop.permute.xlu0 %641
      %v643 = vlaneseq
      %v644 = vshrl.u32 %v643, 7
      %v645 = vsub.s32 4, %v644
      %v646 = vrot.slane %v390, %v645
      %648 = vbcast.lane.b32.xlu0 %v646, 256
      %v649 = vpop.permute.xlu0 %648
      %v650 = vlaneseq
      %v651 = vshrl.u32 %v650, 7
      %v652 = vsub.s32 5, %v651
      %v653 = vrot.slane %v390, %v652
      %655 = vbcast.lane.b32.xlu0 %v653, 256
      %v656 = vpop.permute.xlu0 %655
      %v657 = vlaneseq
      %v658 = vshrl.u32 %v657, 7
      %v659 = vsub.s32 6, %v658
      %v660 = vrot.slane %v390, %v659
      %662 = vbcast.lane.b32.xlu0 %v660, 256
      %v663 = vpop.permute.xlu0 %662
      %v664 = vlaneseq
      %v665 = vshrl.u32 %v664, 7
      %v666 = vsub.s32 7, %v665
      %v667 = vrot.slane %v390, %v666
      %669 = vbcast.lane.b32.xlu0 %v667, 256
      %v670 = vpop.permute.xlu0 %669
      %v671 = vlaneseq
      %v672 = vshrl.u32 %v671, 7
      %v673 = vsub.s32 0, %v672
      %v674 = vrot.slane %v391, %v673
      %676 = vbcast.lane.b32.xlu0 %v674, 256
      %v677 = vpop.permute.xlu0 %676
      %v678 = vlaneseq
      %v679 = vshrl.u32 %v678, 7
      %v680 = vsub.s32 1, %v679
      %v681 = vrot.slane %v391, %v680
      %683 = vbcast.lane.b32.xlu0 %v681, 256
      %v684 = vpop.permute.xlu0 %683
      %v685 = vlaneseq
      %v686 = vshrl.u32 %v685, 7
      %v687 = vsub.s32 2, %v686
      %v688 = vrot.slane %v391, %v687
      %690 = vbcast.lane.b32.xlu0 %v688, 256
      %v691 = vpop.permute.xlu0 %690
      %v692 = vlaneseq
      %v693 = vshrl.u32 %v692, 7
      %v694 = vsub.s32 3, %v693
      %v695 = vrot.slane %v391, %v694
      %697 = vbcast.lane.b32.xlu0 %v695, 256
      %v698 = vpop.permute.xlu0 %697
      %v699 = vlaneseq
      %v700 = vshrl.u32 %v699, 7
      %v701 = vsub.s32 4, %v700
      %v702 = vrot.slane %v391, %v701
      %704 = vbcast.lane.b32.xlu0 %v702, 256
      %v705 = vpop.permute.xlu0 %704
      %v706 = vlaneseq
      %v707 = vshrl.u32 %v706, 7
      %v708 = vsub.s32 5, %v707
      %v709 = vrot.slane %v391, %v708
      %711 = vbcast.lane.b32.xlu0 %v709, 256
      %v712 = vpop.permute.xlu0 %711
      %v713 = vlaneseq
      %v714 = vshrl.u32 %v713, 7
      %v715 = vsub.s32 6, %v714
      %v716 = vrot.slane %v391, %v715
      %718 = vbcast.lane.b32.xlu0 %v716, 256
      %v719 = vpop.permute.xlu0 %718
      %v720 = vlaneseq
      %v721 = vshrl.u32 %v720, 7
      %v722 = vsub.s32 7, %v721
      %v723 = vrot.slane %v391, %v722
      %725 = vbcast.lane.b32.xlu0 %v723, 256
      %v726 = vpop.permute.xlu0 %725
      %v727 = vlaneseq
      %v728 = vshrl.u32 %v727, 7
      %v729 = vsub.s32 0, %v728
      %v730 = vrot.slane %v392, %v729
      %732 = vbcast.lane.b32.xlu0 %v730, 256
      %v733 = vpop.permute.xlu0 %732
      %v734 = vlaneseq
      %v735 = vshrl.u32 %v734, 7
      %v736 = vsub.s32 1, %v735
      %v737 = vrot.slane %v392, %v736
      %739 = vbcast.lane.b32.xlu0 %v737, 256
      %v740 = vpop.permute.xlu0 %739
      %v741 = vlaneseq
      %v742 = vshrl.u32 %v741, 7
      %v743 = vsub.s32 2, %v742
      %v744 = vrot.slane %v392, %v743
      %746 = vbcast.lane.b32.xlu0 %v744, 256
      %v747 = vpop.permute.xlu0 %746
      %v748 = vlaneseq
      %v749 = vshrl.u32 %v748, 7
      %v750 = vsub.s32 3, %v749
      %v751 = vrot.slane %v392, %v750
      %753 = vbcast.lane.b32.xlu0 %v751, 256
      %v754 = vpop.permute.xlu0 %753
      %v755 = vlaneseq
      %v756 = vshrl.u32 %v755, 7
      %v757 = vsub.s32 4, %v756
      %v758 = vrot.slane %v392, %v757
      %760 = vbcast.lane.b32.xlu0 %v758, 256
      %v761 = vpop.permute.xlu0 %760
      %v762 = vlaneseq
      %v763 = vshrl.u32 %v762, 7
      %v764 = vsub.s32 5, %v763
      %v765 = vrot.slane %v392, %v764
      %767 = vbcast.lane.b32.xlu0 %v765, 256
      %v768 = vpop.permute.xlu0 %767
      %v769 = vlaneseq
      %v770 = vshrl.u32 %v769, 7
      %v771 = vsub.s32 6, %v770
      %v772 = vrot.slane %v392, %v771
      %774 = vbcast.lane.b32.xlu0 %v772, 256
      %v775 = vpop.permute.xlu0 %774
      %v776 = vlaneseq
      %v777 = vshrl.u32 %v776, 7
      %v778 = vsub.s32 7, %v777
      %v779 = vrot.slane %v392, %v778
      %781 = vbcast.lane.b32.xlu0 %v779, 256
      %v782 = vpop.permute.xlu0 %781
      %v783 = vlaneseq
      %v784 = vshrl.u32 %v783, 7
      %v785 = vsub.s32 0, %v784
      %v786 = vrot.slane %v393, %v785
      %788 = vbcast.lane.b32.xlu0 %v786, 256
      %v789 = vpop.permute.xlu0 %788
      %v790 = vlaneseq
      %v791 = vshrl.u32 %v790, 7
      %v792 = vsub.s32 1, %v791
      %v793 = vrot.slane %v393, %v792
      %795 = vbcast.lane.b32.xlu0 %v793, 256
      %v796 = vpop.permute.xlu0 %795
      %v797 = vlaneseq
      %v798 = vshrl.u32 %v797, 7
      %v799 = vsub.s32 2, %v798
      %v800 = vrot.slane %v393, %v799
      %802 = vbcast.lane.b32.xlu0 %v800, 256
      %v803 = vpop.permute.xlu0 %802
      %v804 = vlaneseq
      %v805 = vshrl.u32 %v804, 7
      %v806 = vsub.s32 3, %v805
      %v807 = vrot.slane %v393, %v806
      %809 = vbcast.lane.b32.xlu0 %v807, 256
      %v810 = vpop.permute.xlu0 %809
      %v811 = vlaneseq
      %v812 = vshrl.u32 %v811, 7
      %v813 = vsub.s32 4, %v812
      %v814 = vrot.slane %v393, %v813
      %816 = vbcast.lane.b32.xlu0 %v814, 256
      %v817 = vpop.permute.xlu0 %816
      %v818 = vlaneseq
      %v819 = vshrl.u32 %v818, 7
      %v820 = vsub.s32 5, %v819
      %v821 = vrot.slane %v393, %v820
      %823 = vbcast.lane.b32.xlu0 %v821, 256
      %v824 = vpop.permute.xlu0 %823
      %v825 = vlaneseq
      %v826 = vshrl.u32 %v825, 7
      %v827 = vsub.s32 6, %v826
      %v828 = vrot.slane %v393, %v827
      %830 = vbcast.lane.b32.xlu0 %v828, 256
      %v831 = vpop.permute.xlu0 %830
      %v832 = vlaneseq
      %v833 = vshrl.u32 %v832, 7
      %v834 = vsub.s32 7, %v833
      %v835 = vrot.slane %v393, %v834
      %837 = vbcast.lane.b32.xlu0 %v835, 256
      %v838 = vpop.permute.xlu0 %837
      %v839 = vlaneseq
      %v840 = vshrl.u32 %v839, 7
      %v841 = vsub.s32 0, %v840
      %v842 = vrot.slane %v394, %v841
      %844 = vbcast.lane.b32.xlu0 %v842, 256
      %v845 = vpop.permute.xlu0 %844
      %v846 = vlaneseq
      %v847 = vshrl.u32 %v846, 7
      %v848 = vsub.s32 1, %v847
      %v849 = vrot.slane %v394, %v848
      %851 = vbcast.lane.b32.xlu0 %v849, 256
      %v852 = vpop.permute.xlu0 %851
      %v853 = vlaneseq
      %v854 = vshrl.u32 %v853, 7
      %v855 = vsub.s32 2, %v854
      %v856 = vrot.slane %v394, %v855
      %858 = vbcast.lane.b32.xlu0 %v856, 256
      %v859 = vpop.permute.xlu0 %858
      %v860 = vlaneseq
      %v861 = vshrl.u32 %v860, 7
      %v862 = vsub.s32 3, %v861
      %v863 = vrot.slane %v394, %v862
      %865 = vbcast.lane.b32.xlu0 %v863, 256
      %v866 = vpop.permute.xlu0 %865
      %v867 = vlaneseq
      %v868 = vshrl.u32 %v867, 7
      %v869 = vsub.s32 4, %v868
      %v870 = vrot.slane %v394, %v869
      %872 = vbcast.lane.b32.xlu0 %v870, 256
      %v873 = vpop.permute.xlu0 %872
      %v874 = vlaneseq
      %v875 = vshrl.u32 %v874, 7
      %v876 = vsub.s32 5, %v875
      %v877 = vrot.slane %v394, %v876
      %879 = vbcast.lane.b32.xlu0 %v877, 256
      %v880 = vpop.permute.xlu0 %879
      %v881 = vlaneseq
      %v882 = vshrl.u32 %v881, 7
      %v883 = vsub.s32 6, %v882
      %v884 = vrot.slane %v394, %v883
      %886 = vbcast.lane.b32.xlu0 %v884, 256
      %v887 = vpop.permute.xlu0 %886
      %v888 = vlaneseq
      %v889 = vshrl.u32 %v888, 7
      %v890 = vsub.s32 7, %v889
      %v891 = vrot.slane %v394, %v890
      %893 = vbcast.lane.b32.xlu0 %v891, 256
      %v894 = vpop.permute.xlu0 %893
      %v959 = vmul.f32 %v437, %v453
      %v960 = vmul.f32 %v437, %v460
      %v961 = vmul.f32 %v437, %v467
      %v962 = vmul.f32 %v437, %v474
      %v963 = vmul.f32 %v437, %v481
      %v964 = vmul.f32 %v437, %v488
      %v965 = vmul.f32 %v437, %v495
      %v966 = vmul.f32 %v437, %v502
      %v967 = vmul.f32 %v437, %v509
      %v968 = vmul.f32 %v437, %v516
      %v969 = vmul.f32 %v437, %v523
      %v970 = vmul.f32 %v437, %v530
      %v971 = vmul.f32 %v437, %v537
      %v972 = vmul.f32 %v437, %v544
      %v973 = vmul.f32 %v437, %v551
      %v974 = vmul.f32 %v437, %v558
      %v975 = vmul.f32 %v437, %v565
      %v976 = vmul.f32 %v437, %v572
      %v977 = vmul.f32 %v437, %v579
      %v978 = vmul.f32 %v437, %v586
      %v979 = vmul.f32 %v437, %v593
      %v980 = vmul.f32 %v437, %v600
      %v981 = vmul.f32 %v437, %v607
      %v982 = vmul.f32 %v437, %v614
      %v983 = vmul.f32 %v437, %v621
      %v984 = vmul.f32 %v437, %v628
      %v985 = vmul.f32 %v437, %v635
      %v986 = vmul.f32 %v437, %v642
      %v987 = vmul.f32 %v437, %v649
      %v988 = vmul.f32 %v437, %v656
      %v989 = vmul.f32 %v437, %v663
      %v990 = vmul.f32 %v437, %v670
      %v991 = vmul.f32 %v437, %v677
      %v992 = vmul.f32 %v437, %v684
      %v993 = vmul.f32 %v437, %v691
      %v994 = vmul.f32 %v437, %v698
      %v995 = vmul.f32 %v437, %v705
      %v996 = vmul.f32 %v437, %v712
      %v997 = vmul.f32 %v437, %v719
      %v998 = vmul.f32 %v437, %v726
      %v999 = vmul.f32 %v437, %v733
      %v1000 = vmul.f32 %v437, %v740
      %v1001 = vmul.f32 %v437, %v747
      %v1002 = vmul.f32 %v437, %v754
      %v1003 = vmul.f32 %v437, %v761
      %v1004 = vmul.f32 %v437, %v768
      %v1005 = vmul.f32 %v437, %v775
      %v1006 = vmul.f32 %v437, %v782
      %v1007 = vmul.f32 %v437, %v789
      %v1008 = vmul.f32 %v437, %v796
      %v1009 = vmul.f32 %v437, %v803
      %v1010 = vmul.f32 %v437, %v810
      %v1011 = vmul.f32 %v437, %v817
      %v1012 = vmul.f32 %v437, %v824
      %v1013 = vmul.f32 %v437, %v831
      %v1014 = vmul.f32 %v437, %v838
      %v1015 = vmul.f32 %v437, %v845
      %v1016 = vmul.f32 %v437, %v852
      %v1017 = vmul.f32 %v437, %v859
      %v1018 = vmul.f32 %v437, %v866
      %v1019 = vmul.f32 %v437, %v873
      %v1020 = vmul.f32 %v437, %v880
      %v1021 = vmul.f32 %v437, %v887
      %v1022 = vmul.f32 %v437, %v894
      %v1023 = vmul.f32 %v438, %v453
      %v1024 = vmul.f32 %v438, %v460
      %v1025 = vmul.f32 %v438, %v467
      %v1026 = vmul.f32 %v438, %v474
      %v1027 = vmul.f32 %v438, %v481
      %v1028 = vmul.f32 %v438, %v488
      %v1029 = vmul.f32 %v438, %v495
      %v1030 = vmul.f32 %v438, %v502
      %v1031 = vmul.f32 %v438, %v509
      %v1032 = vmul.f32 %v438, %v516
      %v1033 = vmul.f32 %v438, %v523
      %v1034 = vmul.f32 %v438, %v530
      %v1035 = vmul.f32 %v438, %v537
      %v1036 = vmul.f32 %v438, %v544
      %v1037 = vmul.f32 %v438, %v551
      %v1038 = vmul.f32 %v438, %v558
      %v1039 = vmul.f32 %v438, %v565
      %v1040 = vmul.f32 %v438, %v572
      %v1041 = vmul.f32 %v438, %v579
      %v1042 = vmul.f32 %v438, %v586
      %v1043 = vmul.f32 %v438, %v593
      %v1044 = vmul.f32 %v438, %v600
      %v1045 = vmul.f32 %v438, %v607
      %v1046 = vmul.f32 %v438, %v614
      %v1047 = vmul.f32 %v438, %v621
      %v1048 = vmul.f32 %v438, %v628
      %v1049 = vmul.f32 %v438, %v635
      %v1050 = vmul.f32 %v438, %v642
      %v1051 = vmul.f32 %v438, %v649
      %v1052 = vmul.f32 %v438, %v656
      %v1053 = vmul.f32 %v438, %v663
      %v1054 = vmul.f32 %v438, %v670
      %v1055 = vmul.f32 %v438, %v677
      %v1056 = vmul.f32 %v438, %v684
      %v1057 = vmul.f32 %v438, %v691
      %v1058 = vmul.f32 %v438, %v698
      %v1059 = vmul.f32 %v438, %v705
      %v1060 = vmul.f32 %v438, %v712
      %v1061 = vmul.f32 %v438, %v719
      %v1062 = vmul.f32 %v438, %v726
      %v1063 = vmul.f32 %v438, %v733
      %v1064 = vmul.f32 %v438, %v740
      %v1065 = vmul.f32 %v438, %v747
      %v1066 = vmul.f32 %v438, %v754
      %v1067 = vmul.f32 %v438, %v761
      %v1068 = vmul.f32 %v438, %v768
      %v1069 = vmul.f32 %v438, %v775
      %v1070 = vmul.f32 %v438, %v782
      %v1071 = vmul.f32 %v438, %v789
      %v1072 = vmul.f32 %v438, %v796
      %v1073 = vmul.f32 %v438, %v803
      %v1074 = vmul.f32 %v438, %v810
      %v1075 = vmul.f32 %v438, %v817
      %v1076 = vmul.f32 %v438, %v824
      %v1077 = vmul.f32 %v438, %v831
      %v1078 = vmul.f32 %v438, %v838
      %v1079 = vmul.f32 %v438, %v845
      %v1080 = vmul.f32 %v438, %v852
      %v1081 = vmul.f32 %v438, %v859
      %v1082 = vmul.f32 %v438, %v866
      %v1083 = vmul.f32 %v438, %v873
      %v1084 = vmul.f32 %v438, %v880
      %v1085 = vmul.f32 %v438, %v887
      %v1086 = vmul.f32 %v438, %v894
      %1215 = vset.pattern.permute.xlu0 0
      %1216 = vperm.xlu0 %1215, %v959
      %v1217 = vpop.permute.xlu0 %1216
      %1218 = vset.pattern.permute.xlu0 0
      %1219 = vperm.xlu0 %1218, %v960
      %v1220 = vpop.permute.xlu0 %1219
      %1221 = vset.pattern.permute.xlu0 0
      %1222 = vperm.xlu0 %1221, %v961
      %v1223 = vpop.permute.xlu0 %1222
      %1224 = vset.pattern.permute.xlu0 0
      %1225 = vperm.xlu0 %1224, %v962
      %v1226 = vpop.permute.xlu0 %1225
      %1227 = vset.pattern.permute.xlu0 0
      %1228 = vperm.xlu0 %1227, %v963
      %v1229 = vpop.permute.xlu0 %1228
      %1230 = vset.pattern.permute.xlu0 0
      %1231 = vperm.xlu0 %1230, %v964
      %v1232 = vpop.permute.xlu0 %1231
      %1233 = vset.pattern.permute.xlu0 0
      %1234 = vperm.xlu0 %1233, %v965
      %v1235 = vpop.permute.xlu0 %1234
      %1236 = vset.pattern.permute.xlu0 0
      %1237 = vperm.xlu0 %1236, %v966
      %v1238 = vpop.permute.xlu0 %1237
      %1239 = vset.pattern.permute.xlu0 0
      %1240 = vperm.xlu0 %1239, %v967
      %v1241 = vpop.permute.xlu0 %1240
      %1242 = vset.pattern.permute.xlu0 0
      %1243 = vperm.xlu0 %1242, %v968
      %v1244 = vpop.permute.xlu0 %1243
      %1245 = vset.pattern.permute.xlu0 0
      %1246 = vperm.xlu0 %1245, %v969
      %v1247 = vpop.permute.xlu0 %1246
      %1248 = vset.pattern.permute.xlu0 0
      %1249 = vperm.xlu0 %1248, %v970
      %v1250 = vpop.permute.xlu0 %1249
      %1251 = vset.pattern.permute.xlu0 0
      %1252 = vperm.xlu0 %1251, %v971
      %v1253 = vpop.permute.xlu0 %1252
      %1254 = vset.pattern.permute.xlu0 0
      %1255 = vperm.xlu0 %1254, %v972
      %v1256 = vpop.permute.xlu0 %1255
      %1257 = vset.pattern.permute.xlu0 0
      %1258 = vperm.xlu0 %1257, %v973
      %v1259 = vpop.permute.xlu0 %1258
      %1260 = vset.pattern.permute.xlu0 0
      %1261 = vperm.xlu0 %1260, %v974
      %v1262 = vpop.permute.xlu0 %1261
      %1263 = vset.pattern.permute.xlu0 0
      %1264 = vperm.xlu0 %1263, %v975
      %v1265 = vpop.permute.xlu0 %1264
      %1266 = vset.pattern.permute.xlu0 0
      %1267 = vperm.xlu0 %1266, %v976
      %v1268 = vpop.permute.xlu0 %1267
      %1269 = vset.pattern.permute.xlu0 0
      %1270 = vperm.xlu0 %1269, %v977
      %v1271 = vpop.permute.xlu0 %1270
      %1272 = vset.pattern.permute.xlu0 0
      %1273 = vperm.xlu0 %1272, %v978
      %v1274 = vpop.permute.xlu0 %1273
      %1275 = vset.pattern.permute.xlu0 0
      %1276 = vperm.xlu0 %1275, %v979
      %v1277 = vpop.permute.xlu0 %1276
      %1278 = vset.pattern.permute.xlu0 0
      %1279 = vperm.xlu0 %1278, %v980
      %v1280 = vpop.permute.xlu0 %1279
      %1281 = vset.pattern.permute.xlu0 0
      %1282 = vperm.xlu0 %1281, %v981
      %v1283 = vpop.permute.xlu0 %1282
      %1284 = vset.pattern.permute.xlu0 0
      %1285 = vperm.xlu0 %1284, %v982
      %v1286 = vpop.permute.xlu0 %1285
      %1287 = vset.pattern.permute.xlu0 0
      %1288 = vperm.xlu0 %1287, %v983
      %v1289 = vpop.permute.xlu0 %1288
      %1290 = vset.pattern.permute.xlu0 0
      %1291 = vperm.xlu0 %1290, %v984
      %v1292 = vpop.permute.xlu0 %1291
      %1293 = vset.pattern.permute.xlu0 0
      %1294 = vperm.xlu0 %1293, %v985
      %v1295 = vpop.permute.xlu0 %1294
      %1296 = vset.pattern.permute.xlu0 0
      %1297 = vperm.xlu0 %1296, %v986
      %v1298 = vpop.permute.xlu0 %1297
      %1299 = vset.pattern.permute.xlu0 0
      %1300 = vperm.xlu0 %1299, %v987
      %v1301 = vpop.permute.xlu0 %1300
      %1302 = vset.pattern.permute.xlu0 0
      %1303 = vperm.xlu0 %1302, %v988
      %v1304 = vpop.permute.xlu0 %1303
      %1305 = vset.pattern.permute.xlu0 0
      %1306 = vperm.xlu0 %1305, %v989
      %v1307 = vpop.permute.xlu0 %1306
      %1308 = vset.pattern.permute.xlu0 0
      %1309 = vperm.xlu0 %1308, %v990
      %v1310 = vpop.permute.xlu0 %1309
      %1311 = vset.pattern.permute.xlu0 0
      %1312 = vperm.xlu0 %1311, %v991
      %v1313 = vpop.permute.xlu0 %1312
      %1314 = vset.pattern.permute.xlu0 0
      %1315 = vperm.xlu0 %1314, %v992
      %v1316 = vpop.permute.xlu0 %1315
      %1317 = vset.pattern.permute.xlu0 0
      %1318 = vperm.xlu0 %1317, %v993
      %v1319 = vpop.permute.xlu0 %1318
      %1320 = vset.pattern.permute.xlu0 0
      %1321 = vperm.xlu0 %1320, %v994
      %v1322 = vpop.permute.xlu0 %1321
      %1323 = vset.pattern.permute.xlu0 0
      %1324 = vperm.xlu0 %1323, %v995
      %v1325 = vpop.permute.xlu0 %1324
      %1326 = vset.pattern.permute.xlu0 0
      %1327 = vperm.xlu0 %1326, %v996
      %v1328 = vpop.permute.xlu0 %1327
      %1329 = vset.pattern.permute.xlu0 0
      %1330 = vperm.xlu0 %1329, %v997
      %v1331 = vpop.permute.xlu0 %1330
      %1332 = vset.pattern.permute.xlu0 0
      %1333 = vperm.xlu0 %1332, %v998
      %v1334 = vpop.permute.xlu0 %1333
      %1335 = vset.pattern.permute.xlu0 0
      %1336 = vperm.xlu0 %1335, %v999
      %v1337 = vpop.permute.xlu0 %1336
      %1338 = vset.pattern.permute.xlu0 0
      %1339 = vperm.xlu0 %1338, %v1000
      %v1340 = vpop.permute.xlu0 %1339
      %1341 = vset.pattern.permute.xlu0 0
      %1342 = vperm.xlu0 %1341, %v1001
      %v1343 = vpop.permute.xlu0 %1342
      %1344 = vset.pattern.permute.xlu0 0
      %1345 = vperm.xlu0 %1344, %v1002
      %v1346 = vpop.permute.xlu0 %1345
      %1347 = vset.pattern.permute.xlu0 0
      %1348 = vperm.xlu0 %1347, %v1003
      %v1349 = vpop.permute.xlu0 %1348
      %1350 = vset.pattern.permute.xlu0 0
      %1351 = vperm.xlu0 %1350, %v1004
      %v1352 = vpop.permute.xlu0 %1351
      %1353 = vset.pattern.permute.xlu0 0
      %1354 = vperm.xlu0 %1353, %v1005
      %v1355 = vpop.permute.xlu0 %1354
      %1356 = vset.pattern.permute.xlu0 0
      %1357 = vperm.xlu0 %1356, %v1006
      %v1358 = vpop.permute.xlu0 %1357
      %1359 = vset.pattern.permute.xlu0 0
      %1360 = vperm.xlu0 %1359, %v1007
      %v1361 = vpop.permute.xlu0 %1360
      %1362 = vset.pattern.permute.xlu0 0
      %1363 = vperm.xlu0 %1362, %v1008
      %v1364 = vpop.permute.xlu0 %1363
      %1365 = vset.pattern.permute.xlu0 0
      %1366 = vperm.xlu0 %1365, %v1009
      %v1367 = vpop.permute.xlu0 %1366
      %1368 = vset.pattern.permute.xlu0 0
      %1369 = vperm.xlu0 %1368, %v1010
      %v1370 = vpop.permute.xlu0 %1369
      %1371 = vset.pattern.permute.xlu0 0
      %1372 = vperm.xlu0 %1371, %v1011
      %v1373 = vpop.permute.xlu0 %1372
      %1374 = vset.pattern.permute.xlu0 0
      %1375 = vperm.xlu0 %1374, %v1012
      %v1376 = vpop.permute.xlu0 %1375
      %1377 = vset.pattern.permute.xlu0 0
      %1378 = vperm.xlu0 %1377, %v1013
      %v1379 = vpop.permute.xlu0 %1378
      %1380 = vset.pattern.permute.xlu0 0
      %1381 = vperm.xlu0 %1380, %v1014
      %v1382 = vpop.permute.xlu0 %1381
      %1383 = vset.pattern.permute.xlu0 0
      %1384 = vperm.xlu0 %1383, %v1015
      %v1385 = vpop.permute.xlu0 %1384
      %1386 = vset.pattern.permute.xlu0 0
      %1387 = vperm.xlu0 %1386, %v1016
      %v1388 = vpop.permute.xlu0 %1387
      %1389 = vset.pattern.permute.xlu0 0
      %1390 = vperm.xlu0 %1389, %v1017
      %v1391 = vpop.permute.xlu0 %1390
      %1392 = vset.pattern.permute.xlu0 0
      %1393 = vperm.xlu0 %1392, %v1018
      %v1394 = vpop.permute.xlu0 %1393
      %1395 = vset.pattern.permute.xlu0 0
      %1396 = vperm.xlu0 %1395, %v1019
      %v1397 = vpop.permute.xlu0 %1396
      %1398 = vset.pattern.permute.xlu0 0
      %1399 = vperm.xlu0 %1398, %v1020
      %v1400 = vpop.permute.xlu0 %1399
      %1401 = vset.pattern.permute.xlu0 0
      %1402 = vperm.xlu0 %1401, %v1021
      %v1403 = vpop.permute.xlu0 %1402
      %1404 = vset.pattern.permute.xlu0 0
      %1405 = vperm.xlu0 %1404, %v1022
      %v1406 = vpop.permute.xlu0 %1405
      %1407 = vset.pattern.permute.xlu0 0
      %1408 = vperm.xlu0 %1407, %v1023
      %v1409 = vpop.permute.xlu0 %1408
      %1410 = vset.pattern.permute.xlu0 0
      %1411 = vperm.xlu0 %1410, %v1024
      %v1412 = vpop.permute.xlu0 %1411
      %1413 = vset.pattern.permute.xlu0 0
      %1414 = vperm.xlu0 %1413, %v1025
      %v1415 = vpop.permute.xlu0 %1414
      %1416 = vset.pattern.permute.xlu0 0
      %1417 = vperm.xlu0 %1416, %v1026
      %v1418 = vpop.permute.xlu0 %1417
      %1419 = vset.pattern.permute.xlu0 0
      %1420 = vperm.xlu0 %1419, %v1027
      %v1421 = vpop.permute.xlu0 %1420
      %1422 = vset.pattern.permute.xlu0 0
      %1423 = vperm.xlu0 %1422, %v1028
      %v1424 = vpop.permute.xlu0 %1423
      %1425 = vset.pattern.permute.xlu0 0
      %1426 = vperm.xlu0 %1425, %v1029
      %v1427 = vpop.permute.xlu0 %1426
      %1428 = vset.pattern.permute.xlu0 0
      %1429 = vperm.xlu0 %1428, %v1030
      %v1430 = vpop.permute.xlu0 %1429
      %1431 = vset.pattern.permute.xlu0 0
      %1432 = vperm.xlu0 %1431, %v1031
      %v1433 = vpop.permute.xlu0 %1432
      %1434 = vset.pattern.permute.xlu0 0
      %1435 = vperm.xlu0 %1434, %v1032
      %v1436 = vpop.permute.xlu0 %1435
      %1437 = vset.pattern.permute.xlu0 0
      %1438 = vperm.xlu0 %1437, %v1033
      %v1439 = vpop.permute.xlu0 %1438
      %1440 = vset.pattern.permute.xlu0 0
      %1441 = vperm.xlu0 %1440, %v1034
      %v1442 = vpop.permute.xlu0 %1441
      %1443 = vset.pattern.permute.xlu0 0
      %1444 = vperm.xlu0 %1443, %v1035
      %v1445 = vpop.permute.xlu0 %1444
      %1446 = vset.pattern.permute.xlu0 0
      %1447 = vperm.xlu0 %1446, %v1036
      %v1448 = vpop.permute.xlu0 %1447
      %1449 = vset.pattern.permute.xlu0 0
      %1450 = vperm.xlu0 %1449, %v1037
      %v1451 = vpop.permute.xlu0 %1450
      %1452 = vset.pattern.permute.xlu0 0
      %1453 = vperm.xlu0 %1452, %v1038
      %v1454 = vpop.permute.xlu0 %1453
      %1455 = vset.pattern.permute.xlu0 0
      %1456 = vperm.xlu0 %1455, %v1039
      %v1457 = vpop.permute.xlu0 %1456
      %1458 = vset.pattern.permute.xlu0 0
      %1459 = vperm.xlu0 %1458, %v1040
      %v1460 = vpop.permute.xlu0 %1459
      %1461 = vset.pattern.permute.xlu0 0
      %1462 = vperm.xlu0 %1461, %v1041
      %v1463 = vpop.permute.xlu0 %1462
      %1464 = vset.pattern.permute.xlu0 0
      %1465 = vperm.xlu0 %1464, %v1042
      %v1466 = vpop.permute.xlu0 %1465
      %1467 = vset.pattern.permute.xlu0 0
      %1468 = vperm.xlu0 %1467, %v1043
      %v1469 = vpop.permute.xlu0 %1468
      %1470 = vset.pattern.permute.xlu0 0
      %1471 = vperm.xlu0 %1470, %v1044
      %v1472 = vpop.permute.xlu0 %1471
      %1473 = vset.pattern.permute.xlu0 0
      %1474 = vperm.xlu0 %1473, %v1045
      %v1475 = vpop.permute.xlu0 %1474
      %1476 = vset.pattern.permute.xlu0 0
      %1477 = vperm.xlu0 %1476, %v1046
      %v1478 = vpop.permute.xlu0 %1477
      %1479 = vset.pattern.permute.xlu0 0
      %1480 = vperm.xlu0 %1479, %v1047
      %v1481 = vpop.permute.xlu0 %1480
      %1482 = vset.pattern.permute.xlu0 0
      %1483 = vperm.xlu0 %1482, %v1048
      %v1484 = vpop.permute.xlu0 %1483
      %1485 = vset.pattern.permute.xlu0 0
      %1486 = vperm.xlu0 %1485, %v1049
      %v1487 = vpop.permute.xlu0 %1486
      %1488 = vset.pattern.permute.xlu0 0
      %1489 = vperm.xlu0 %1488, %v1050
      %v1490 = vpop.permute.xlu0 %1489
      %1491 = vset.pattern.permute.xlu0 0
      %1492 = vperm.xlu0 %1491, %v1051
      %v1493 = vpop.permute.xlu0 %1492
      %1494 = vset.pattern.permute.xlu0 0
      %1495 = vperm.xlu0 %1494, %v1052
      %v1496 = vpop.permute.xlu0 %1495
      %1497 = vset.pattern.permute.xlu0 0
      %1498 = vperm.xlu0 %1497, %v1053
      %v1499 = vpop.permute.xlu0 %1498
      %1500 = vset.pattern.permute.xlu0 0
      %1501 = vperm.xlu0 %1500, %v1054
      %v1502 = vpop.permute.xlu0 %1501
      %1503 = vset.pattern.permute.xlu0 0
      %1504 = vperm.xlu0 %1503, %v1055
      %v1505 = vpop.permute.xlu0 %1504
      %1506 = vset.pattern.permute.xlu0 0
      %1507 = vperm.xlu0 %1506, %v1056
      %v1508 = vpop.permute.xlu0 %1507
      %1509 = vset.pattern.permute.xlu0 0
      %1510 = vperm.xlu0 %1509, %v1057
      %v1511 = vpop.permute.xlu0 %1510
      %1512 = vset.pattern.permute.xlu0 0
      %1513 = vperm.xlu0 %1512, %v1058
      %v1514 = vpop.permute.xlu0 %1513
      %1515 = vset.pattern.permute.xlu0 0
      %1516 = vperm.xlu0 %1515, %v1059
      %v1517 = vpop.permute.xlu0 %1516
      %1518 = vset.pattern.permute.xlu0 0
      %1519 = vperm.xlu0 %1518, %v1060
      %v1520 = vpop.permute.xlu0 %1519
      %1521 = vset.pattern.permute.xlu0 0
      %1522 = vperm.xlu0 %1521, %v1061
      %v1523 = vpop.permute.xlu0 %1522
      %1524 = vset.pattern.permute.xlu0 0
      %1525 = vperm.xlu0 %1524, %v1062
      %v1526 = vpop.permute.xlu0 %1525
      %1527 = vset.pattern.permute.xlu0 0
      %1528 = vperm.xlu0 %1527, %v1063
      %v1529 = vpop.permute.xlu0 %1528
      %1530 = vset.pattern.permute.xlu0 0
      %1531 = vperm.xlu0 %1530, %v1064
      %v1532 = vpop.permute.xlu0 %1531
      %1533 = vset.pattern.permute.xlu0 0
      %1534 = vperm.xlu0 %1533, %v1065
      %v1535 = vpop.permute.xlu0 %1534
      %1536 = vset.pattern.permute.xlu0 0
      %1537 = vperm.xlu0 %1536, %v1066
      %v1538 = vpop.permute.xlu0 %1537
      %1539 = vset.pattern.permute.xlu0 0
      %1540 = vperm.xlu0 %1539, %v1067
      %v1541 = vpop.permute.xlu0 %1540
      %1542 = vset.pattern.permute.xlu0 0
      %1543 = vperm.xlu0 %1542, %v1068
      %v1544 = vpop.permute.xlu0 %1543
      %1545 = vset.pattern.permute.xlu0 0
      %1546 = vperm.xlu0 %1545, %v1069
      %v1547 = vpop.permute.xlu0 %1546
      %1548 = vset.pattern.permute.xlu0 0
      %1549 = vperm.xlu0 %1548, %v1070
      %v1550 = vpop.permute.xlu0 %1549
      %1551 = vset.pattern.permute.xlu0 0
      %1552 = vperm.xlu0 %1551, %v1071
      %v1553 = vpop.permute.xlu0 %1552
      %1554 = vset.pattern.permute.xlu0 0
      %1555 = vperm.xlu0 %1554, %v1072
      %v1556 = vpop.permute.xlu0 %1555
      %1557 = vset.pattern.permute.xlu0 0
      %1558 = vperm.xlu0 %1557, %v1073
      %v1559 = vpop.permute.xlu0 %1558
      %1560 = vset.pattern.permute.xlu0 0
      %1561 = vperm.xlu0 %1560, %v1074
      %v1562 = vpop.permute.xlu0 %1561
      %1563 = vset.pattern.permute.xlu0 0
      %1564 = vperm.xlu0 %1563, %v1075
      %v1565 = vpop.permute.xlu0 %1564
      %1566 = vset.pattern.permute.xlu0 0
      %1567 = vperm.xlu0 %1566, %v1076
      %v1568 = vpop.permute.xlu0 %1567
      %1569 = vset.pattern.permute.xlu0 0
      %1570 = vperm.xlu0 %1569, %v1077
      %v1571 = vpop.permute.xlu0 %1570
      %1572 = vset.pattern.permute.xlu0 0
      %1573 = vperm.xlu0 %1572, %v1078
      %v1574 = vpop.permute.xlu0 %1573
      %1575 = vset.pattern.permute.xlu0 0
      %1576 = vperm.xlu0 %1575, %v1079
      %v1577 = vpop.permute.xlu0 %1576
      %1578 = vset.pattern.permute.xlu0 0
      %1579 = vperm.xlu0 %1578, %v1080
      %v1580 = vpop.permute.xlu0 %1579
      %1581 = vset.pattern.permute.xlu0 0
      %1582 = vperm.xlu0 %1581, %v1081
      %v1583 = vpop.permute.xlu0 %1582
      %1584 = vset.pattern.permute.xlu0 0
      %1585 = vperm.xlu0 %1584, %v1082
      %v1586 = vpop.permute.xlu0 %1585
      %1587 = vset.pattern.permute.xlu0 0
      %1588 = vperm.xlu0 %1587, %v1083
      %v1589 = vpop.permute.xlu0 %1588
      %1590 = vset.pattern.permute.xlu0 0
      %1591 = vperm.xlu0 %1590, %v1084
      %v1592 = vpop.permute.xlu0 %1591
      %1593 = vset.pattern.permute.xlu0 0
      %1594 = vperm.xlu0 %1593, %v1085
      %v1595 = vpop.permute.xlu0 %1594
      %1596 = vset.pattern.permute.xlu0 0
      %1597 = vperm.xlu0 %1596, %v1086
      %v1598 = vpop.permute.xlu0 %1597
      %v1599 = vlaneseq
      %v1600 = vshrl.u32 %v1599, 7
      %v1601 = vsub.s32 %v134, %v1600
      %v1602 = vrot.slane %v1217, %v1601
      %v1603 = vlaneseq
      %v1604 = vshrl.u32 %v1603, 7
      %v1605 = vsub.s32 %v134, %v1604
      %v1606 = vrot.slane %v1220, %v1605
      %v1607 = vlaneseq
      %v1608 = vshrl.u32 %v1607, 7
      %v1609 = vsub.s32 %v134, %v1608
      %v1610 = vrot.slane %v1223, %v1609
      %v1611 = vlaneseq
      %v1612 = vshrl.u32 %v1611, 7
      %v1613 = vsub.s32 %v134, %v1612
      %v1614 = vrot.slane %v1226, %v1613
      %v1615 = vlaneseq
      %v1616 = vshrl.u32 %v1615, 7
      %v1617 = vsub.s32 %v134, %v1616
      %v1618 = vrot.slane %v1229, %v1617
      %v1619 = vlaneseq
      %v1620 = vshrl.u32 %v1619, 7
      %v1621 = vsub.s32 %v134, %v1620
      %v1622 = vrot.slane %v1232, %v1621
      %v1623 = vlaneseq
      %v1624 = vshrl.u32 %v1623, 7
      %v1625 = vsub.s32 %v134, %v1624
      %v1626 = vrot.slane %v1235, %v1625
      %v1627 = vlaneseq
      %v1628 = vshrl.u32 %v1627, 7
      %v1629 = vsub.s32 %v134, %v1628
      %v1630 = vrot.slane %v1238, %v1629
      %v1631 = vlaneseq
      %v1632 = vshrl.u32 %v1631, 7
      %v1633 = vsub.s32 %v134, %v1632
      %v1634 = vrot.slane %v1241, %v1633
      %v1635 = vlaneseq
      %v1636 = vshrl.u32 %v1635, 7
      %v1637 = vsub.s32 %v134, %v1636
      %v1638 = vrot.slane %v1244, %v1637
      %v1639 = vlaneseq
      %v1640 = vshrl.u32 %v1639, 7
      %v1641 = vsub.s32 %v134, %v1640
      %v1642 = vrot.slane %v1247, %v1641
      %v1643 = vlaneseq
      %v1644 = vshrl.u32 %v1643, 7
      %v1645 = vsub.s32 %v134, %v1644
      %v1646 = vrot.slane %v1250, %v1645
      %v1647 = vlaneseq
      %v1648 = vshrl.u32 %v1647, 7
      %v1649 = vsub.s32 %v134, %v1648
      %v1650 = vrot.slane %v1253, %v1649
      %v1651 = vlaneseq
      %v1652 = vshrl.u32 %v1651, 7
      %v1653 = vsub.s32 %v134, %v1652
      %v1654 = vrot.slane %v1256, %v1653
      %v1655 = vlaneseq
      %v1656 = vshrl.u32 %v1655, 7
      %v1657 = vsub.s32 %v134, %v1656
      %v1658 = vrot.slane %v1259, %v1657
      %v1659 = vlaneseq
      %v1660 = vshrl.u32 %v1659, 7
      %v1661 = vsub.s32 %v134, %v1660
      %v1662 = vrot.slane %v1262, %v1661
      %v1663 = vlaneseq
      %v1664 = vshrl.u32 %v1663, 7
      %v1665 = vsub.s32 %v134, %v1664
      %v1666 = vrot.slane %v1265, %v1665
      %v1667 = vlaneseq
      %v1668 = vshrl.u32 %v1667, 7
      %v1669 = vsub.s32 %v134, %v1668
      %v1670 = vrot.slane %v1268, %v1669
      %v1671 = vlaneseq
      %v1672 = vshrl.u32 %v1671, 7
      %v1673 = vsub.s32 %v134, %v1672
      %v1674 = vrot.slane %v1271, %v1673
      %v1675 = vlaneseq
      %v1676 = vshrl.u32 %v1675, 7
      %v1677 = vsub.s32 %v134, %v1676
      %v1678 = vrot.slane %v1274, %v1677
      %v1679 = vlaneseq
      %v1680 = vshrl.u32 %v1679, 7
      %v1681 = vsub.s32 %v134, %v1680
      %v1682 = vrot.slane %v1277, %v1681
      %v1683 = vlaneseq
      %v1684 = vshrl.u32 %v1683, 7
      %v1685 = vsub.s32 %v134, %v1684
      %v1686 = vrot.slane %v1280, %v1685
      %v1687 = vlaneseq
      %v1688 = vshrl.u32 %v1687, 7
      %v1689 = vsub.s32 %v134, %v1688
      %v1690 = vrot.slane %v1283, %v1689
      %v1691 = vlaneseq
      %v1692 = vshrl.u32 %v1691, 7
      %v1693 = vsub.s32 %v134, %v1692
      %v1694 = vrot.slane %v1286, %v1693
      %v1695 = vlaneseq
      %v1696 = vshrl.u32 %v1695, 7
      %v1697 = vsub.s32 %v134, %v1696
      %v1698 = vrot.slane %v1289, %v1697
      %v1699 = vlaneseq
      %v1700 = vshrl.u32 %v1699, 7
      %v1701 = vsub.s32 %v134, %v1700
      %v1702 = vrot.slane %v1292, %v1701
      %v1703 = vlaneseq
      %v1704 = vshrl.u32 %v1703, 7
      %v1705 = vsub.s32 %v134, %v1704
      %v1706 = vrot.slane %v1295, %v1705
      %v1707 = vlaneseq
      %v1708 = vshrl.u32 %v1707, 7
      %v1709 = vsub.s32 %v134, %v1708
      %v1710 = vrot.slane %v1298, %v1709
      %v1711 = vlaneseq
      %v1712 = vshrl.u32 %v1711, 7
      %v1713 = vsub.s32 %v134, %v1712
      %v1714 = vrot.slane %v1301, %v1713
      %v1715 = vlaneseq
      %v1716 = vshrl.u32 %v1715, 7
      %v1717 = vsub.s32 %v134, %v1716
      %v1718 = vrot.slane %v1304, %v1717
      %v1719 = vlaneseq
      %v1720 = vshrl.u32 %v1719, 7
      %v1721 = vsub.s32 %v134, %v1720
      %v1722 = vrot.slane %v1307, %v1721
      %v1723 = vlaneseq
      %v1724 = vshrl.u32 %v1723, 7
      %v1725 = vsub.s32 %v134, %v1724
      %v1726 = vrot.slane %v1310, %v1725
      %v1727 = vlaneseq
      %v1728 = vshrl.u32 %v1727, 7
      %v1729 = vsub.s32 %v134, %v1728
      %v1730 = vrot.slane %v1313, %v1729
      %v1731 = vlaneseq
      %v1732 = vshrl.u32 %v1731, 7
      %v1733 = vsub.s32 %v134, %v1732
      %v1734 = vrot.slane %v1316, %v1733
      %v1735 = vlaneseq
      %v1736 = vshrl.u32 %v1735, 7
      %v1737 = vsub.s32 %v134, %v1736
      %v1738 = vrot.slane %v1319, %v1737
      %v1739 = vlaneseq
      %v1740 = vshrl.u32 %v1739, 7
      %v1741 = vsub.s32 %v134, %v1740
      %v1742 = vrot.slane %v1322, %v1741
      %v1743 = vlaneseq
      %v1744 = vshrl.u32 %v1743, 7
      %v1745 = vsub.s32 %v134, %v1744
      %v1746 = vrot.slane %v1325, %v1745
      %v1747 = vlaneseq
      %v1748 = vshrl.u32 %v1747, 7
      %v1749 = vsub.s32 %v134, %v1748
      %v1750 = vrot.slane %v1328, %v1749
      %v1751 = vlaneseq
      %v1752 = vshrl.u32 %v1751, 7
      %v1753 = vsub.s32 %v134, %v1752
      %v1754 = vrot.slane %v1331, %v1753
      %v1755 = vlaneseq
      %v1756 = vshrl.u32 %v1755, 7
      %v1757 = vsub.s32 %v134, %v1756
      %v1758 = vrot.slane %v1334, %v1757
      %v1759 = vlaneseq
      %v1760 = vshrl.u32 %v1759, 7
      %v1761 = vsub.s32 %v134, %v1760
      %v1762 = vrot.slane %v1337, %v1761
      %v1763 = vlaneseq
      %v1764 = vshrl.u32 %v1763, 7
      %v1765 = vsub.s32 %v134, %v1764
      %v1766 = vrot.slane %v1340, %v1765
      %v1767 = vlaneseq
      %v1768 = vshrl.u32 %v1767, 7
      %v1769 = vsub.s32 %v134, %v1768
      %v1770 = vrot.slane %v1343, %v1769
      %v1771 = vlaneseq
      %v1772 = vshrl.u32 %v1771, 7
      %v1773 = vsub.s32 %v134, %v1772
      %v1774 = vrot.slane %v1346, %v1773
      %v1775 = vlaneseq
      %v1776 = vshrl.u32 %v1775, 7
      %v1777 = vsub.s32 %v134, %v1776
      %v1778 = vrot.slane %v1349, %v1777
      %v1779 = vlaneseq
      %v1780 = vshrl.u32 %v1779, 7
      %v1781 = vsub.s32 %v134, %v1780
      %v1782 = vrot.slane %v1352, %v1781
      %v1783 = vlaneseq
      %v1784 = vshrl.u32 %v1783, 7
      %v1785 = vsub.s32 %v134, %v1784
      %v1786 = vrot.slane %v1355, %v1785
      %v1787 = vlaneseq
      %v1788 = vshrl.u32 %v1787, 7
      %v1789 = vsub.s32 %v134, %v1788
      %v1790 = vrot.slane %v1358, %v1789
      %v1791 = vlaneseq
      %v1792 = vshrl.u32 %v1791, 7
      %v1793 = vsub.s32 %v134, %v1792
      %v1794 = vrot.slane %v1361, %v1793
      %v1795 = vlaneseq
      %v1796 = vshrl.u32 %v1795, 7
      %v1797 = vsub.s32 %v134, %v1796
      %v1798 = vrot.slane %v1364, %v1797
      %v1799 = vlaneseq
      %v1800 = vshrl.u32 %v1799, 7
      %v1801 = vsub.s32 %v134, %v1800
      %v1802 = vrot.slane %v1367, %v1801
      %v1803 = vlaneseq
      %v1804 = vshrl.u32 %v1803, 7
      %v1805 = vsub.s32 %v134, %v1804
      %v1806 = vrot.slane %v1370, %v1805
      %v1807 = vlaneseq
      %v1808 = vshrl.u32 %v1807, 7
      %v1809 = vsub.s32 %v134, %v1808
      %v1810 = vrot.slane %v1373, %v1809
      %v1811 = vlaneseq
      %v1812 = vshrl.u32 %v1811, 7
      %v1813 = vsub.s32 %v134, %v1812
      %v1814 = vrot.slane %v1376, %v1813
      %v1815 = vlaneseq
      %v1816 = vshrl.u32 %v1815, 7
      %v1817 = vsub.s32 %v134, %v1816
      %v1818 = vrot.slane %v1379, %v1817
      %v1819 = vlaneseq
      %v1820 = vshrl.u32 %v1819, 7
      %v1821 = vsub.s32 %v134, %v1820
      %v1822 = vrot.slane %v1382, %v1821
      %v1823 = vlaneseq
      %v1824 = vshrl.u32 %v1823, 7
      %v1825 = vsub.s32 %v134, %v1824
      %v1826 = vrot.slane %v1385, %v1825
      %v1827 = vlaneseq
      %v1828 = vshrl.u32 %v1827, 7
      %v1829 = vsub.s32 %v134, %v1828
      %v1830 = vrot.slane %v1388, %v1829
      %v1831 = vlaneseq
      %v1832 = vshrl.u32 %v1831, 7
      %v1833 = vsub.s32 %v134, %v1832
      %v1834 = vrot.slane %v1391, %v1833
      %v1835 = vlaneseq
      %v1836 = vshrl.u32 %v1835, 7
      %v1837 = vsub.s32 %v134, %v1836
      %v1838 = vrot.slane %v1394, %v1837
      %v1839 = vlaneseq
      %v1840 = vshrl.u32 %v1839, 7
      %v1841 = vsub.s32 %v134, %v1840
      %v1842 = vrot.slane %v1397, %v1841
      %v1843 = vlaneseq
      %v1844 = vshrl.u32 %v1843, 7
      %v1845 = vsub.s32 %v134, %v1844
      %v1846 = vrot.slane %v1400, %v1845
      %v1847 = vlaneseq
      %v1848 = vshrl.u32 %v1847, 7
      %v1849 = vsub.s32 %v134, %v1848
      %v1850 = vrot.slane %v1403, %v1849
      %v1851 = vlaneseq
      %v1852 = vshrl.u32 %v1851, 7
      %v1853 = vsub.s32 %v134, %v1852
      %v1854 = vrot.slane %v1406, %v1853
      %v1855 = vlaneseq
      %v1856 = vshrl.u32 %v1855, 7
      %v1857 = vsub.s32 %v134, %v1856
      %v1858 = vrot.slane %v1409, %v1857
      %v1859 = vlaneseq
      %v1860 = vshrl.u32 %v1859, 7
      %v1861 = vsub.s32 %v134, %v1860
      %v1862 = vrot.slane %v1412, %v1861
      %v1863 = vlaneseq
      %v1864 = vshrl.u32 %v1863, 7
      %v1865 = vsub.s32 %v134, %v1864
      %v1866 = vrot.slane %v1415, %v1865
      %v1867 = vlaneseq
      %v1868 = vshrl.u32 %v1867, 7
      %v1869 = vsub.s32 %v134, %v1868
      %v1870 = vrot.slane %v1418, %v1869
      %v1871 = vlaneseq
      %v1872 = vshrl.u32 %v1871, 7
      %v1873 = vsub.s32 %v134, %v1872
      %v1874 = vrot.slane %v1421, %v1873
      %v1875 = vlaneseq
      %v1876 = vshrl.u32 %v1875, 7
      %v1877 = vsub.s32 %v134, %v1876
      %v1878 = vrot.slane %v1424, %v1877
      %v1879 = vlaneseq
      %v1880 = vshrl.u32 %v1879, 7
      %v1881 = vsub.s32 %v134, %v1880
      %v1882 = vrot.slane %v1427, %v1881
      %v1883 = vlaneseq
      %v1884 = vshrl.u32 %v1883, 7
      %v1885 = vsub.s32 %v134, %v1884
      %v1886 = vrot.slane %v1430, %v1885
      %v1887 = vlaneseq
      %v1888 = vshrl.u32 %v1887, 7
      %v1889 = vsub.s32 %v134, %v1888
      %v1890 = vrot.slane %v1433, %v1889
      %v1891 = vlaneseq
      %v1892 = vshrl.u32 %v1891, 7
      %v1893 = vsub.s32 %v134, %v1892
      %v1894 = vrot.slane %v1436, %v1893
      %v1895 = vlaneseq
      %v1896 = vshrl.u32 %v1895, 7
      %v1897 = vsub.s32 %v134, %v1896
      %v1898 = vrot.slane %v1439, %v1897
      %v1899 = vlaneseq
      %v1900 = vshrl.u32 %v1899, 7
      %v1901 = vsub.s32 %v134, %v1900
      %v1902 = vrot.slane %v1442, %v1901
      %v1903 = vlaneseq
      %v1904 = vshrl.u32 %v1903, 7
      %v1905 = vsub.s32 %v134, %v1904
      %v1906 = vrot.slane %v1445, %v1905
      %v1907 = vlaneseq
      %v1908 = vshrl.u32 %v1907, 7
      %v1909 = vsub.s32 %v134, %v1908
      %v1910 = vrot.slane %v1448, %v1909
      %v1911 = vlaneseq
      %v1912 = vshrl.u32 %v1911, 7
      %v1913 = vsub.s32 %v134, %v1912
      %v1914 = vrot.slane %v1451, %v1913
      %v1915 = vlaneseq
      %v1916 = vshrl.u32 %v1915, 7
      %v1917 = vsub.s32 %v134, %v1916
      %v1918 = vrot.slane %v1454, %v1917
      %v1919 = vlaneseq
      %v1920 = vshrl.u32 %v1919, 7
      %v1921 = vsub.s32 %v134, %v1920
      %v1922 = vrot.slane %v1457, %v1921
      %v1923 = vlaneseq
      %v1924 = vshrl.u32 %v1923, 7
      %v1925 = vsub.s32 %v134, %v1924
      %v1926 = vrot.slane %v1460, %v1925
      %v1927 = vlaneseq
      %v1928 = vshrl.u32 %v1927, 7
      %v1929 = vsub.s32 %v134, %v1928
      %v1930 = vrot.slane %v1463, %v1929
      %v1931 = vlaneseq
      %v1932 = vshrl.u32 %v1931, 7
      %v1933 = vsub.s32 %v134, %v1932
      %v1934 = vrot.slane %v1466, %v1933
      %v1935 = vlaneseq
      %v1936 = vshrl.u32 %v1935, 7
      %v1937 = vsub.s32 %v134, %v1936
      %v1938 = vrot.slane %v1469, %v1937
      %v1939 = vlaneseq
      %v1940 = vshrl.u32 %v1939, 7
      %v1941 = vsub.s32 %v134, %v1940
      %v1942 = vrot.slane %v1472, %v1941
      %v1943 = vlaneseq
      %v1944 = vshrl.u32 %v1943, 7
      %v1945 = vsub.s32 %v134, %v1944
      %v1946 = vrot.slane %v1475, %v1945
      %v1947 = vlaneseq
      %v1948 = vshrl.u32 %v1947, 7
      %v1949 = vsub.s32 %v134, %v1948
      %v1950 = vrot.slane %v1478, %v1949
      %v1951 = vlaneseq
      %v1952 = vshrl.u32 %v1951, 7
      %v1953 = vsub.s32 %v134, %v1952
      %v1954 = vrot.slane %v1481, %v1953
      %v1955 = vlaneseq
      %v1956 = vshrl.u32 %v1955, 7
      %v1957 = vsub.s32 %v134, %v1956
      %v1958 = vrot.slane %v1484, %v1957
      %v1959 = vlaneseq
      %v1960 = vshrl.u32 %v1959, 7
      %v1961 = vsub.s32 %v134, %v1960
      %v1962 = vrot.slane %v1487, %v1961
      %v1963 = vlaneseq
      %v1964 = vshrl.u32 %v1963, 7
      %v1965 = vsub.s32 %v134, %v1964
      %v1966 = vrot.slane %v1490, %v1965
      %v1967 = vlaneseq
      %v1968 = vshrl.u32 %v1967, 7
      %v1969 = vsub.s32 %v134, %v1968
      %v1970 = vrot.slane %v1493, %v1969
      %v1971 = vlaneseq
      %v1972 = vshrl.u32 %v1971, 7
      %v1973 = vsub.s32 %v134, %v1972
      %v1974 = vrot.slane %v1496, %v1973
      %v1975 = vlaneseq
      %v1976 = vshrl.u32 %v1975, 7
      %v1977 = vsub.s32 %v134, %v1976
      %v1978 = vrot.slane %v1499, %v1977
      %v1979 = vlaneseq
      %v1980 = vshrl.u32 %v1979, 7
      %v1981 = vsub.s32 %v134, %v1980
      %v1982 = vrot.slane %v1502, %v1981
      %v1983 = vlaneseq
      %v1984 = vshrl.u32 %v1983, 7
      %v1985 = vsub.s32 %v134, %v1984
      %v1986 = vrot.slane %v1505, %v1985
      %v1987 = vlaneseq
      %v1988 = vshrl.u32 %v1987, 7
      %v1989 = vsub.s32 %v134, %v1988
      %v1990 = vrot.slane %v1508, %v1989
      %v1991 = vlaneseq
      %v1992 = vshrl.u32 %v1991, 7
      %v1993 = vsub.s32 %v134, %v1992
      %v1994 = vrot.slane %v1511, %v1993
      %v1995 = vlaneseq
      %v1996 = vshrl.u32 %v1995, 7
      %v1997 = vsub.s32 %v134, %v1996
      %v1998 = vrot.slane %v1514, %v1997
      %v1999 = vlaneseq
      %v2000 = vshrl.u32 %v1999, 7
      %v2001 = vsub.s32 %v134, %v2000
      %v2002 = vrot.slane %v1517, %v2001
      %v2003 = vlaneseq
      %v2004 = vshrl.u32 %v2003, 7
      %v2005 = vsub.s32 %v134, %v2004
      %v2006 = vrot.slane %v1520, %v2005
      %v2007 = vlaneseq
      %v2008 = vshrl.u32 %v2007, 7
      %v2009 = vsub.s32 %v134, %v2008
      %v2010 = vrot.slane %v1523, %v2009
      %v2011 = vlaneseq
      %v2012 = vshrl.u32 %v2011, 7
      %v2013 = vsub.s32 %v134, %v2012
      %v2014 = vrot.slane %v1526, %v2013
      %v2015 = vlaneseq
      %v2016 = vshrl.u32 %v2015, 7
      %v2017 = vsub.s32 %v134, %v2016
      %v2018 = vrot.slane %v1529, %v2017
      %v2019 = vlaneseq
      %v2020 = vshrl.u32 %v2019, 7
      %v2021 = vsub.s32 %v134, %v2020
      %v2022 = vrot.slane %v1532, %v2021
      %v2023 = vlaneseq
      %v2024 = vshrl.u32 %v2023, 7
      %v2025 = vsub.s32 %v134, %v2024
      %v2026 = vrot.slane %v1535, %v2025
      %v2027 = vlaneseq
      %v2028 = vshrl.u32 %v2027, 7
      %v2029 = vsub.s32 %v134, %v2028
      %v2030 = vrot.slane %v1538, %v2029
      %v2031 = vlaneseq
      %v2032 = vshrl.u32 %v2031, 7
      %v2033 = vsub.s32 %v134, %v2032
      %v2034 = vrot.slane %v1541, %v2033
      %v2035 = vlaneseq
      %v2036 = vshrl.u32 %v2035, 7
      %v2037 = vsub.s32 %v134, %v2036
      %v2038 = vrot.slane %v1544, %v2037
      %v2039 = vlaneseq
      %v2040 = vshrl.u32 %v2039, 7
      %v2041 = vsub.s32 %v134, %v2040
      %v2042 = vrot.slane %v1547, %v2041
      %v2043 = vlaneseq
      %v2044 = vshrl.u32 %v2043, 7
      %v2045 = vsub.s32 %v134, %v2044
      %v2046 = vrot.slane %v1550, %v2045
      %v2047 = vlaneseq
      %v2048 = vshrl.u32 %v2047, 7
      %v2049 = vsub.s32 %v134, %v2048
      %v2050 = vrot.slane %v1553, %v2049
      %v2051 = vlaneseq
      %v2052 = vshrl.u32 %v2051, 7
      %v2053 = vsub.s32 %v134, %v2052
      %v2054 = vrot.slane %v1556, %v2053
      %v2055 = vlaneseq
      %v2056 = vshrl.u32 %v2055, 7
      %v2057 = vsub.s32 %v134, %v2056
      %v2058 = vrot.slane %v1559, %v2057
      %v2059 = vlaneseq
      %v2060 = vshrl.u32 %v2059, 7
      %v2061 = vsub.s32 %v134, %v2060
      %v2062 = vrot.slane %v1562, %v2061
      %v2063 = vlaneseq
      %v2064 = vshrl.u32 %v2063, 7
      %v2065 = vsub.s32 %v134, %v2064
      %v2066 = vrot.slane %v1565, %v2065
      %v2067 = vlaneseq
      %v2068 = vshrl.u32 %v2067, 7
      %v2069 = vsub.s32 %v134, %v2068
      %v2070 = vrot.slane %v1568, %v2069
      %v2071 = vlaneseq
      %v2072 = vshrl.u32 %v2071, 7
      %v2073 = vsub.s32 %v134, %v2072
      %v2074 = vrot.slane %v1571, %v2073
      %v2075 = vlaneseq
      %v2076 = vshrl.u32 %v2075, 7
      %v2077 = vsub.s32 %v134, %v2076
      %v2078 = vrot.slane %v1574, %v2077
      %v2079 = vlaneseq
      %v2080 = vshrl.u32 %v2079, 7
      %v2081 = vsub.s32 %v134, %v2080
      %v2082 = vrot.slane %v1577, %v2081
      %v2083 = vlaneseq
      %v2084 = vshrl.u32 %v2083, 7
      %v2085 = vsub.s32 %v134, %v2084
      %v2086 = vrot.slane %v1580, %v2085
      %v2087 = vlaneseq
      %v2088 = vshrl.u32 %v2087, 7
      %v2089 = vsub.s32 %v134, %v2088
      %v2090 = vrot.slane %v1583, %v2089
      %v2091 = vlaneseq
      %v2092 = vshrl.u32 %v2091, 7
      %v2093 = vsub.s32 %v134, %v2092
      %v2094 = vrot.slane %v1586, %v2093
      %v2095 = vlaneseq
      %v2096 = vshrl.u32 %v2095, 7
      %v2097 = vsub.s32 %v134, %v2096
      %v2098 = vrot.slane %v1589, %v2097
      %v2099 = vlaneseq
      %v2100 = vshrl.u32 %v2099, 7
      %v2101 = vsub.s32 %v134, %v2100
      %v2102 = vrot.slane %v1592, %v2101
      %v2103 = vlaneseq
      %v2104 = vshrl.u32 %v2103, 7
      %v2105 = vsub.s32 %v134, %v2104
      %v2106 = vrot.slane %v1595, %v2105
      %v2107 = vlaneseq
      %v2108 = vshrl.u32 %v2107, 7
      %v2109 = vsub.s32 %v134, %v2108
      %v2110 = vrot.slane %v1598, %v2109
      %v2111 = vsel %vm227, %v1606, %v1602
      %vm2112 = vcmask 1042434
      %v2113 = vsel %vm2112, %v1610, %v2111
      %vm2114 = vcmask 1043459
      %v2115 = vsel %vm2114, %v1614, %v2113
      %vm2116 = vcmask 1044484
      %v2117 = vsel %vm2116, %v1618, %v2115
      %vm2118 = vcmask 1045509
      %v2119 = vsel %vm2118, %v1622, %v2117
      %vm2120 = vcmask 1046534
      %v2121 = vsel %vm2120, %v1626, %v2119
      %vm2122 = vcmask 1047559
      %v2123 = vsel %vm2122, %v1630, %v2121
      %v2124 = vsel %vm227, %v1638, %v1634
      %v2125 = vsel %vm2112, %v1642, %v2124
      %v2126 = vsel %vm2114, %v1646, %v2125
      %v2127 = vsel %vm2116, %v1650, %v2126
      %v2128 = vsel %vm2118, %v1654, %v2127
      %v2129 = vsel %vm2120, %v1658, %v2128
      %v2130 = vsel %vm2122, %v1662, %v2129
      %v2131 = vsel %vm227, %v1670, %v1666
      %v2132 = vsel %vm2112, %v1674, %v2131
      %v2133 = vsel %vm2114, %v1678, %v2132
      %v2134 = vsel %vm2116, %v1682, %v2133
      %v2135 = vsel %vm2118, %v1686, %v2134
      %v2136 = vsel %vm2120, %v1690, %v2135
      %v2137 = vsel %vm2122, %v1694, %v2136
      %v2138 = vsel %vm227, %v1702, %v1698
      %v2139 = vsel %vm2112, %v1706, %v2138
      %v2140 = vsel %vm2114, %v1710, %v2139
      %v2141 = vsel %vm2116, %v1714, %v2140
      %v2142 = vsel %vm2118, %v1718, %v2141
      %v2143 = vsel %vm2120, %v1722, %v2142
      %v2144 = vsel %vm2122, %v1726, %v2143
      %v2145 = vsel %vm227, %v1734, %v1730
      %v2146 = vsel %vm2112, %v1738, %v2145
      %v2147 = vsel %vm2114, %v1742, %v2146
      %v2148 = vsel %vm2116, %v1746, %v2147
      %v2149 = vsel %vm2118, %v1750, %v2148
      %v2150 = vsel %vm2120, %v1754, %v2149
      %v2151 = vsel %vm2122, %v1758, %v2150
      %v2152 = vsel %vm227, %v1766, %v1762
      %v2153 = vsel %vm2112, %v1770, %v2152
      %v2154 = vsel %vm2114, %v1774, %v2153
      %v2155 = vsel %vm2116, %v1778, %v2154
      %v2156 = vsel %vm2118, %v1782, %v2155
      %v2157 = vsel %vm2120, %v1786, %v2156
      %v2158 = vsel %vm2122, %v1790, %v2157
      %v2159 = vsel %vm227, %v1798, %v1794
      %v2160 = vsel %vm2112, %v1802, %v2159
      %v2161 = vsel %vm2114, %v1806, %v2160
      %v2162 = vsel %vm2116, %v1810, %v2161
      %v2163 = vsel %vm2118, %v1814, %v2162
      %v2164 = vsel %vm2120, %v1818, %v2163
      %v2165 = vsel %vm2122, %v1822, %v2164
      %v2166 = vsel %vm227, %v1830, %v1826
      %v2167 = vsel %vm2112, %v1834, %v2166
      %v2168 = vsel %vm2114, %v1838, %v2167
      %v2169 = vsel %vm2116, %v1842, %v2168
      %v2170 = vsel %vm2118, %v1846, %v2169
      %v2171 = vsel %vm2120, %v1850, %v2170
      %v2172 = vsel %vm2122, %v1854, %v2171
      %v2173 = vsel %vm227, %v1862, %v1858
      %v2174 = vsel %vm2112, %v1866, %v2173
      %v2175 = vsel %vm2114, %v1870, %v2174
      %v2176 = vsel %vm2116, %v1874, %v2175
      %v2177 = vsel %vm2118, %v1878, %v2176
      %v2178 = vsel %vm2120, %v1882, %v2177
      %v2179 = vsel %vm2122, %v1886, %v2178
      %v2180 = vsel %vm227, %v1894, %v1890
      %v2181 = vsel %vm2112, %v1898, %v2180
      %v2182 = vsel %vm2114, %v1902, %v2181
      %v2183 = vsel %vm2116, %v1906, %v2182
      %v2184 = vsel %vm2118, %v1910, %v2183
      %v2185 = vsel %vm2120, %v1914, %v2184
      %v2186 = vsel %vm2122, %v1918, %v2185
      %v2187 = vsel %vm227, %v1926, %v1922
      %v2188 = vsel %vm2112, %v1930, %v2187
      %v2189 = vsel %vm2114, %v1934, %v2188
      %v2190 = vsel %vm2116, %v1938, %v2189
      %v2191 = vsel %vm2118, %v1942, %v2190
      %v2192 = vsel %vm2120, %v1946, %v2191
      %v2193 = vsel %vm2122, %v1950, %v2192
      %v2194 = vsel %vm227, %v1958, %v1954
      %v2195 = vsel %vm2112, %v1962, %v2194
      %v2196 = vsel %vm2114, %v1966, %v2195
      %v2197 = vsel %vm2116, %v1970, %v2196
      %v2198 = vsel %vm2118, %v1974, %v2197
      %v2199 = vsel %vm2120, %v1978, %v2198
      %v2200 = vsel %vm2122, %v1982, %v2199
      %v2201 = vsel %vm227, %v1990, %v1986
      %v2202 = vsel %vm2112, %v1994, %v2201
      %v2203 = vsel %vm2114, %v1998, %v2202
      %v2204 = vsel %vm2116, %v2002, %v2203
      %v2205 = vsel %vm2118, %v2006, %v2204
      %v2206 = vsel %vm2120, %v2010, %v2205
      %v2207 = vsel %vm2122, %v2014, %v2206
      %v2208 = vsel %vm227, %v2022, %v2018
      %v2209 = vsel %vm2112, %v2026, %v2208
      %v2210 = vsel %vm2114, %v2030, %v2209
      %v2211 = vsel %vm2116, %v2034, %v2210
      %v2212 = vsel %vm2118, %v2038, %v2211
      %v2213 = vsel %vm2120, %v2042, %v2212
      %v2214 = vsel %vm2122, %v2046, %v2213
      %v2215 = vsel %vm227, %v2054, %v2050
      %v2216 = vsel %vm2112, %v2058, %v2215
      %v2217 = vsel %vm2114, %v2062, %v2216
      %v2218 = vsel %vm2116, %v2066, %v2217
      %v2219 = vsel %vm2118, %v2070, %v2218
      %v2220 = vsel %vm2120, %v2074, %v2219
      %v2221 = vsel %vm2122, %v2078, %v2220
      %v2222 = vsel %vm227, %v2086, %v2082
      %v2223 = vsel %vm2112, %v2090, %v2222
      %v2224 = vsel %vm2114, %v2094, %v2223
      %v2225 = vsel %vm2116, %v2098, %v2224
      %v2226 = vsel %vm2118, %v2102, %v2225
      %v2227 = vsel %vm2120, %v2106, %v2226
      %v2228 = vsel %vm2122, %v2110, %v2227
      %vm2245 = vcmask 31744
      %v2246 = vsel %vm2245, %v2123, 0.0
      %2247 = vadd.xlane.f32.xlu0 %v2246
      %v2248 = vpop.xlane.xlu0 %2247
      %v2249 = vsel %vm2245, %v2130, 0.0
      %2250 = vadd.xlane.f32.xlu0 %v2249
      %v2251 = vpop.xlane.xlu0 %2250
      %v2252 = vsel %vm2245, %v2137, 0.0
      %2253 = vadd.xlane.f32.xlu0 %v2252
      %v2254 = vpop.xlane.xlu0 %2253
      %v2255 = vsel %vm2245, %v2144, 0.0
      %2256 = vadd.xlane.f32.xlu0 %v2255
      %v2257 = vpop.xlane.xlu0 %2256
      %v2258 = vsel %vm2245, %v2151, 0.0
      %2259 = vadd.xlane.f32.xlu0 %v2258
      %v2260 = vpop.xlane.xlu0 %2259
      %v2261 = vsel %vm2245, %v2158, 0.0
      %2262 = vadd.xlane.f32.xlu0 %v2261
      %v2263 = vpop.xlane.xlu0 %2262
      %v2264 = vsel %vm2245, %v2165, 0.0
      %2265 = vadd.xlane.f32.xlu0 %v2264
      %v2266 = vpop.xlane.xlu0 %2265
      %v2267 = vsel %vm2245, %v2172, 0.0
      %2268 = vadd.xlane.f32.xlu0 %v2267
      %v2269 = vpop.xlane.xlu0 %2268
      %v2270 = vsel %vm2245, %v2179, 0.0
      %2271 = vadd.xlane.f32.xlu0 %v2270
      %v2272 = vpop.xlane.xlu0 %2271
      %v2273 = vsel %vm2245, %v2186, 0.0
      %2274 = vadd.xlane.f32.xlu0 %v2273
      %v2275 = vpop.xlane.xlu0 %2274
      %v2276 = vsel %vm2245, %v2193, 0.0
      %2277 = vadd.xlane.f32.xlu0 %v2276
      %v2278 = vpop.xlane.xlu0 %2277
      %v2279 = vsel %vm2245, %v2200, 0.0
      %2280 = vadd.xlane.f32.xlu0 %v2279
      %v2281 = vpop.xlane.xlu0 %2280
      %v2282 = vsel %vm2245, %v2207, 0.0
      %2283 = vadd.xlane.f32.xlu0 %v2282
      %v2284 = vpop.xlane.xlu0 %2283
      %v2285 = vsel %vm2245, %v2214, 0.0
      %2286 = vadd.xlane.f32.xlu0 %v2285
      %v2287 = vpop.xlane.xlu0 %2286
      %v2288 = vsel %vm2245, %v2221, 0.0
      %2289 = vadd.xlane.f32.xlu0 %v2288
      %v2290 = vpop.xlane.xlu0 %2289
      %v2291 = vsel %vm2245, %v2228, 0.0
      %2292 = vadd.xlane.f32.xlu0 %v2291
      %v2293 = vpop.xlane.xlu0 %2292
      %v2296 = vunpack.c.l.s4 1966171168
      %v2297 = vunpack.c.0.s8 %v2296
      %v2298 = vlaneseq
      %v2299 = vshrl.u32 %v2298, 7
      %v2300 = vsub.s32 %v2297, %v2299
      %v2301 = vrot.slane %v385, %v2300
      %v2302 = vcombine.high %v2301, %v2301
      %v2304 = vunpack.c.l.s4 1966171168
      %v2305 = vunpack.c.0.s8 %v2304
      %v2306 = vlaneseq
      %v2307 = vshrl.u32 %v2306, 7
      %v2308 = vsub.s32 %v2305, %v2307
      %v2309 = vrot.slane %v2301, %v2308
      %v2311 = vunpack.c.l.s4 1966171168
      %v2312 = vunpack.c.0.s8 %v2311
      %v2313 = vlaneseq
      %v2314 = vshrl.u32 %v2313, 7
      %v2315 = vsub.s32 %v2312, %v2314
      %v2316 = vrot.slane %v2302, %v2315
      %v2317 = vlaneseq
      %v2318 = vshrl.u32 %v2317, 7
      %v2319 = vsub.s32 0, %v2318
      %v2320 = vrot.slane %v2309, %v2319
      %v2321 = vlaneseq
      %v2322 = vshrl.u32 %v2321, 7
      %v2323 = vsub.s32 0, %v2322
      %v2324 = vrot.slane %v2316, %v2323
      %v2327 = vmul.f32 %v2320, %v386
      %v2328 = vmul.f32 %v2324, %v386
      %v2329 = vsel %vm430, %v2327, 0.0
      %2330 = vadd.xlane.f32.xlu0 %v2329
      %v2331 = vpop.xlane.xlu0 %2330
      %v2332 = vsel %vm430, %v2328, 0.0
      %2333 = vadd.xlane.f32.xlu0 %v2332
      %v2334 = vpop.xlane.xlu0 %2333
      %v2335 = vmax.f32 %v2331, 0.0
      %v2336 = vmax.f32 %v2334, 0.0
      %v2337 = vmul.f32 %v2335, %v453
      %v2338 = vmul.f32 %v2335, %v460
      %v2339 = vmul.f32 %v2335, %v467
      %v2340 = vmul.f32 %v2335, %v474
      %v2341 = vmul.f32 %v2335, %v481
      %v2342 = vmul.f32 %v2335, %v488
      %v2343 = vmul.f32 %v2335, %v495
      %v2344 = vmul.f32 %v2335, %v502
      %v2345 = vmul.f32 %v2335, %v509
      %v2346 = vmul.f32 %v2335, %v516
      %v2347 = vmul.f32 %v2335, %v523
      %v2348 = vmul.f32 %v2335, %v530
      %v2349 = vmul.f32 %v2335, %v537
      %v2350 = vmul.f32 %v2335, %v544
      %v2351 = vmul.f32 %v2335, %v551
      %v2352 = vmul.f32 %v2335, %v558
      %v2353 = vmul.f32 %v2335, %v565
      %v2354 = vmul.f32 %v2335, %v572
      %v2355 = vmul.f32 %v2335, %v579
      %v2356 = vmul.f32 %v2335, %v586
      %v2357 = vmul.f32 %v2335, %v593
      %v2358 = vmul.f32 %v2335, %v600
      %v2359 = vmul.f32 %v2335, %v607
      %v2360 = vmul.f32 %v2335, %v614
      %v2361 = vmul.f32 %v2335, %v621
      %v2362 = vmul.f32 %v2335, %v628
      %v2363 = vmul.f32 %v2335, %v635
      %v2364 = vmul.f32 %v2335, %v642
      %v2365 = vmul.f32 %v2335, %v649
      %v2366 = vmul.f32 %v2335, %v656
      %v2367 = vmul.f32 %v2335, %v663
      %v2368 = vmul.f32 %v2335, %v670
      %v2369 = vmul.f32 %v2335, %v677
      %v2370 = vmul.f32 %v2335, %v684
      %v2371 = vmul.f32 %v2335, %v691
      %v2372 = vmul.f32 %v2335, %v698
      %v2373 = vmul.f32 %v2335, %v705
      %v2374 = vmul.f32 %v2335, %v712
      %v2375 = vmul.f32 %v2335, %v719
      %v2376 = vmul.f32 %v2335, %v726
      %v2377 = vmul.f32 %v2335, %v733
      %v2378 = vmul.f32 %v2335, %v740
      %v2379 = vmul.f32 %v2335, %v747
      %v2380 = vmul.f32 %v2335, %v754
      %v2381 = vmul.f32 %v2335, %v761
      %v2382 = vmul.f32 %v2335, %v768
      %v2383 = vmul.f32 %v2335, %v775
      %v2384 = vmul.f32 %v2335, %v782
      %v2385 = vmul.f32 %v2335, %v789
      %v2386 = vmul.f32 %v2335, %v796
      %v2387 = vmul.f32 %v2335, %v803
      %v2388 = vmul.f32 %v2335, %v810
      %v2389 = vmul.f32 %v2335, %v817
      %v2390 = vmul.f32 %v2335, %v824
      %v2391 = vmul.f32 %v2335, %v831
      %v2392 = vmul.f32 %v2335, %v838
      %v2393 = vmul.f32 %v2335, %v845
      %v2394 = vmul.f32 %v2335, %v852
      %v2395 = vmul.f32 %v2335, %v859
      %v2396 = vmul.f32 %v2335, %v866
      %v2397 = vmul.f32 %v2335, %v873
      %v2398 = vmul.f32 %v2335, %v880
      %v2399 = vmul.f32 %v2335, %v887
      %v2400 = vmul.f32 %v2335, %v894
      %v2401 = vmul.f32 %v2336, %v453
      %v2402 = vmul.f32 %v2336, %v460
      %v2403 = vmul.f32 %v2336, %v467
      %v2404 = vmul.f32 %v2336, %v474
      %v2405 = vmul.f32 %v2336, %v481
      %v2406 = vmul.f32 %v2336, %v488
      %v2407 = vmul.f32 %v2336, %v495
      %v2408 = vmul.f32 %v2336, %v502
      %v2409 = vmul.f32 %v2336, %v509
      %v2410 = vmul.f32 %v2336, %v516
      %v2411 = vmul.f32 %v2336, %v523
      %v2412 = vmul.f32 %v2336, %v530
      %v2413 = vmul.f32 %v2336, %v537
      %v2414 = vmul.f32 %v2336, %v544
      %v2415 = vmul.f32 %v2336, %v551
      %v2416 = vmul.f32 %v2336, %v558
      %v2417 = vmul.f32 %v2336, %v565
      %v2418 = vmul.f32 %v2336, %v572
      %v2419 = vmul.f32 %v2336, %v579
      %v2420 = vmul.f32 %v2336, %v586
      %v2421 = vmul.f32 %v2336, %v593
      %v2422 = vmul.f32 %v2336, %v600
      %v2423 = vmul.f32 %v2336, %v607
      %v2424 = vmul.f32 %v2336, %v614
      %v2425 = vmul.f32 %v2336, %v621
      %v2426 = vmul.f32 %v2336, %v628
      %v2427 = vmul.f32 %v2336, %v635
      %v2428 = vmul.f32 %v2336, %v642
      %v2429 = vmul.f32 %v2336, %v649
      %v2430 = vmul.f32 %v2336, %v656
      %v2431 = vmul.f32 %v2336, %v663
      %v2432 = vmul.f32 %v2336, %v670
      %v2433 = vmul.f32 %v2336, %v677
      %v2434 = vmul.f32 %v2336, %v684
      %v2435 = vmul.f32 %v2336, %v691
      %v2436 = vmul.f32 %v2336, %v698
      %v2437 = vmul.f32 %v2336, %v705
      %v2438 = vmul.f32 %v2336, %v712
      %v2439 = vmul.f32 %v2336, %v719
      %v2440 = vmul.f32 %v2336, %v726
      %v2441 = vmul.f32 %v2336, %v733
      %v2442 = vmul.f32 %v2336, %v740
      %v2443 = vmul.f32 %v2336, %v747
      %v2444 = vmul.f32 %v2336, %v754
      %v2445 = vmul.f32 %v2336, %v761
      %v2446 = vmul.f32 %v2336, %v768
      %v2447 = vmul.f32 %v2336, %v775
      %v2448 = vmul.f32 %v2336, %v782
      %v2449 = vmul.f32 %v2336, %v789
      %v2450 = vmul.f32 %v2336, %v796
      %v2451 = vmul.f32 %v2336, %v803
      %v2452 = vmul.f32 %v2336, %v810
      %v2453 = vmul.f32 %v2336, %v817
      %v2454 = vmul.f32 %v2336, %v824
      %v2455 = vmul.f32 %v2336, %v831
      %v2456 = vmul.f32 %v2336, %v838
      %v2457 = vmul.f32 %v2336, %v845
      %v2458 = vmul.f32 %v2336, %v852
      %v2459 = vmul.f32 %v2336, %v859
      %v2460 = vmul.f32 %v2336, %v866
      %v2461 = vmul.f32 %v2336, %v873
      %v2462 = vmul.f32 %v2336, %v880
      %v2463 = vmul.f32 %v2336, %v887
      %v2464 = vmul.f32 %v2336, %v894
      %2593 = vset.pattern.permute.xlu0 0
      %2594 = vperm.xlu0 %2593, %v2337
      %v2595 = vpop.permute.xlu0 %2594
      %2596 = vset.pattern.permute.xlu0 0
      %2597 = vperm.xlu0 %2596, %v2338
      %v2598 = vpop.permute.xlu0 %2597
      %2599 = vset.pattern.permute.xlu0 0
      %2600 = vperm.xlu0 %2599, %v2339
      %v2601 = vpop.permute.xlu0 %2600
      %2602 = vset.pattern.permute.xlu0 0
      %2603 = vperm.xlu0 %2602, %v2340
      %v2604 = vpop.permute.xlu0 %2603
      %2605 = vset.pattern.permute.xlu0 0
      %2606 = vperm.xlu0 %2605, %v2341
      %v2607 = vpop.permute.xlu0 %2606
      %2608 = vset.pattern.permute.xlu0 0
      %2609 = vperm.xlu0 %2608, %v2342
      %v2610 = vpop.permute.xlu0 %2609
      %2611 = vset.pattern.permute.xlu0 0
      %2612 = vperm.xlu0 %2611, %v2343
      %v2613 = vpop.permute.xlu0 %2612
      %2614 = vset.pattern.permute.xlu0 0
      %2615 = vperm.xlu0 %2614, %v2344
      %v2616 = vpop.permute.xlu0 %2615
      %2617 = vset.pattern.permute.xlu0 0
      %2618 = vperm.xlu0 %2617, %v2345
      %v2619 = vpop.permute.xlu0 %2618
      %2620 = vset.pattern.permute.xlu0 0
      %2621 = vperm.xlu0 %2620, %v2346
      %v2622 = vpop.permute.xlu0 %2621
      %2623 = vset.pattern.permute.xlu0 0
      %2624 = vperm.xlu0 %2623, %v2347
      %v2625 = vpop.permute.xlu0 %2624
      %2626 = vset.pattern.permute.xlu0 0
      %2627 = vperm.xlu0 %2626, %v2348
      %v2628 = vpop.permute.xlu0 %2627
      %2629 = vset.pattern.permute.xlu0 0
      %2630 = vperm.xlu0 %2629, %v2349
      %v2631 = vpop.permute.xlu0 %2630
      %2632 = vset.pattern.permute.xlu0 0
      %2633 = vperm.xlu0 %2632, %v2350
      %v2634 = vpop.permute.xlu0 %2633
      %2635 = vset.pattern.permute.xlu0 0
      %2636 = vperm.xlu0 %2635, %v2351
      %v2637 = vpop.permute.xlu0 %2636
      %2638 = vset.pattern.permute.xlu0 0
      %2639 = vperm.xlu0 %2638, %v2352
      %v2640 = vpop.permute.xlu0 %2639
      %2641 = vset.pattern.permute.xlu0 0
      %2642 = vperm.xlu0 %2641, %v2353
      %v2643 = vpop.permute.xlu0 %2642
      %2644 = vset.pattern.permute.xlu0 0
      %2645 = vperm.xlu0 %2644, %v2354
      %v2646 = vpop.permute.xlu0 %2645
      %2647 = vset.pattern.permute.xlu0 0
      %2648 = vperm.xlu0 %2647, %v2355
      %v2649 = vpop.permute.xlu0 %2648
      %2650 = vset.pattern.permute.xlu0 0
      %2651 = vperm.xlu0 %2650, %v2356
      %v2652 = vpop.permute.xlu0 %2651
      %2653 = vset.pattern.permute.xlu0 0
      %2654 = vperm.xlu0 %2653, %v2357
      %v2655 = vpop.permute.xlu0 %2654
      %2656 = vset.pattern.permute.xlu0 0
      %2657 = vperm.xlu0 %2656, %v2358
      %v2658 = vpop.permute.xlu0 %2657
      %2659 = vset.pattern.permute.xlu0 0
      %2660 = vperm.xlu0 %2659, %v2359
      %v2661 = vpop.permute.xlu0 %2660
      %2662 = vset.pattern.permute.xlu0 0
      %2663 = vperm.xlu0 %2662, %v2360
      %v2664 = vpop.permute.xlu0 %2663
      %2665 = vset.pattern.permute.xlu0 0
      %2666 = vperm.xlu0 %2665, %v2361
      %v2667 = vpop.permute.xlu0 %2666
      %2668 = vset.pattern.permute.xlu0 0
      %2669 = vperm.xlu0 %2668, %v2362
      %v2670 = vpop.permute.xlu0 %2669
      %2671 = vset.pattern.permute.xlu0 0
      %2672 = vperm.xlu0 %2671, %v2363
      %v2673 = vpop.permute.xlu0 %2672
      %2674 = vset.pattern.permute.xlu0 0
      %2675 = vperm.xlu0 %2674, %v2364
      %v2676 = vpop.permute.xlu0 %2675
      %2677 = vset.pattern.permute.xlu0 0
      %2678 = vperm.xlu0 %2677, %v2365
      %v2679 = vpop.permute.xlu0 %2678
      %2680 = vset.pattern.permute.xlu0 0
      %2681 = vperm.xlu0 %2680, %v2366
      %v2682 = vpop.permute.xlu0 %2681
      %2683 = vset.pattern.permute.xlu0 0
      %2684 = vperm.xlu0 %2683, %v2367
      %v2685 = vpop.permute.xlu0 %2684
      %2686 = vset.pattern.permute.xlu0 0
      %2687 = vperm.xlu0 %2686, %v2368
      %v2688 = vpop.permute.xlu0 %2687
      %2689 = vset.pattern.permute.xlu0 0
      %2690 = vperm.xlu0 %2689, %v2369
      %v2691 = vpop.permute.xlu0 %2690
      %2692 = vset.pattern.permute.xlu0 0
      %2693 = vperm.xlu0 %2692, %v2370
      %v2694 = vpop.permute.xlu0 %2693
      %2695 = vset.pattern.permute.xlu0 0
      %2696 = vperm.xlu0 %2695, %v2371
      %v2697 = vpop.permute.xlu0 %2696
      %2698 = vset.pattern.permute.xlu0 0
      %2699 = vperm.xlu0 %2698, %v2372
      %v2700 = vpop.permute.xlu0 %2699
      %2701 = vset.pattern.permute.xlu0 0
      %2702 = vperm.xlu0 %2701, %v2373
      %v2703 = vpop.permute.xlu0 %2702
      %2704 = vset.pattern.permute.xlu0 0
      %2705 = vperm.xlu0 %2704, %v2374
      %v2706 = vpop.permute.xlu0 %2705
      %2707 = vset.pattern.permute.xlu0 0
      %2708 = vperm.xlu0 %2707, %v2375
      %v2709 = vpop.permute.xlu0 %2708
      %2710 = vset.pattern.permute.xlu0 0
      %2711 = vperm.xlu0 %2710, %v2376
      %v2712 = vpop.permute.xlu0 %2711
      %2713 = vset.pattern.permute.xlu0 0
      %2714 = vperm.xlu0 %2713, %v2377
      %v2715 = vpop.permute.xlu0 %2714
      %2716 = vset.pattern.permute.xlu0 0
      %2717 = vperm.xlu0 %2716, %v2378
      %v2718 = vpop.permute.xlu0 %2717
      %2719 = vset.pattern.permute.xlu0 0
      %2720 = vperm.xlu0 %2719, %v2379
      %v2721 = vpop.permute.xlu0 %2720
      %2722 = vset.pattern.permute.xlu0 0
      %2723 = vperm.xlu0 %2722, %v2380
      %v2724 = vpop.permute.xlu0 %2723
      %2725 = vset.pattern.permute.xlu0 0
      %2726 = vperm.xlu0 %2725, %v2381
      %v2727 = vpop.permute.xlu0 %2726
      %2728 = vset.pattern.permute.xlu0 0
      %2729 = vperm.xlu0 %2728, %v2382
      %v2730 = vpop.permute.xlu0 %2729
      %2731 = vset.pattern.permute.xlu0 0
      %2732 = vperm.xlu0 %2731, %v2383
      %v2733 = vpop.permute.xlu0 %2732
      %2734 = vset.pattern.permute.xlu0 0
      %2735 = vperm.xlu0 %2734, %v2384
      %v2736 = vpop.permute.xlu0 %2735
      %2737 = vset.pattern.permute.xlu0 0
      %2738 = vperm.xlu0 %2737, %v2385
      %v2739 = vpop.permute.xlu0 %2738
      %2740 = vset.pattern.permute.xlu0 0
      %2741 = vperm.xlu0 %2740, %v2386
      %v2742 = vpop.permute.xlu0 %2741
      %2743 = vset.pattern.permute.xlu0 0
      %2744 = vperm.xlu0 %2743, %v2387
      %v2745 = vpop.permute.xlu0 %2744
      %2746 = vset.pattern.permute.xlu0 0
      %2747 = vperm.xlu0 %2746, %v2388
      %v2748 = vpop.permute.xlu0 %2747
      %2749 = vset.pattern.permute.xlu0 0
      %2750 = vperm.xlu0 %2749, %v2389
      %v2751 = vpop.permute.xlu0 %2750
      %2752 = vset.pattern.permute.xlu0 0
      %2753 = vperm.xlu0 %2752, %v2390
      %v2754 = vpop.permute.xlu0 %2753
      %2755 = vset.pattern.permute.xlu0 0
      %2756 = vperm.xlu0 %2755, %v2391
      %v2757 = vpop.permute.xlu0 %2756
      %2758 = vset.pattern.permute.xlu0 0
      %2759 = vperm.xlu0 %2758, %v2392
      %v2760 = vpop.permute.xlu0 %2759
      %2761 = vset.pattern.permute.xlu0 0
      %2762 = vperm.xlu0 %2761, %v2393
      %v2763 = vpop.permute.xlu0 %2762
      %2764 = vset.pattern.permute.xlu0 0
      %2765 = vperm.xlu0 %2764, %v2394
      %v2766 = vpop.permute.xlu0 %2765
      %2767 = vset.pattern.permute.xlu0 0
      %2768 = vperm.xlu0 %2767, %v2395
      %v2769 = vpop.permute.xlu0 %2768
      %2770 = vset.pattern.permute.xlu0 0
      %2771 = vperm.xlu0 %2770, %v2396
      %v2772 = vpop.permute.xlu0 %2771
      %2773 = vset.pattern.permute.xlu0 0
      %2774 = vperm.xlu0 %2773, %v2397
      %v2775 = vpop.permute.xlu0 %2774
      %2776 = vset.pattern.permute.xlu0 0
      %2777 = vperm.xlu0 %2776, %v2398
      %v2778 = vpop.permute.xlu0 %2777
      %2779 = vset.pattern.permute.xlu0 0
      %2780 = vperm.xlu0 %2779, %v2399
      %v2781 = vpop.permute.xlu0 %2780
      %2782 = vset.pattern.permute.xlu0 0
      %2783 = vperm.xlu0 %2782, %v2400
      %v2784 = vpop.permute.xlu0 %2783
      %2785 = vset.pattern.permute.xlu0 0
      %2786 = vperm.xlu0 %2785, %v2401
      %v2787 = vpop.permute.xlu0 %2786
      %2788 = vset.pattern.permute.xlu0 0
      %2789 = vperm.xlu0 %2788, %v2402
      %v2790 = vpop.permute.xlu0 %2789
      %2791 = vset.pattern.permute.xlu0 0
      %2792 = vperm.xlu0 %2791, %v2403
      %v2793 = vpop.permute.xlu0 %2792
      %2794 = vset.pattern.permute.xlu0 0
      %2795 = vperm.xlu0 %2794, %v2404
      %v2796 = vpop.permute.xlu0 %2795
      %2797 = vset.pattern.permute.xlu0 0
      %2798 = vperm.xlu0 %2797, %v2405
      %v2799 = vpop.permute.xlu0 %2798
      %2800 = vset.pattern.permute.xlu0 0
      %2801 = vperm.xlu0 %2800, %v2406
      %v2802 = vpop.permute.xlu0 %2801
      %2803 = vset.pattern.permute.xlu0 0
      %2804 = vperm.xlu0 %2803, %v2407
      %v2805 = vpop.permute.xlu0 %2804
      %2806 = vset.pattern.permute.xlu0 0
      %2807 = vperm.xlu0 %2806, %v2408
      %v2808 = vpop.permute.xlu0 %2807
      %2809 = vset.pattern.permute.xlu0 0
      %2810 = vperm.xlu0 %2809, %v2409
      %v2811 = vpop.permute.xlu0 %2810
      %2812 = vset.pattern.permute.xlu0 0
      %2813 = vperm.xlu0 %2812, %v2410
      %v2814 = vpop.permute.xlu0 %2813
      %2815 = vset.pattern.permute.xlu0 0
      %2816 = vperm.xlu0 %2815, %v2411
      %v2817 = vpop.permute.xlu0 %2816
      %2818 = vset.pattern.permute.xlu0 0
      %2819 = vperm.xlu0 %2818, %v2412
      %v2820 = vpop.permute.xlu0 %2819
      %2821 = vset.pattern.permute.xlu0 0
      %2822 = vperm.xlu0 %2821, %v2413
      %v2823 = vpop.permute.xlu0 %2822
      %2824 = vset.pattern.permute.xlu0 0
      %2825 = vperm.xlu0 %2824, %v2414
      %v2826 = vpop.permute.xlu0 %2825
      %2827 = vset.pattern.permute.xlu0 0
      %2828 = vperm.xlu0 %2827, %v2415
      %v2829 = vpop.permute.xlu0 %2828
      %2830 = vset.pattern.permute.xlu0 0
      %2831 = vperm.xlu0 %2830, %v2416
      %v2832 = vpop.permute.xlu0 %2831
      %2833 = vset.pattern.permute.xlu0 0
      %2834 = vperm.xlu0 %2833, %v2417
      %v2835 = vpop.permute.xlu0 %2834
      %2836 = vset.pattern.permute.xlu0 0
      %2837 = vperm.xlu0 %2836, %v2418
      %v2838 = vpop.permute.xlu0 %2837
      %2839 = vset.pattern.permute.xlu0 0
      %2840 = vperm.xlu0 %2839, %v2419
      %v2841 = vpop.permute.xlu0 %2840
      %2842 = vset.pattern.permute.xlu0 0
      %2843 = vperm.xlu0 %2842, %v2420
      %v2844 = vpop.permute.xlu0 %2843
      %2845 = vset.pattern.permute.xlu0 0
      %2846 = vperm.xlu0 %2845, %v2421
      %v2847 = vpop.permute.xlu0 %2846
      %2848 = vset.pattern.permute.xlu0 0
      %2849 = vperm.xlu0 %2848, %v2422
      %v2850 = vpop.permute.xlu0 %2849
      %2851 = vset.pattern.permute.xlu0 0
      %2852 = vperm.xlu0 %2851, %v2423
      %v2853 = vpop.permute.xlu0 %2852
      %2854 = vset.pattern.permute.xlu0 0
      %2855 = vperm.xlu0 %2854, %v2424
      %v2856 = vpop.permute.xlu0 %2855
      %2857 = vset.pattern.permute.xlu0 0
      %2858 = vperm.xlu0 %2857, %v2425
      %v2859 = vpop.permute.xlu0 %2858
      %2860 = vset.pattern.permute.xlu0 0
      %2861 = vperm.xlu0 %2860, %v2426
      %v2862 = vpop.permute.xlu0 %2861
      %2863 = vset.pattern.permute.xlu0 0
      %2864 = vperm.xlu0 %2863, %v2427
      %v2865 = vpop.permute.xlu0 %2864
      %2866 = vset.pattern.permute.xlu0 0
      %2867 = vperm.xlu0 %2866, %v2428
      %v2868 = vpop.permute.xlu0 %2867
      %2869 = vset.pattern.permute.xlu0 0
      %2870 = vperm.xlu0 %2869, %v2429
      %v2871 = vpop.permute.xlu0 %2870
      %2872 = vset.pattern.permute.xlu0 0
      %2873 = vperm.xlu0 %2872, %v2430
      %v2874 = vpop.permute.xlu0 %2873
      %2875 = vset.pattern.permute.xlu0 0
      %2876 = vperm.xlu0 %2875, %v2431
      %v2877 = vpop.permute.xlu0 %2876
      %2878 = vset.pattern.permute.xlu0 0
      %2879 = vperm.xlu0 %2878, %v2432
      %v2880 = vpop.permute.xlu0 %2879
      %2881 = vset.pattern.permute.xlu0 0
      %2882 = vperm.xlu0 %2881, %v2433
      %v2883 = vpop.permute.xlu0 %2882
      %2884 = vset.pattern.permute.xlu0 0
      %2885 = vperm.xlu0 %2884, %v2434
      %v2886 = vpop.permute.xlu0 %2885
      %2887 = vset.pattern.permute.xlu0 0
      %2888 = vperm.xlu0 %2887, %v2435
      %v2889 = vpop.permute.xlu0 %2888
      %2890 = vset.pattern.permute.xlu0 0
      %2891 = vperm.xlu0 %2890, %v2436
      %v2892 = vpop.permute.xlu0 %2891
      %2893 = vset.pattern.permute.xlu0 0
      %2894 = vperm.xlu0 %2893, %v2437
      %v2895 = vpop.permute.xlu0 %2894
      %2896 = vset.pattern.permute.xlu0 0
      %2897 = vperm.xlu0 %2896, %v2438
      %v2898 = vpop.permute.xlu0 %2897
      %2899 = vset.pattern.permute.xlu0 0
      %2900 = vperm.xlu0 %2899, %v2439
      %v2901 = vpop.permute.xlu0 %2900
      %2902 = vset.pattern.permute.xlu0 0
      %2903 = vperm.xlu0 %2902, %v2440
      %v2904 = vpop.permute.xlu0 %2903
      %2905 = vset.pattern.permute.xlu0 0
      %2906 = vperm.xlu0 %2905, %v2441
      %v2907 = vpop.permute.xlu0 %2906
      %2908 = vset.pattern.permute.xlu0 0
      %2909 = vperm.xlu0 %2908, %v2442
      %v2910 = vpop.permute.xlu0 %2909
      %2911 = vset.pattern.permute.xlu0 0
      %2912 = vperm.xlu0 %2911, %v2443
      %v2913 = vpop.permute.xlu0 %2912
      %2914 = vset.pattern.permute.xlu0 0
      %2915 = vperm.xlu0 %2914, %v2444
      %v2916 = vpop.permute.xlu0 %2915
      %2917 = vset.pattern.permute.xlu0 0
      %2918 = vperm.xlu0 %2917, %v2445
      %v2919 = vpop.permute.xlu0 %2918
      %2920 = vset.pattern.permute.xlu0 0
      %2921 = vperm.xlu0 %2920, %v2446
      %v2922 = vpop.permute.xlu0 %2921
      %2923 = vset.pattern.permute.xlu0 0
      %2924 = vperm.xlu0 %2923, %v2447
      %v2925 = vpop.permute.xlu0 %2924
      %2926 = vset.pattern.permute.xlu0 0
      %2927 = vperm.xlu0 %2926, %v2448
      %v2928 = vpop.permute.xlu0 %2927
      %2929 = vset.pattern.permute.xlu0 0
      %2930 = vperm.xlu0 %2929, %v2449
      %v2931 = vpop.permute.xlu0 %2930
      %2932 = vset.pattern.permute.xlu0 0
      %2933 = vperm.xlu0 %2932, %v2450
      %v2934 = vpop.permute.xlu0 %2933
      %2935 = vset.pattern.permute.xlu0 0
      %2936 = vperm.xlu0 %2935, %v2451
      %v2937 = vpop.permute.xlu0 %2936
      %2938 = vset.pattern.permute.xlu0 0
      %2939 = vperm.xlu0 %2938, %v2452
      %v2940 = vpop.permute.xlu0 %2939
      %2941 = vset.pattern.permute.xlu0 0
      %2942 = vperm.xlu0 %2941, %v2453
      %v2943 = vpop.permute.xlu0 %2942
      %2944 = vset.pattern.permute.xlu0 0
      %2945 = vperm.xlu0 %2944, %v2454
      %v2946 = vpop.permute.xlu0 %2945
      %2947 = vset.pattern.permute.xlu0 0
      %2948 = vperm.xlu0 %2947, %v2455
      %v2949 = vpop.permute.xlu0 %2948
      %2950 = vset.pattern.permute.xlu0 0
      %2951 = vperm.xlu0 %2950, %v2456
      %v2952 = vpop.permute.xlu0 %2951
      %2953 = vset.pattern.permute.xlu0 0
      %2954 = vperm.xlu0 %2953, %v2457
      %v2955 = vpop.permute.xlu0 %2954
      %2956 = vset.pattern.permute.xlu0 0
      %2957 = vperm.xlu0 %2956, %v2458
      %v2958 = vpop.permute.xlu0 %2957
      %2959 = vset.pattern.permute.xlu0 0
      %2960 = vperm.xlu0 %2959, %v2459
      %v2961 = vpop.permute.xlu0 %2960
      %2962 = vset.pattern.permute.xlu0 0
      %2963 = vperm.xlu0 %2962, %v2460
      %v2964 = vpop.permute.xlu0 %2963
      %2965 = vset.pattern.permute.xlu0 0
      %2966 = vperm.xlu0 %2965, %v2461
      %v2967 = vpop.permute.xlu0 %2966
      %2968 = vset.pattern.permute.xlu0 0
      %2969 = vperm.xlu0 %2968, %v2462
      %v2970 = vpop.permute.xlu0 %2969
      %2971 = vset.pattern.permute.xlu0 0
      %2972 = vperm.xlu0 %2971, %v2463
      %v2973 = vpop.permute.xlu0 %2972
      %2974 = vset.pattern.permute.xlu0 0
      %2975 = vperm.xlu0 %2974, %v2464
      %v2976 = vpop.permute.xlu0 %2975
      %v2977 = vlaneseq
      %v2978 = vshrl.u32 %v2977, 7
      %v2979 = vsub.s32 %v134, %v2978
      %v2980 = vrot.slane %v2595, %v2979
      %v2981 = vlaneseq
      %v2982 = vshrl.u32 %v2981, 7
      %v2983 = vsub.s32 %v134, %v2982
      %v2984 = vrot.slane %v2598, %v2983
      %v2985 = vlaneseq
      %v2986 = vshrl.u32 %v2985, 7
      %v2987 = vsub.s32 %v134, %v2986
      %v2988 = vrot.slane %v2601, %v2987
      %v2989 = vlaneseq
      %v2990 = vshrl.u32 %v2989, 7
      %v2991 = vsub.s32 %v134, %v2990
      %v2992 = vrot.slane %v2604, %v2991
      %v2993 = vlaneseq
      %v2994 = vshrl.u32 %v2993, 7
      %v2995 = vsub.s32 %v134, %v2994
      %v2996 = vrot.slane %v2607, %v2995
      %v2997 = vlaneseq
      %v2998 = vshrl.u32 %v2997, 7
      %v2999 = vsub.s32 %v134, %v2998
      %v3000 = vrot.slane %v2610, %v2999
      %v3001 = vlaneseq
      %v3002 = vshrl.u32 %v3001, 7
      %v3003 = vsub.s32 %v134, %v3002
      %v3004 = vrot.slane %v2613, %v3003
      %v3005 = vlaneseq
      %v3006 = vshrl.u32 %v3005, 7
      %v3007 = vsub.s32 %v134, %v3006
      %v3008 = vrot.slane %v2616, %v3007
      %v3009 = vlaneseq
      %v3010 = vshrl.u32 %v3009, 7
      %v3011 = vsub.s32 %v134, %v3010
      %v3012 = vrot.slane %v2619, %v3011
      %v3013 = vlaneseq
      %v3014 = vshrl.u32 %v3013, 7
      %v3015 = vsub.s32 %v134, %v3014
      %v3016 = vrot.slane %v2622, %v3015
      %v3017 = vlaneseq
      %v3018 = vshrl.u32 %v3017, 7
      %v3019 = vsub.s32 %v134, %v3018
      %v3020 = vrot.slane %v2625, %v3019
      %v3021 = vlaneseq
      %v3022 = vshrl.u32 %v3021, 7
      %v3023 = vsub.s32 %v134, %v3022
      %v3024 = vrot.slane %v2628, %v3023
      %v3025 = vlaneseq
      %v3026 = vshrl.u32 %v3025, 7
      %v3027 = vsub.s32 %v134, %v3026
      %v3028 = vrot.slane %v2631, %v3027
      %v3029 = vlaneseq
      %v3030 = vshrl.u32 %v3029, 7
      %v3031 = vsub.s32 %v134, %v3030
      %v3032 = vrot.slane %v2634, %v3031
      %v3033 = vlaneseq
      %v3034 = vshrl.u32 %v3033, 7
      %v3035 = vsub.s32 %v134, %v3034
      %v3036 = vrot.slane %v2637, %v3035
      %v3037 = vlaneseq
      %v3038 = vshrl.u32 %v3037, 7
      %v3039 = vsub.s32 %v134, %v3038
      %v3040 = vrot.slane %v2640, %v3039
      %v3041 = vlaneseq
      %v3042 = vshrl.u32 %v3041, 7
      %v3043 = vsub.s32 %v134, %v3042
      %v3044 = vrot.slane %v2643, %v3043
      %v3045 = vlaneseq
      %v3046 = vshrl.u32 %v3045, 7
      %v3047 = vsub.s32 %v134, %v3046
      %v3048 = vrot.slane %v2646, %v3047
      %v3049 = vlaneseq
      %v3050 = vshrl.u32 %v3049, 7
      %v3051 = vsub.s32 %v134, %v3050
      %v3052 = vrot.slane %v2649, %v3051
      %v3053 = vlaneseq
      %v3054 = vshrl.u32 %v3053, 7
      %v3055 = vsub.s32 %v134, %v3054
      %v3056 = vrot.slane %v2652, %v3055
      %v3057 = vlaneseq
      %v3058 = vshrl.u32 %v3057, 7
      %v3059 = vsub.s32 %v134, %v3058
      %v3060 = vrot.slane %v2655, %v3059
      %v3061 = vlaneseq
      %v3062 = vshrl.u32 %v3061, 7
      %v3063 = vsub.s32 %v134, %v3062
      %v3064 = vrot.slane %v2658, %v3063
      %v3065 = vlaneseq
      %v3066 = vshrl.u32 %v3065, 7
      %v3067 = vsub.s32 %v134, %v3066
      %v3068 = vrot.slane %v2661, %v3067
      %v3069 = vlaneseq
      %v3070 = vshrl.u32 %v3069, 7
      %v3071 = vsub.s32 %v134, %v3070
      %v3072 = vrot.slane %v2664, %v3071
      %v3073 = vlaneseq
      %v3074 = vshrl.u32 %v3073, 7
      %v3075 = vsub.s32 %v134, %v3074
      %v3076 = vrot.slane %v2667, %v3075
      %v3077 = vlaneseq
      %v3078 = vshrl.u32 %v3077, 7
      %v3079 = vsub.s32 %v134, %v3078
      %v3080 = vrot.slane %v2670, %v3079
      %v3081 = vlaneseq
      %v3082 = vshrl.u32 %v3081, 7
      %v3083 = vsub.s32 %v134, %v3082
      %v3084 = vrot.slane %v2673, %v3083
      %v3085 = vlaneseq
      %v3086 = vshrl.u32 %v3085, 7
      %v3087 = vsub.s32 %v134, %v3086
      %v3088 = vrot.slane %v2676, %v3087
      %v3089 = vlaneseq
      %v3090 = vshrl.u32 %v3089, 7
      %v3091 = vsub.s32 %v134, %v3090
      %v3092 = vrot.slane %v2679, %v3091
      %v3093 = vlaneseq
      %v3094 = vshrl.u32 %v3093, 7
      %v3095 = vsub.s32 %v134, %v3094
      %v3096 = vrot.slane %v2682, %v3095
      %v3097 = vlaneseq
      %v3098 = vshrl.u32 %v3097, 7
      %v3099 = vsub.s32 %v134, %v3098
      %v3100 = vrot.slane %v2685, %v3099
      %v3101 = vlaneseq
      %v3102 = vshrl.u32 %v3101, 7
      %v3103 = vsub.s32 %v134, %v3102
      %v3104 = vrot.slane %v2688, %v3103
      %v3105 = vlaneseq
      %v3106 = vshrl.u32 %v3105, 7
      %v3107 = vsub.s32 %v134, %v3106
      %v3108 = vrot.slane %v2691, %v3107
      %v3109 = vlaneseq
      %v3110 = vshrl.u32 %v3109, 7
      %v3111 = vsub.s32 %v134, %v3110
      %v3112 = vrot.slane %v2694, %v3111
      %v3113 = vlaneseq
      %v3114 = vshrl.u32 %v3113, 7
      %v3115 = vsub.s32 %v134, %v3114
      %v3116 = vrot.slane %v2697, %v3115
      %v3117 = vlaneseq
      %v3118 = vshrl.u32 %v3117, 7
      %v3119 = vsub.s32 %v134, %v3118
      %v3120 = vrot.slane %v2700, %v3119
      %v3121 = vlaneseq
      %v3122 = vshrl.u32 %v3121, 7
      %v3123 = vsub.s32 %v134, %v3122
      %v3124 = vrot.slane %v2703, %v3123
      %v3125 = vlaneseq
      %v3126 = vshrl.u32 %v3125, 7
      %v3127 = vsub.s32 %v134, %v3126
      %v3128 = vrot.slane %v2706, %v3127
      %v3129 = vlaneseq
      %v3130 = vshrl.u32 %v3129, 7
      %v3131 = vsub.s32 %v134, %v3130
      %v3132 = vrot.slane %v2709, %v3131
      %v3133 = vlaneseq
      %v3134 = vshrl.u32 %v3133, 7
      %v3135 = vsub.s32 %v134, %v3134
      %v3136 = vrot.slane %v2712, %v3135
      %v3137 = vlaneseq
      %v3138 = vshrl.u32 %v3137, 7
      %v3139 = vsub.s32 %v134, %v3138
      %v3140 = vrot.slane %v2715, %v3139
      %v3141 = vlaneseq
      %v3142 = vshrl.u32 %v3141, 7
      %v3143 = vsub.s32 %v134, %v3142
      %v3144 = vrot.slane %v2718, %v3143
      %v3145 = vlaneseq
      %v3146 = vshrl.u32 %v3145, 7
      %v3147 = vsub.s32 %v134, %v3146
      %v3148 = vrot.slane %v2721, %v3147
      %v3149 = vlaneseq
      %v3150 = vshrl.u32 %v3149, 7
      %v3151 = vsub.s32 %v134, %v3150
      %v3152 = vrot.slane %v2724, %v3151
      %v3153 = vlaneseq
      %v3154 = vshrl.u32 %v3153, 7
      %v3155 = vsub.s32 %v134, %v3154
      %v3156 = vrot.slane %v2727, %v3155
      %v3157 = vlaneseq
      %v3158 = vshrl.u32 %v3157, 7
      %v3159 = vsub.s32 %v134, %v3158
      %v3160 = vrot.slane %v2730, %v3159
      %v3161 = vlaneseq
      %v3162 = vshrl.u32 %v3161, 7
      %v3163 = vsub.s32 %v134, %v3162
      %v3164 = vrot.slane %v2733, %v3163
      %v3165 = vlaneseq
      %v3166 = vshrl.u32 %v3165, 7
      %v3167 = vsub.s32 %v134, %v3166
      %v3168 = vrot.slane %v2736, %v3167
      %v3169 = vlaneseq
      %v3170 = vshrl.u32 %v3169, 7
      %v3171 = vsub.s32 %v134, %v3170
      %v3172 = vrot.slane %v2739, %v3171
      %v3173 = vlaneseq
      %v3174 = vshrl.u32 %v3173, 7
      %v3175 = vsub.s32 %v134, %v3174
      %v3176 = vrot.slane %v2742, %v3175
      %v3177 = vlaneseq
      %v3178 = vshrl.u32 %v3177, 7
      %v3179 = vsub.s32 %v134, %v3178
      %v3180 = vrot.slane %v2745, %v3179
      %v3181 = vlaneseq
      %v3182 = vshrl.u32 %v3181, 7
      %v3183 = vsub.s32 %v134, %v3182
      %v3184 = vrot.slane %v2748, %v3183
      %v3185 = vlaneseq
      %v3186 = vshrl.u32 %v3185, 7
      %v3187 = vsub.s32 %v134, %v3186
      %v3188 = vrot.slane %v2751, %v3187
      %v3189 = vlaneseq
      %v3190 = vshrl.u32 %v3189, 7
      %v3191 = vsub.s32 %v134, %v3190
      %v3192 = vrot.slane %v2754, %v3191
      %v3193 = vlaneseq
      %v3194 = vshrl.u32 %v3193, 7
      %v3195 = vsub.s32 %v134, %v3194
      %v3196 = vrot.slane %v2757, %v3195
      %v3197 = vlaneseq
      %v3198 = vshrl.u32 %v3197, 7
      %v3199 = vsub.s32 %v134, %v3198
      %v3200 = vrot.slane %v2760, %v3199
      %v3201 = vlaneseq
      %v3202 = vshrl.u32 %v3201, 7
      %v3203 = vsub.s32 %v134, %v3202
      %v3204 = vrot.slane %v2763, %v3203
      %v3205 = vlaneseq
      %v3206 = vshrl.u32 %v3205, 7
      %v3207 = vsub.s32 %v134, %v3206
      %v3208 = vrot.slane %v2766, %v3207
      %v3209 = vlaneseq
      %v3210 = vshrl.u32 %v3209, 7
      %v3211 = vsub.s32 %v134, %v3210
      %v3212 = vrot.slane %v2769, %v3211
      %v3213 = vlaneseq
      %v3214 = vshrl.u32 %v3213, 7
      %v3215 = vsub.s32 %v134, %v3214
      %v3216 = vrot.slane %v2772, %v3215
      %v3217 = vlaneseq
      %v3218 = vshrl.u32 %v3217, 7
      %v3219 = vsub.s32 %v134, %v3218
      %v3220 = vrot.slane %v2775, %v3219
      %v3221 = vlaneseq
      %v3222 = vshrl.u32 %v3221, 7
      %v3223 = vsub.s32 %v134, %v3222
      %v3224 = vrot.slane %v2778, %v3223
      %v3225 = vlaneseq
      %v3226 = vshrl.u32 %v3225, 7
      %v3227 = vsub.s32 %v134, %v3226
      %v3228 = vrot.slane %v2781, %v3227
      %v3229 = vlaneseq
      %v3230 = vshrl.u32 %v3229, 7
      %v3231 = vsub.s32 %v134, %v3230
      %v3232 = vrot.slane %v2784, %v3231
      %v3233 = vlaneseq
      %v3234 = vshrl.u32 %v3233, 7
      %v3235 = vsub.s32 %v134, %v3234
      %v3236 = vrot.slane %v2787, %v3235
      %v3237 = vlaneseq
      %v3238 = vshrl.u32 %v3237, 7
      %v3239 = vsub.s32 %v134, %v3238
      %v3240 = vrot.slane %v2790, %v3239
      %v3241 = vlaneseq
      %v3242 = vshrl.u32 %v3241, 7
      %v3243 = vsub.s32 %v134, %v3242
      %v3244 = vrot.slane %v2793, %v3243
      %v3245 = vlaneseq
      %v3246 = vshrl.u32 %v3245, 7
      %v3247 = vsub.s32 %v134, %v3246
      %v3248 = vrot.slane %v2796, %v3247
      %v3249 = vlaneseq
      %v3250 = vshrl.u32 %v3249, 7
      %v3251 = vsub.s32 %v134, %v3250
      %v3252 = vrot.slane %v2799, %v3251
      %v3253 = vlaneseq
      %v3254 = vshrl.u32 %v3253, 7
      %v3255 = vsub.s32 %v134, %v3254
      %v3256 = vrot.slane %v2802, %v3255
      %v3257 = vlaneseq
      %v3258 = vshrl.u32 %v3257, 7
      %v3259 = vsub.s32 %v134, %v3258
      %v3260 = vrot.slane %v2805, %v3259
      %v3261 = vlaneseq
      %v3262 = vshrl.u32 %v3261, 7
      %v3263 = vsub.s32 %v134, %v3262
      %v3264 = vrot.slane %v2808, %v3263
      %v3265 = vlaneseq
      %v3266 = vshrl.u32 %v3265, 7
      %v3267 = vsub.s32 %v134, %v3266
      %v3268 = vrot.slane %v2811, %v3267
      %v3269 = vlaneseq
      %v3270 = vshrl.u32 %v3269, 7
      %v3271 = vsub.s32 %v134, %v3270
      %v3272 = vrot.slane %v2814, %v3271
      %v3273 = vlaneseq
      %v3274 = vshrl.u32 %v3273, 7
      %v3275 = vsub.s32 %v134, %v3274
      %v3276 = vrot.slane %v2817, %v3275
      %v3277 = vlaneseq
      %v3278 = vshrl.u32 %v3277, 7
      %v3279 = vsub.s32 %v134, %v3278
      %v3280 = vrot.slane %v2820, %v3279
      %v3281 = vlaneseq
      %v3282 = vshrl.u32 %v3281, 7
      %v3283 = vsub.s32 %v134, %v3282
      %v3284 = vrot.slane %v2823, %v3283
      %v3285 = vlaneseq
      %v3286 = vshrl.u32 %v3285, 7
      %v3287 = vsub.s32 %v134, %v3286
      %v3288 = vrot.slane %v2826, %v3287
      %v3289 = vlaneseq
      %v3290 = vshrl.u32 %v3289, 7
      %v3291 = vsub.s32 %v134, %v3290
      %v3292 = vrot.slane %v2829, %v3291
      %v3293 = vlaneseq
      %v3294 = vshrl.u32 %v3293, 7
      %v3295 = vsub.s32 %v134, %v3294
      %v3296 = vrot.slane %v2832, %v3295
      %v3297 = vlaneseq
      %v3298 = vshrl.u32 %v3297, 7
      %v3299 = vsub.s32 %v134, %v3298
      %v3300 = vrot.slane %v2835, %v3299
      %v3301 = vlaneseq
      %v3302 = vshrl.u32 %v3301, 7
      %v3303 = vsub.s32 %v134, %v3302
      %v3304 = vrot.slane %v2838, %v3303
      %v3305 = vlaneseq
      %v3306 = vshrl.u32 %v3305, 7
      %v3307 = vsub.s32 %v134, %v3306
      %v3308 = vrot.slane %v2841, %v3307
      %v3309 = vlaneseq
      %v3310 = vshrl.u32 %v3309, 7
      %v3311 = vsub.s32 %v134, %v3310
      %v3312 = vrot.slane %v2844, %v3311
      %v3313 = vlaneseq
      %v3314 = vshrl.u32 %v3313, 7
      %v3315 = vsub.s32 %v134, %v3314
      %v3316 = vrot.slane %v2847, %v3315
      %v3317 = vlaneseq
      %v3318 = vshrl.u32 %v3317, 7
      %v3319 = vsub.s32 %v134, %v3318
      %v3320 = vrot.slane %v2850, %v3319
      %v3321 = vlaneseq
      %v3322 = vshrl.u32 %v3321, 7
      %v3323 = vsub.s32 %v134, %v3322
      %v3324 = vrot.slane %v2853, %v3323
      %v3325 = vlaneseq
      %v3326 = vshrl.u32 %v3325, 7
      %v3327 = vsub.s32 %v134, %v3326
      %v3328 = vrot.slane %v2856, %v3327
      %v3329 = vlaneseq
      %v3330 = vshrl.u32 %v3329, 7
      %v3331 = vsub.s32 %v134, %v3330
      %v3332 = vrot.slane %v2859, %v3331
      %v3333 = vlaneseq
      %v3334 = vshrl.u32 %v3333, 7
      %v3335 = vsub.s32 %v134, %v3334
      %v3336 = vrot.slane %v2862, %v3335
      %v3337 = vlaneseq
      %v3338 = vshrl.u32 %v3337, 7
      %v3339 = vsub.s32 %v134, %v3338
      %v3340 = vrot.slane %v2865, %v3339
      %v3341 = vlaneseq
      %v3342 = vshrl.u32 %v3341, 7
      %v3343 = vsub.s32 %v134, %v3342
      %v3344 = vrot.slane %v2868, %v3343
      %v3345 = vlaneseq
      %v3346 = vshrl.u32 %v3345, 7
      %v3347 = vsub.s32 %v134, %v3346
      %v3348 = vrot.slane %v2871, %v3347
      %v3349 = vlaneseq
      %v3350 = vshrl.u32 %v3349, 7
      %v3351 = vsub.s32 %v134, %v3350
      %v3352 = vrot.slane %v2874, %v3351
      %v3353 = vlaneseq
      %v3354 = vshrl.u32 %v3353, 7
      %v3355 = vsub.s32 %v134, %v3354
      %v3356 = vrot.slane %v2877, %v3355
      %v3357 = vlaneseq
      %v3358 = vshrl.u32 %v3357, 7
      %v3359 = vsub.s32 %v134, %v3358
      %v3360 = vrot.slane %v2880, %v3359
      %v3361 = vlaneseq
      %v3362 = vshrl.u32 %v3361, 7
      %v3363 = vsub.s32 %v134, %v3362
      %v3364 = vrot.slane %v2883, %v3363
      %v3365 = vlaneseq
      %v3366 = vshrl.u32 %v3365, 7
      %v3367 = vsub.s32 %v134, %v3366
      %v3368 = vrot.slane %v2886, %v3367
      %v3369 = vlaneseq
      %v3370 = vshrl.u32 %v3369, 7
      %v3371 = vsub.s32 %v134, %v3370
      %v3372 = vrot.slane %v2889, %v3371
      %v3373 = vlaneseq
      %v3374 = vshrl.u32 %v3373, 7
      %v3375 = vsub.s32 %v134, %v3374
      %v3376 = vrot.slane %v2892, %v3375
      %v3377 = vlaneseq
      %v3378 = vshrl.u32 %v3377, 7
      %v3379 = vsub.s32 %v134, %v3378
      %v3380 = vrot.slane %v2895, %v3379
      %v3381 = vlaneseq
      %v3382 = vshrl.u32 %v3381, 7
      %v3383 = vsub.s32 %v134, %v3382
      %v3384 = vrot.slane %v2898, %v3383
      %v3385 = vlaneseq
      %v3386 = vshrl.u32 %v3385, 7
      %v3387 = vsub.s32 %v134, %v3386
      %v3388 = vrot.slane %v2901, %v3387
      %v3389 = vlaneseq
      %v3390 = vshrl.u32 %v3389, 7
      %v3391 = vsub.s32 %v134, %v3390
      %v3392 = vrot.slane %v2904, %v3391
      %v3393 = vlaneseq
      %v3394 = vshrl.u32 %v3393, 7
      %v3395 = vsub.s32 %v134, %v3394
      %v3396 = vrot.slane %v2907, %v3395
      %v3397 = vlaneseq
      %v3398 = vshrl.u32 %v3397, 7
      %v3399 = vsub.s32 %v134, %v3398
      %v3400 = vrot.slane %v2910, %v3399
      %v3401 = vlaneseq
      %v3402 = vshrl.u32 %v3401, 7
      %v3403 = vsub.s32 %v134, %v3402
      %v3404 = vrot.slane %v2913, %v3403
      %v3405 = vlaneseq
      %v3406 = vshrl.u32 %v3405, 7
      %v3407 = vsub.s32 %v134, %v3406
      %v3408 = vrot.slane %v2916, %v3407
      %v3409 = vlaneseq
      %v3410 = vshrl.u32 %v3409, 7
      %v3411 = vsub.s32 %v134, %v3410
      %v3412 = vrot.slane %v2919, %v3411
      %v3413 = vlaneseq
      %v3414 = vshrl.u32 %v3413, 7
      %v3415 = vsub.s32 %v134, %v3414
      %v3416 = vrot.slane %v2922, %v3415
      %v3417 = vlaneseq
      %v3418 = vshrl.u32 %v3417, 7
      %v3419 = vsub.s32 %v134, %v3418
      %v3420 = vrot.slane %v2925, %v3419
      %v3421 = vlaneseq
      %v3422 = vshrl.u32 %v3421, 7
      %v3423 = vsub.s32 %v134, %v3422
      %v3424 = vrot.slane %v2928, %v3423
      %v3425 = vlaneseq
      %v3426 = vshrl.u32 %v3425, 7
      %v3427 = vsub.s32 %v134, %v3426
      %v3428 = vrot.slane %v2931, %v3427
      %v3429 = vlaneseq
      %v3430 = vshrl.u32 %v3429, 7
      %v3431 = vsub.s32 %v134, %v3430
      %v3432 = vrot.slane %v2934, %v3431
      %v3433 = vlaneseq
      %v3434 = vshrl.u32 %v3433, 7
      %v3435 = vsub.s32 %v134, %v3434
      %v3436 = vrot.slane %v2937, %v3435
      %v3437 = vlaneseq
      %v3438 = vshrl.u32 %v3437, 7
      %v3439 = vsub.s32 %v134, %v3438
      %v3440 = vrot.slane %v2940, %v3439
      %v3441 = vlaneseq
      %v3442 = vshrl.u32 %v3441, 7
      %v3443 = vsub.s32 %v134, %v3442
      %v3444 = vrot.slane %v2943, %v3443
      %v3445 = vlaneseq
      %v3446 = vshrl.u32 %v3445, 7
      %v3447 = vsub.s32 %v134, %v3446
      %v3448 = vrot.slane %v2946, %v3447
      %v3449 = vlaneseq
      %v3450 = vshrl.u32 %v3449, 7
      %v3451 = vsub.s32 %v134, %v3450
      %v3452 = vrot.slane %v2949, %v3451
      %v3453 = vlaneseq
      %v3454 = vshrl.u32 %v3453, 7
      %v3455 = vsub.s32 %v134, %v3454
      %v3456 = vrot.slane %v2952, %v3455
      %v3457 = vlaneseq
      %v3458 = vshrl.u32 %v3457, 7
      %v3459 = vsub.s32 %v134, %v3458
      %v3460 = vrot.slane %v2955, %v3459
      %v3461 = vlaneseq
      %v3462 = vshrl.u32 %v3461, 7
      %v3463 = vsub.s32 %v134, %v3462
      %v3464 = vrot.slane %v2958, %v3463
      %v3465 = vlaneseq
      %v3466 = vshrl.u32 %v3465, 7
      %v3467 = vsub.s32 %v134, %v3466
      %v3468 = vrot.slane %v2961, %v3467
      %v3469 = vlaneseq
      %v3470 = vshrl.u32 %v3469, 7
      %v3471 = vsub.s32 %v134, %v3470
      %v3472 = vrot.slane %v2964, %v3471
      %v3473 = vlaneseq
      %v3474 = vshrl.u32 %v3473, 7
      %v3475 = vsub.s32 %v134, %v3474
      %v3476 = vrot.slane %v2967, %v3475
      %v3477 = vlaneseq
      %v3478 = vshrl.u32 %v3477, 7
      %v3479 = vsub.s32 %v134, %v3478
      %v3480 = vrot.slane %v2970, %v3479
      %v3481 = vlaneseq
      %v3482 = vshrl.u32 %v3481, 7
      %v3483 = vsub.s32 %v134, %v3482
      %v3484 = vrot.slane %v2973, %v3483
      %v3485 = vlaneseq
      %v3486 = vshrl.u32 %v3485, 7
      %v3487 = vsub.s32 %v134, %v3486
      %v3488 = vrot.slane %v2976, %v3487
      %v3489 = vsel %vm227, %v2984, %v2980
      %v3490 = vsel %vm2112, %v2988, %v3489
      %v3491 = vsel %vm2114, %v2992, %v3490
      %v3492 = vsel %vm2116, %v2996, %v3491
      %v3493 = vsel %vm2118, %v3000, %v3492
      %v3494 = vsel %vm2120, %v3004, %v3493
      %v3495 = vsel %vm2122, %v3008, %v3494
      %v3496 = vsel %vm227, %v3016, %v3012
      %v3497 = vsel %vm2112, %v3020, %v3496
      %v3498 = vsel %vm2114, %v3024, %v3497
      %v3499 = vsel %vm2116, %v3028, %v3498
      %v3500 = vsel %vm2118, %v3032, %v3499
      %v3501 = vsel %vm2120, %v3036, %v3500
      %v3502 = vsel %vm2122, %v3040, %v3501
      %v3503 = vsel %vm227, %v3048, %v3044
      %v3504 = vsel %vm2112, %v3052, %v3503
      %v3505 = vsel %vm2114, %v3056, %v3504
      %v3506 = vsel %vm2116, %v3060, %v3505
      %v3507 = vsel %vm2118, %v3064, %v3506
      %v3508 = vsel %vm2120, %v3068, %v3507
      %v3509 = vsel %vm2122, %v3072, %v3508
      %v3510 = vsel %vm227, %v3080, %v3076
      %v3511 = vsel %vm2112, %v3084, %v3510
      %v3512 = vsel %vm2114, %v3088, %v3511
      %v3513 = vsel %vm2116, %v3092, %v3512
      %v3514 = vsel %vm2118, %v3096, %v3513
      %v3515 = vsel %vm2120, %v3100, %v3514
      %v3516 = vsel %vm2122, %v3104, %v3515
      %v3517 = vsel %vm227, %v3112, %v3108
      %v3518 = vsel %vm2112, %v3116, %v3517
      %v3519 = vsel %vm2114, %v3120, %v3518
      %v3520 = vsel %vm2116, %v3124, %v3519
      %v3521 = vsel %vm2118, %v3128, %v3520
      %v3522 = vsel %vm2120, %v3132, %v3521
      %v3523 = vsel %vm2122, %v3136, %v3522
      %v3524 = vsel %vm227, %v3144, %v3140
      %v3525 = vsel %vm2112, %v3148, %v3524
      %v3526 = vsel %vm2114, %v3152, %v3525
      %v3527 = vsel %vm2116, %v3156, %v3526
      %v3528 = vsel %vm2118, %v3160, %v3527
      %v3529 = vsel %vm2120, %v3164, %v3528
      %v3530 = vsel %vm2122, %v3168, %v3529
      %v3531 = vsel %vm227, %v3176, %v3172
      %v3532 = vsel %vm2112, %v3180, %v3531
      %v3533 = vsel %vm2114, %v3184, %v3532
      %v3534 = vsel %vm2116, %v3188, %v3533
      %v3535 = vsel %vm2118, %v3192, %v3534
      %v3536 = vsel %vm2120, %v3196, %v3535
      %v3537 = vsel %vm2122, %v3200, %v3536
      %v3538 = vsel %vm227, %v3208, %v3204
      %v3539 = vsel %vm2112, %v3212, %v3538
      %v3540 = vsel %vm2114, %v3216, %v3539
      %v3541 = vsel %vm2116, %v3220, %v3540
      %v3542 = vsel %vm2118, %v3224, %v3541
      %v3543 = vsel %vm2120, %v3228, %v3542
      %v3544 = vsel %vm2122, %v3232, %v3543
      %v3545 = vsel %vm227, %v3240, %v3236
      %v3546 = vsel %vm2112, %v3244, %v3545
      %v3547 = vsel %vm2114, %v3248, %v3546
      %v3548 = vsel %vm2116, %v3252, %v3547
      %v3549 = vsel %vm2118, %v3256, %v3548
      %v3550 = vsel %vm2120, %v3260, %v3549
      %v3551 = vsel %vm2122, %v3264, %v3550
      %v3552 = vsel %vm227, %v3272, %v3268
      %v3553 = vsel %vm2112, %v3276, %v3552
      %v3554 = vsel %vm2114, %v3280, %v3553
      %v3555 = vsel %vm2116, %v3284, %v3554
      %v3556 = vsel %vm2118, %v3288, %v3555
      %v3557 = vsel %vm2120, %v3292, %v3556
      %v3558 = vsel %vm2122, %v3296, %v3557
      %v3559 = vsel %vm227, %v3304, %v3300
      %v3560 = vsel %vm2112, %v3308, %v3559
      %v3561 = vsel %vm2114, %v3312, %v3560
      %v3562 = vsel %vm2116, %v3316, %v3561
      %v3563 = vsel %vm2118, %v3320, %v3562
      %v3564 = vsel %vm2120, %v3324, %v3563
      %v3565 = vsel %vm2122, %v3328, %v3564
      %v3566 = vsel %vm227, %v3336, %v3332
      %v3567 = vsel %vm2112, %v3340, %v3566
      %v3568 = vsel %vm2114, %v3344, %v3567
      %v3569 = vsel %vm2116, %v3348, %v3568
      %v3570 = vsel %vm2118, %v3352, %v3569
      %v3571 = vsel %vm2120, %v3356, %v3570
      %v3572 = vsel %vm2122, %v3360, %v3571
      %v3573 = vsel %vm227, %v3368, %v3364
      %v3574 = vsel %vm2112, %v3372, %v3573
      %v3575 = vsel %vm2114, %v3376, %v3574
      %v3576 = vsel %vm2116, %v3380, %v3575
      %v3577 = vsel %vm2118, %v3384, %v3576
      %v3578 = vsel %vm2120, %v3388, %v3577
      %v3579 = vsel %vm2122, %v3392, %v3578
      %v3580 = vsel %vm227, %v3400, %v3396
      %v3581 = vsel %vm2112, %v3404, %v3580
      %v3582 = vsel %vm2114, %v3408, %v3581
      %v3583 = vsel %vm2116, %v3412, %v3582
      %v3584 = vsel %vm2118, %v3416, %v3583
      %v3585 = vsel %vm2120, %v3420, %v3584
      %v3586 = vsel %vm2122, %v3424, %v3585
      %v3587 = vsel %vm227, %v3432, %v3428
      %v3588 = vsel %vm2112, %v3436, %v3587
      %v3589 = vsel %vm2114, %v3440, %v3588
      %v3590 = vsel %vm2116, %v3444, %v3589
      %v3591 = vsel %vm2118, %v3448, %v3590
      %v3592 = vsel %vm2120, %v3452, %v3591
      %v3593 = vsel %vm2122, %v3456, %v3592
      %v3594 = vsel %vm227, %v3464, %v3460
      %v3595 = vsel %vm2112, %v3468, %v3594
      %v3596 = vsel %vm2114, %v3472, %v3595
      %v3597 = vsel %vm2116, %v3476, %v3596
      %v3598 = vsel %vm2118, %v3480, %v3597
      %v3599 = vsel %vm2120, %v3484, %v3598
      %v3600 = vsel %vm2122, %v3488, %v3599
      %v3617 = vsel %vm2245, %v3495, 0.0
      %3618 = vadd.xlane.f32.xlu0 %v3617
      %v3619 = vpop.xlane.xlu0 %3618
      %v3620 = vsel %vm2245, %v3502, 0.0
      %3621 = vadd.xlane.f32.xlu0 %v3620
      %v3622 = vpop.xlane.xlu0 %3621
      %v3623 = vsel %vm2245, %v3509, 0.0
      %3624 = vadd.xlane.f32.xlu0 %v3623
      %v3625 = vpop.xlane.xlu0 %3624
      %v3626 = vsel %vm2245, %v3516, 0.0
      %3627 = vadd.xlane.f32.xlu0 %v3626
      %v3628 = vpop.xlane.xlu0 %3627
      %v3629 = vsel %vm2245, %v3523, 0.0
      %3630 = vadd.xlane.f32.xlu0 %v3629
      %v3631 = vpop.xlane.xlu0 %3630
      %v3632 = vsel %vm2245, %v3530, 0.0
      %3633 = vadd.xlane.f32.xlu0 %v3632
      %v3634 = vpop.xlane.xlu0 %3633
      %v3635 = vsel %vm2245, %v3537, 0.0
      %3636 = vadd.xlane.f32.xlu0 %v3635
      %v3637 = vpop.xlane.xlu0 %3636
      %v3638 = vsel %vm2245, %v3544, 0.0
      %3639 = vadd.xlane.f32.xlu0 %v3638
      %v3640 = vpop.xlane.xlu0 %3639
      %v3641 = vsel %vm2245, %v3551, 0.0
      %3642 = vadd.xlane.f32.xlu0 %v3641
      %v3643 = vpop.xlane.xlu0 %3642
      %v3644 = vsel %vm2245, %v3558, 0.0
      %3645 = vadd.xlane.f32.xlu0 %v3644
      %v3646 = vpop.xlane.xlu0 %3645
      %v3647 = vsel %vm2245, %v3565, 0.0
      %3648 = vadd.xlane.f32.xlu0 %v3647
      %v3649 = vpop.xlane.xlu0 %3648
      %v3650 = vsel %vm2245, %v3572, 0.0
      %3651 = vadd.xlane.f32.xlu0 %v3650
      %v3652 = vpop.xlane.xlu0 %3651
      %v3653 = vsel %vm2245, %v3579, 0.0
      %3654 = vadd.xlane.f32.xlu0 %v3653
      %v3655 = vpop.xlane.xlu0 %3654
      %v3656 = vsel %vm2245, %v3586, 0.0
      %3657 = vadd.xlane.f32.xlu0 %v3656
      %v3658 = vpop.xlane.xlu0 %3657
      %v3659 = vsel %vm2245, %v3593, 0.0
      %3660 = vadd.xlane.f32.xlu0 %v3659
      %v3661 = vpop.xlane.xlu0 %3660
      %v3662 = vsel %vm2245, %v3600, 0.0
      %3663 = vadd.xlane.f32.xlu0 %v3662
      %v3664 = vpop.xlane.xlu0 %3663
      %v3665 = vadd.f32 %v2248, %v3619
      %v3666 = vadd.f32 %v2251, %v3622
      %v3667 = vadd.f32 %v2254, %v3625
      %v3668 = vadd.f32 %v2257, %v3628
      %v3669 = vadd.f32 %v2260, %v3631
      %v3670 = vadd.f32 %v2263, %v3634
      %v3671 = vadd.f32 %v2266, %v3637
      %v3672 = vadd.f32 %v2269, %v3640
      %v3673 = vadd.f32 %v2272, %v3643
      %v3674 = vadd.f32 %v2275, %v3646
      %v3675 = vadd.f32 %v2278, %v3649
      %v3676 = vadd.f32 %v2281, %v3652
      %v3677 = vadd.f32 %v2284, %v3655
      %v3678 = vadd.f32 %v2287, %v3658
      %v3679 = vadd.f32 %v2290, %v3661
      %v3680 = vadd.f32 %v2293, %v3664
      %v3681 = vsub.f32 0.0, %v3665
      %v3682 = vsub.f32 0.0, %v3666
      %v3683 = vsub.f32 0.0, %v3667
      %v3684 = vsub.f32 0.0, %v3668
      %v3685 = vsub.f32 0.0, %v3669
      %v3686 = vsub.f32 0.0, %v3670
      %v3687 = vsub.f32 0.0, %v3671
      %v3688 = vsub.f32 0.0, %v3672
      %v3689 = vsub.f32 0.0, %v3673
      %v3690 = vsub.f32 0.0, %v3674
      %v3691 = vsub.f32 0.0, %v3675
      %v3692 = vsub.f32 0.0, %v3676
      %v3693 = vsub.f32 0.0, %v3677
      %v3694 = vsub.f32 0.0, %v3678
      %v3695 = vsub.f32 0.0, %v3679
      %v3696 = vsub.f32 0.0, %v3680
      %v3697 = vmul.f32 %v3681, 1.442695
      %v3698 = vpow.pop %v3697
      %v3699 = vmul.f32 %v3682, 1.442695
      %v3700 = vpow.pop %v3699
      %v3701 = vmul.f32 %v3683, 1.442695
      %v3702 = vpow.pop %v3701
      %v3703 = vmul.f32 %v3684, 1.442695
      %v3704 = vpow.pop %v3703
      %v3705 = vmul.f32 %v3685, 1.442695
      %v3706 = vpow.pop %v3705
      %v3707 = vmul.f32 %v3686, 1.442695
      %v3708 = vpow.pop %v3707
      %v3709 = vmul.f32 %v3687, 1.442695
      %v3710 = vpow.pop %v3709
      %v3711 = vmul.f32 %v3688, 1.442695
      %v3712 = vpow.pop %v3711
      %v3713 = vmul.f32 %v3689, 1.442695
      %v3714 = vpow.pop %v3713
      %v3715 = vmul.f32 %v3690, 1.442695
      %v3716 = vpow.pop %v3715
      %v3717 = vmul.f32 %v3691, 1.442695
      %v3718 = vpow.pop %v3717
      %v3719 = vmul.f32 %v3692, 1.442695
      %v3720 = vpow.pop %v3719
      %v3721 = vmul.f32 %v3693, 1.442695
      %v3722 = vpow.pop %v3721
      %v3723 = vmul.f32 %v3694, 1.442695
      %v3724 = vpow.pop %v3723
      %v3725 = vmul.f32 %v3695, 1.442695
      %v3726 = vpow.pop %v3725
      %v3727 = vmul.f32 %v3696, 1.442695
      %v3728 = vpow.pop %v3727
      %v3729 = vadd.f32 %v3698, 1.0
      %v3730 = vadd.f32 %v3700, 1.0
      %v3731 = vadd.f32 %v3702, 1.0
      %v3732 = vadd.f32 %v3704, 1.0
      %v3733 = vadd.f32 %v3706, 1.0
      %v3734 = vadd.f32 %v3708, 1.0
      %v3735 = vadd.f32 %v3710, 1.0
      %v3736 = vadd.f32 %v3712, 1.0
      %v3737 = vadd.f32 %v3714, 1.0
      %v3738 = vadd.f32 %v3716, 1.0
      %v3739 = vadd.f32 %v3718, 1.0
      %v3740 = vadd.f32 %v3720, 1.0
      %v3741 = vadd.f32 %v3722, 1.0
      %v3742 = vadd.f32 %v3724, 1.0
      %v3743 = vadd.f32 %v3726, 1.0
      %v3744 = vadd.f32 %v3728, 1.0
      %v3745 = vrcp.pop %v3729
      %v3746 = vmul.f32 1.0, %v3745
      %v3747 = vrcp.pop %v3730
      %v3748 = vmul.f32 1.0, %v3747
      %v3749 = vrcp.pop %v3731
      %v3750 = vmul.f32 1.0, %v3749
      %v3751 = vrcp.pop %v3732
      %v3752 = vmul.f32 1.0, %v3751
      %v3753 = vrcp.pop %v3733
      %v3754 = vmul.f32 1.0, %v3753
      %v3755 = vrcp.pop %v3734
      %v3756 = vmul.f32 1.0, %v3755
      %v3757 = vrcp.pop %v3735
      %v3758 = vmul.f32 1.0, %v3757
      %v3759 = vrcp.pop %v3736
      %v3760 = vmul.f32 1.0, %v3759
      %v3761 = vrcp.pop %v3737
      %v3762 = vmul.f32 1.0, %v3761
      %v3763 = vrcp.pop %v3738
      %v3764 = vmul.f32 1.0, %v3763
      %v3765 = vrcp.pop %v3739
      %v3766 = vmul.f32 1.0, %v3765
      %v3767 = vrcp.pop %v3740
      %v3768 = vmul.f32 1.0, %v3767
      %v3769 = vrcp.pop %v3741
      %v3770 = vmul.f32 1.0, %v3769
      %v3771 = vrcp.pop %v3742
      %v3772 = vmul.f32 1.0, %v3771
      %v3773 = vrcp.pop %v3743
      %v3774 = vmul.f32 1.0, %v3773
      %v3775 = vrcp.pop %v3744
      %v3776 = vmul.f32 1.0, %v3775
      %v3793 = vlaneseq
      %v3794 = vshrl.u32 %v3793, 7
      %v3795 = vsub.s32 %v134, %v3794
      %v3796 = vrot.slane %v3746, %v3795
      %v3797 = vlaneseq
      %v3798 = vshrl.u32 %v3797, 7
      %v3799 = vsub.s32 %v139, %v3798
      %v3800 = vrot.slane %v3748, %v3799
      %v3801 = vsel %vm144, %v3800, %v3796
      %v3802 = vlaneseq
      %v3803 = vshrl.u32 %v3802, 7
      %v3804 = vsub.s32 %v146, %v3803
      %v3805 = vrot.slane %v3750, %v3804
      %v3806 = vsel %vm151, %v3805, %v3801
      %v3807 = vlaneseq
      %v3808 = vshrl.u32 %v3807, 7
      %v3809 = vsub.s32 %v153, %v3808
      %v3810 = vrot.slane %v3752, %v3809
      %v3811 = vsel %vm158, %v3810, %v3806
      %v3812 = vlaneseq
      %v3813 = vshrl.u32 %v3812, 7
      %v3814 = vsub.s32 %v160, %v3813
      %v3815 = vrot.slane %v3754, %v3814
      %v3816 = vsel %vm165, %v3815, %v3811
      %v3817 = vlaneseq
      %v3818 = vshrl.u32 %v3817, 7
      %v3819 = vsub.s32 %v167, %v3818
      %v3820 = vrot.slane %v3756, %v3819
      %v3821 = vsel %vm172, %v3820, %v3816
      %v3822 = vlaneseq
      %v3823 = vshrl.u32 %v3822, 7
      %v3824 = vsub.s32 %v174, %v3823
      %v3825 = vrot.slane %v3758, %v3824
      %v3826 = vsel %vm179, %v3825, %v3821
      %v3827 = vlaneseq
      %v3828 = vshrl.u32 %v3827, 7
      %v3829 = vsub.s32 %v181, %v3828
      %v3830 = vrot.slane %v3760, %v3829
      %v3831 = vsel %vm186, %v3830, %v3826
      %v3832 = vlaneseq
      %v3833 = vshrl.u32 %v3832, 7
      %v3834 = vsub.s32 %v134, %v3833
      %v3835 = vrot.slane %v3762, %v3834
      %v3836 = vlaneseq
      %v3837 = vshrl.u32 %v3836, 7
      %v3838 = vsub.s32 %v139, %v3837
      %v3839 = vrot.slane %v3764, %v3838
      %v3840 = vsel %vm144, %v3839, %v3835
      %v3841 = vlaneseq
      %v3842 = vshrl.u32 %v3841, 7
      %v3843 = vsub.s32 %v146, %v3842
      %v3844 = vrot.slane %v3766, %v3843
      %v3845 = vsel %vm151, %v3844, %v3840
      %v3846 = vlaneseq
      %v3847 = vshrl.u32 %v3846, 7
      %v3848 = vsub.s32 %v153, %v3847
      %v3849 = vrot.slane %v3768, %v3848
      %v3850 = vsel %vm158, %v3849, %v3845
      %v3851 = vlaneseq
      %v3852 = vshrl.u32 %v3851, 7
      %v3853 = vsub.s32 %v160, %v3852
      %v3854 = vrot.slane %v3770, %v3853
      %v3855 = vsel %vm165, %v3854, %v3850
      %v3856 = vlaneseq
      %v3857 = vshrl.u32 %v3856, 7
      %v3858 = vsub.s32 %v167, %v3857
      %v3859 = vrot.slane %v3772, %v3858
      %v3860 = vsel %vm172, %v3859, %v3855
      %v3861 = vlaneseq
      %v3862 = vshrl.u32 %v3861, 7
      %v3863 = vsub.s32 %v174, %v3862
      %v3864 = vrot.slane %v3774, %v3863
      %v3865 = vsel %vm179, %v3864, %v3860
      %v3866 = vlaneseq
      %v3867 = vshrl.u32 %v3866, 7
      %v3868 = vsub.s32 %v181, %v3867
      %v3869 = vrot.slane %v3776, %v3868
      %v3870 = vsel %vm186, %v3869, %v3865
      %vm3873 = vcmask 516096
      %3874 = vst.msk [vmem:[#allocation7] sm:$0x1] %vm3873, %v3831
      %3875 = vst.msk [vmem:[#allocation7 + $0x1] sm:$0x1] %vm3873, %v3870
    $region25: #{tpu_custom_call.1} parent=1 // pred_fallthru
      _
    // Predicated region
    $region26: #{tpu_custom_call.1} parent=1 // pred_check
      _
    $region27: #{tpu_custom_call.1} parent=1 // pred_check_branch
      %3877 = sbr.rel (0) target = $region29
    $region28: #{tpu_custom_call.1} parent=1 // pred_region
      %s3879 = ssub.s32 32, 32
      %3880 = vsyncadd [#allocation6], %s3879
      %s3881 = sshll.u32 [#allocation7], 4
      %s3882 = int_to_ptr.vmem [resolvable:$true] %s3881
      %3887 = dma.vmem_to_hbm [thread:$0]  %s3882, 32, %s3, [#allocation6], 16, 16, 1
    $region29: #{tpu_custom_call.1} parent=1 // pred_fallthru
      _
    // Predicated region
    $region30: #{tpu_custom_call.1} parent=1 // pred_check
      _
    $region31: #{tpu_custom_call.1} parent=1 // pred_check_branch
      %3889 = sbr.rel (0) target = $region33
    $region32: #{tpu_custom_call.1} parent=1 // pred_region
      %3890 = dma.done [#allocation6], 32
    $region33: #{tpu_custom_call.1} parent=1 // pred_fallthru
      _
    %3891 = vsyncpa [#allocation5], 1
    %3892 = vsyncpa [#allocation6], 1

</llo_original>
